<compile_context>
chip_gen: v7x
topology: tpu7x:2x2x1
jax: 0.10.0
libtpu: 0.0.40
codegen_flags: <defaults>
</compile_context>

<pallas_src>
import math
import functools

import jax
import jax.numpy as jnp
from jax.experimental import pallas as pl
from jax.experimental.pallas import tpu as pltpu


# MXU operand dtype (f32 accumulation everywhere via preferred_element_type).
_MXU_DTYPE = jnp.bfloat16
_VMEM_LIMIT = 32 * 1024 * 1024  # safe on v5e/v6e/v7x


def _cparams(n_grid_axes=1):
    return pltpu.CompilerParams(
        dimension_semantics=("parallel",) * n_grid_axes,
        vmem_limit_bytes=_VMEM_LIMIT,
    )


def _round_up(x, m):
    return ((x + m - 1) // m) * m


def _row_plan(M, max_rows):
    """Largest row tile (<= max_rows, multiple of 8); M is padded up to it."""
    tm = min(max_rows, _round_up(M, 8))
    Mp = _round_up(M, tm)
    return tm, Mp


def _pad_rows(x2, Mp):
    M = x2.shape[0]
    if Mp != M:
        x2 = jnp.pad(x2, ((0, Mp - M), (0, 0)))
    return x2


# ----------------------------------------------------------------------------
# Pallas kernels
# ----------------------------------------------------------------------------
def _linear_kernel(x_ref, w_ref, b_ref, o_ref):
    # y = x @ w + b   (bf16 MXU operands, f32 accumulation)
    x = x_ref[...].astype(_MXU_DTYPE)
    w = w_ref[...].astype(_MXU_DTYPE)
    y = jnp.dot(x, w, preferred_element_type=jnp.float32) + b_ref[...].astype(jnp.float32)
    o_ref[...] = y.astype(o_ref.dtype)


def _ffn_ln_kernel(x_ref, w1_ref, b1_ref, w2_ref, b2_ref, g_ref, beta_ref, o_ref):
    # y = LayerNorm(x + relu(x @ w1 + b1) @ w2 + b2)
    f32 = jnp.float32
    x = x_ref[...].astype(f32)
    h = jnp.dot(x.astype(_MXU_DTYPE), w1_ref[...].astype(_MXU_DTYPE),
                preferred_element_type=f32) + b1_ref[...].astype(f32)
    h = jnp.maximum(h, 0.0)
    y = jnp.dot(h.astype(_MXU_DTYPE), w2_ref[...].astype(_MXU_DTYPE),
                preferred_element_type=f32) + b2_ref[...].astype(f32)
    hs = x + y
    mu = jnp.mean(hs, axis=-1, keepdims=True)
    var = jnp.mean(jnp.square(hs - mu), axis=-1, keepdims=True)
    out = (hs - mu) * jax.lax.rsqrt(var + 1e-5)
    o_ref[...] = (out * g_ref[...].astype(f32) + beta_ref[...].astype(f32)).astype(o_ref.dtype)


def _proj_add_ln_kernel(x_ref, res_ref, w_ref, b_ref, g_ref, beta_ref, o_ref):
    # y = LayerNorm(res + (x @ w + b))
    f32 = jnp.float32
    y = jnp.dot(x_ref[...].astype(_MXU_DTYPE), w_ref[...].astype(_MXU_DTYPE),
                preferred_element_type=f32) + b_ref[...].astype(f32)
    hs = res_ref[...].astype(f32) + y
    mu = jnp.mean(hs, axis=-1, keepdims=True)
    var = jnp.mean(jnp.square(hs - mu), axis=-1, keepdims=True)
    out = (hs - mu) * jax.lax.rsqrt(var + 1e-5)
    o_ref[...] = (out * g_ref[...].astype(f32) + beta_ref[...].astype(f32)).astype(o_ref.dtype)


def _off_aw_kernel(tgt_ref, pos_ref, woff_ref, boff_ref, waw_ref, baw_ref,
                   off_ref, aw_ref):
    # query = tgt + pos ; off = query @ Woff + boff ; aw_logits = query @ Waw + baw
    f32 = jnp.float32
    q = (tgt_ref[...].astype(f32) + pos_ref[...].astype(f32)).astype(_MXU_DTYPE)
    off = jnp.dot(q, woff_ref[...].astype(_MXU_DTYPE),
                  preferred_element_type=f32) + boff_ref[...].astype(f32)
    aw = jnp.dot(q, waw_ref[...].astype(_MXU_DTYPE),
                 preferred_element_type=f32) + baw_ref[...].astype(f32)
    off_ref[...] = off.astype(off_ref.dtype)
    aw_ref[...] = aw.astype(aw_ref.dtype)


def _self_attn_kernel(tgt_ref, pos_ref, wq_ref, wk_ref, wv_ref,
                      bq_ref, bk_ref, bv_ref, wo_ref, bo_ref,
                      g_ref, beta_ref, o_ref, *, n_heads):
    # One batch per grid step: fused QKV + per-head attention + out-proj +
    # residual add + LayerNorm.  Heads are handled with static lane slices so
    # the stored output block stays (1, Q, D) (lane-dense at real DETR shapes).
    f32 = jnp.float32
    tgt = tgt_ref[0].astype(f32)                          # (Q, D)
    xqk = tgt + pos_ref[0].astype(f32)                    # q/k use tgt + query_pos
    xqk_m = xqk.astype(_MXU_DTYPE)
    q = jnp.dot(xqk_m, wq_ref[...].astype(_MXU_DTYPE),
                preferred_element_type=f32) + bq_ref[...].astype(f32)
    k = jnp.dot(xqk_m, wk_ref[...].astype(_MXU_DTYPE),
                preferred_element_type=f32) + bk_ref[...].astype(f32)
    v = jnp.dot(tgt.astype(_MXU_DTYPE), wv_ref[...].astype(_MXU_DTYPE),
                preferred_element_type=f32) + bv_ref[...].astype(f32)

    D = q.shape[-1]
    hd = D // n_heads
    scale = 1.0 / math.sqrt(hd)

    out = jnp.zeros_like(tgt)                             # (Q, D) f32 accumulator
    for h in range(n_heads):                              # short static unrolled loop
        lo, hi = h * hd, (h + 1) * hd
        qh = q[:, lo:hi].astype(_MXU_DTYPE)
        kh = k[:, lo:hi].astype(_MXU_DTYPE)
        vh = v[:, lo:hi].astype(_MXU_DTYPE)
        s = jax.lax.dot_general(qh, kh, (((1,), (1,)), ((), ())),
                                preferred_element_type=f32) * scale      # (Q, Q)
        s = s - jnp.max(s, axis=-1, keepdims=True)
        p = jnp.exp(s)
        p = p * pl.reciprocal(jnp.sum(p, axis=-1, keepdims=True), approx=True)
        oh = jnp.dot(p.astype(_MXU_DTYPE), vh, preferred_element_type=f32)  # (Q, hd)
        # fold the output projection per head: sum_h oh @ Wo[h*hd:(h+1)*hd, :]
        out = out + jnp.dot(oh.astype(_MXU_DTYPE),
                            wo_ref[lo:hi, :].astype(_MXU_DTYPE),
                            preferred_element_type=f32)
    out = out + bo_ref[...].astype(f32)

    # residual add + LayerNorm (eps = 1e-5, matches nn.LayerNorm)
    hs = tgt + out
    mu = jnp.mean(hs, axis=-1, keepdims=True)
    var = jnp.mean(jnp.square(hs - mu), axis=-1, keepdims=True)
    y = (hs - mu) * jax.lax.rsqrt(var + 1e-5)
    o_ref[0] = (y * g_ref[...].astype(f32) + beta_ref[...].astype(f32)).astype(o_ref.dtype)


# ----------------------------------------------------------------------------
# Pallas wrappers
# ----------------------------------------------------------------------------
def linear(x, w, b, *, max_rows=1024):
    """x: (..., K) @ w: (K, N) + b: (N,) with large row tiles + row padding."""
    *lead, K = x.shape
    N = w.shape[1]
    M = math.prod(lead) if lead else 1
    tm, Mp = _row_plan(M, max_rows)
    x2 = _pad_rows(x.reshape(M, K), Mp)
    out = pl.pallas_call(
        _linear_kernel,
        grid=(Mp // tm,),
        in_specs=[pl.BlockSpec((tm, K), lambda i: (i, 0)),
                  pl.BlockSpec((K, N), lambda i: (0, 0)),
                  pl.BlockSpec((1, N), lambda i: (0, 0))],
        out_specs=pl.BlockSpec((tm, N), lambda i: (i, 0)),
        out_shape=jax.ShapeDtypeStruct((Mp, N), x.dtype),
        compiler_params=_cparams(1),
    )(x2, w, b.reshape(1, N))
    if Mp != M:
        out = out[:M]
    return out.reshape(*lead, N)


def ffn_add_layernorm(x, w1, b1, w2, b2, gamma, beta, *, max_rows=512):
    """LayerNorm(x + Linear(ReLU(Linear(x)))) fused in one kernel."""
    *lead, D = x.shape
    Fd = w1.shape[1]
    M = math.prod(lead) if lead else 1
    tm, Mp = _row_plan(M, max_rows)
    x2 = _pad_rows(x.reshape(M, D), Mp)
    out = pl.pallas_call(
        _ffn_ln_kernel,
        grid=(Mp // tm,),
        in_specs=[pl.BlockSpec((tm, D), lambda i: (i, 0)),
                  pl.BlockSpec((D, Fd), lambda i: (0, 0)),
                  pl.BlockSpec((1, Fd), lambda i: (0, 0)),
                  pl.BlockSpec((Fd, D), lambda i: (0, 0)),
                  pl.BlockSpec((1, D), lambda i: (0, 0)),
                  pl.BlockSpec((1, D), lambda i: (0, 0)),
                  pl.BlockSpec((1, D), lambda i: (0, 0))],
        out_specs=pl.BlockSpec((tm, D), lambda i: (i, 0)),
        out_shape=jax.ShapeDtypeStruct((Mp, D), x.dtype),
        compiler_params=_cparams(1),
    )(x2, w1, b1.reshape(1, Fd), w2, b2.reshape(1, D),
      gamma.reshape(1, D), beta.reshape(1, D))
    if Mp != M:
        out = out[:M]
    return out.reshape(*lead, D)


def proj_add_layernorm(x, res, w, b, gamma, beta, *, max_rows=1024):
    """LayerNorm(res + (x @ w + b)) fused in one kernel."""
    *lead, K = x.shape
    D = w.shape[1]
    M = math.prod(lead) if lead else 1
    tm, Mp = _row_plan(M, max_rows)
    x2 = _pad_rows(x.reshape(M, K), Mp)
    r2 = _pad_rows(res.reshape(M, D), Mp)
    out = pl.pallas_call(
        _proj_add_ln_kernel,
        grid=(Mp // tm,),
        in_specs=[pl.BlockSpec((tm, K), lambda i: (i, 0)),
                  pl.BlockSpec((tm, D), lambda i: (i, 0)),
                  pl.BlockSpec((K, D), lambda i: (0, 0)),
                  pl.BlockSpec((1, D), lambda i: (0, 0)),
                  pl.BlockSpec((1, D), lambda i: (0, 0)),
                  pl.BlockSpec((1, D), lambda i: (0, 0))],
        out_specs=pl.BlockSpec((tm, D), lambda i: (i, 0)),
        out_shape=jax.ShapeDtypeStruct((Mp, D), res.dtype),
        compiler_params=_cparams(1),
    )(x2, r2, w, b.reshape(1, D), gamma.reshape(1, D), beta.reshape(1, D))
    if Mp != M:
        out = out[:M]
    return out.reshape(*lead, D)


def offsets_and_weights(tgt, query_pos, off_w, off_b, aw_w, aw_b, *, max_rows=1024):
    """Fused sampling-offset and attention-weight heads (query = tgt + pos)."""
    B, Q, D = tgt.shape
    No = off_w.shape[1]
    Na = aw_w.shape[1]
    M = B * Q
    tm, Mp = _row_plan(M, max_rows)
    t2 = _pad_rows(tgt.reshape(M, D), Mp)
    p2 = _pad_rows(query_pos.reshape(M, D), Mp)
    off, aw = pl.pallas_call(
        _off_aw_kernel,
        grid=(Mp // tm,),
        in_specs=[pl.BlockSpec((tm, D), lambda i: (i, 0)),
                  pl.BlockSpec((tm, D), lambda i: (i, 0)),
                  pl.BlockSpec((D, No), lambda i: (0, 0)),
                  pl.BlockSpec((1, No), lambda i: (0, 0)),
                  pl.BlockSpec((D, Na), lambda i: (0, 0)),
                  pl.BlockSpec((1, Na), lambda i: (0, 0))],
        out_specs=[pl.BlockSpec((tm, No), lambda i: (i, 0)),
                   pl.BlockSpec((tm, Na), lambda i: (i, 0))],
        out_shape=(jax.ShapeDtypeStruct((Mp, No), jnp.float32),
                   jax.ShapeDtypeStruct((Mp, Na), jnp.float32)),
        compiler_params=_cparams(1),
    )(t2, p2, off_w, off_b.reshape(1, No), aw_w, aw_b.reshape(1, Na))
    if Mp != M:
        off, aw = off[:M], aw[:M]
    return off.reshape(B, Q, No), aw.reshape(B, Q, Na)


def self_attention_block(tgt, query_pos, in_w, in_b, out_w, out_b, gamma, beta, n_heads):
    """nn.MultiheadAttention (q=k=tgt+pos, v=tgt) + out-proj + residual + LN,
    fused into one Pallas kernel, grid over batch."""
    B, Q, D = tgt.shape
    wq, wk, wv = in_w[:, :D], in_w[:, D:2 * D], in_w[:, 2 * D:]
    bq = in_b[:D].reshape(1, D)
    bk = in_b[D:2 * D].reshape(1, D)
    bv = in_b[2 * D:].reshape(1, D)
    kern = functools.partial(_self_attn_kernel, n_heads=n_heads)
    const2d = pl.BlockSpec((D, D), lambda i: (0, 0))
    const1d = pl.BlockSpec((1, D), lambda i: (0, 0))
    out = pl.pallas_call(
        kern,
        grid=(B,),
        in_specs=[pl.BlockSpec((1, Q, D), lambda i: (i, 0, 0)),
                  pl.BlockSpec((1, Q, D), lambda i: (i, 0, 0)),
                  const2d, const2d, const2d,          # wq, wk, wv
                  const1d, const1d, const1d,          # bq, bk, bv
                  const2d, const1d,                   # wo, bo
                  const1d, const1d],                  # gamma, beta
        out_specs=pl.BlockSpec((1, Q, D), lambda i: (i, 0, 0)),
        out_shape=jax.ShapeDtypeStruct((B, Q, D), tgt.dtype),
        compiler_params=_cparams(1),
    )(tgt, query_pos, wq, wk, wv, bq, bk, bv,
      out_w, out_b.reshape(1, D), gamma.reshape(1, D), beta.reshape(1, D))
    return out


# ----------------------------------------------------------------------------
# Multi-scale deformable attention — projections in Pallas, bilinear
# grid_sample gather in plain JAX (fused by the surrounding jax.jit).
# ----------------------------------------------------------------------------
def _bilinear_sample_level(value_l, loc_l, Hl, Wl):
    """value_l: (B, H, Sl, hd); loc_l: (B, Q, H, P, 2) normalized [0,1] coords.

    Reproduces F.grid_sample(mode='bilinear', padding_mode='zeros',
    align_corners=False) with grid = 2*loc - 1.  Returns (B, H, Q, P, hd).
    """
    # TODO(synk): data-dependent gather stays in plain JAX (no rectangular BlockSpec).
    B, nH, Sl, hd = value_l.shape
    _, Q, _, P, _ = loc_l.shape
    ix = loc_l[..., 0] * Wl - 0.5        # (B,Q,H,P)
    iy = loc_l[..., 1] * Hl - 0.5
    x0 = jnp.floor(ix)
    y0 = jnp.floor(iy)
    x1 = x0 + 1.0
    y1 = y0 + 1.0
    wx1 = ix - x0
    wx0 = 1.0 - wx1
    wy1 = iy - y0
    wy0 = 1.0 - wy1

    def to_bhqp(t):
        return jnp.transpose(t, (0, 2, 1, 3)).reshape(B, nH, Q * P, 1)

    def gather(xi, yi):
        valid = (xi >= 0) & (xi <= Wl - 1) & (yi >= 0) & (yi <= Hl - 1)
        xi_c = jnp.clip(xi, 0, Wl - 1).astype(jnp.int32)
        yi_c = jnp.clip(yi, 0, Hl - 1).astype(jnp.int32)
        flat = yi_c * Wl + xi_c                                   # (B,Q,H,P)
        flat = jnp.transpose(flat, (0, 2, 1, 3)).reshape(B, nH, Q * P)
        idx = jnp.broadcast_to(flat[..., None], (B, nH, Q * P, hd))
        g = jnp.take_along_axis(value_l, idx, axis=2)             # (B,H,QP,hd)
        return g * to_bhqp(valid.astype(value_l.dtype))

    out = (gather(x0, y0) * to_bhqp(wx0 * wy0)
           + gather(x1, y0) * to_bhqp(wx1 * wy0)
           + gather(x0, y1) * to_bhqp(wx0 * wy1)
           + gather(x1, y1) * to_bhqp(wx1 * wy1))
    return out.reshape(B, nH, Q, P, hd)


def ms_deform_attn(p, tgt, query_pos, ref_points_input, src, spatial_shapes,
                   level_start_index, n_heads, n_points):
    B, Q, D = tgt.shape
    L = len(spatial_shapes)
    H = n_heads
    P = n_points
    hd = D // H

    # value projection over src (large row tiles; bf16 MXU operands)
    value = linear(src, p['val_w'], p['val_b'], max_rows=1024)        # (B,S,D)
    value = value.reshape(B, -1, H, hd).transpose(0, 2, 1, 3)         # (B,H,S,hd)

    # fused sampling-offset + attention-weight heads (query = tgt + pos)
    off, aw_logits = offsets_and_weights(tgt, query_pos,
                                         p['off_w'], p['off_b'],
                                         p['aw_w'], p['aw_b'])
    offsets = off.reshape(B, Q, H, L, P, 2)
    aw = jax.nn.softmax(aw_logits.reshape(B, Q, H, L * P), axis=-1).reshape(B, Q, H, L, P)

    # offset normalizer is [W, H] per level
    normalizer = jnp.array([[w_, h_] for (h_, w_) in spatial_shapes], dtype=jnp.float32)
    sampling_locations = (ref_points_input[:, :, None, :, None, :]
                          + offsets / normalizer[None, None, None, :, None, :])
    # shape: (B, Q, H, L, P, 2)

    sampled = []
    for lid, (Hl, Wl) in enumerate(spatial_shapes):
        start = level_start_index[lid]
        value_l = value[:, :, start:start + Hl * Wl, :]               # (B,H,Sl,hd)
        loc_l = sampling_locations[:, :, :, lid]                      # (B,Q,H,P,2)
        sampled.append(_bilinear_sample_level(value_l, loc_l, Hl, Wl))
    sv = jnp.stack(sampled, axis=3)                                   # (B,H,Q,L,P,hd)
    aww = jnp.transpose(aw, (0, 2, 1, 3, 4))                          # (B,H,Q,L,P)
    out = jnp.sum(sv * aww[..., None], axis=(3, 4))                   # (B,H,Q,hd)
    out = jnp.transpose(out, (0, 2, 1, 3)).reshape(B, Q, D)
    return out, sampling_locations, aw


# ----------------------------------------------------------------------------
# Decoder layer + decoder stack
# ----------------------------------------------------------------------------
def decoder_layer_forward(p, tgt, query_pos, ref_points_input, src,
                          spatial_shapes, level_start_index, n_heads, n_points):
    # --- self-attention (QKV + attn + out-proj + residual + LN fused) ---
    tgt = self_attention_block(tgt, query_pos, p['sa_in_w'], p['sa_in_b'],
                               p['sa_out_w'], p['sa_out_b'],
                               p['ln2_g'], p['ln2_b'], n_heads)
    # --- deformable cross-attention ---
    msda_out, samp_loc, attn_w = ms_deform_attn(p, tgt, query_pos, ref_points_input,
                                                src, spatial_shapes, level_start_index,
                                                n_heads, n_points)
    tgt = proj_add_layernorm(msda_out, tgt, p['co_w'], p['co_b'],
                             p['ln1_g'], p['ln1_b'])
    # --- FFN (+ residual + LN fused) ---
    tgt = ffn_add_layernorm(tgt, p['w1'], p['b1'], p['w2'], p['b2'],
                            p['ln3_g'], p['ln3_b'])
    return tgt, samp_loc, attn_w


def deformable_transformer_decoder_forward(layer_params, tgt, reference_points,
                                           src, spatial_shapes, level_start_index,
                                           valid_ratios, query_pos,
                                           n_heads, n_points,
                                           return_intermediate=True):
    """Mirrors DeformableTransformerDecoder.forward (bbox_embed=None, eval mode)."""
    assert reference_points.shape[-1] == 2, \
        "only the 2-d reference-point path is implemented (4-d/bbox_embed: TODO)"
    output = tgt
    intermediate = []
    intermediate_ref = []
    samp_all = []
    attnw_all = []
    for p in layer_params:
        ref_input = reference_points[:, :, None, :] * valid_ratios[:, None, :, :]  # (B,Q,L,2)
        output, samp, aw = decoder_layer_forward(p, output, query_pos, ref_input,
                                                 src, spatial_shapes,
                                                 level_start_index, n_heads, n_points)
        samp_all.append(samp)
        attnw_all.append(aw)
        if return_intermediate:
            intermediate.append(output)
            intermediate_ref.append(reference_points)  # bbox_embed is None -> unchanged
    samp_all = jnp.stack(samp_all, axis=1)     # (B, num_layers, Q, H, L, P, 2)
    attnw_all = jnp.stack(attnw_all, axis=1)   # (B, num_layers, Q, H, L, P)
    if return_intermediate:
        return (jnp.stack(intermediate),             # (num_layers, B, Q, D)
                jnp.stack(intermediate_ref),         # (num_layers, B, Q, 2)
                samp_all, attnw_all)
    return output, reference_points, samp_all, attnw_all


# ----------------------------------------------------------------------------
# Deterministic synthetic parameter init
# ----------------------------------------------------------------------------
def init_params(key, num_layers, D, H, L, P, Fd):
    state = {'key': key}

    def nxt():
        state['key'], sub = jax.random.split(state['key'])
        return sub

    def lin(fan_in, fan_out):
        w = jax.random.normal(nxt(), (fan_in, fan_out), jnp.float32) / math.sqrt(fan_in)
        b = 0.01 * jax.random.normal(nxt(), (fan_out,), jnp.float32)
        return w, b

    layers = []
    for _ in range(num_layers):
        sa_in_w, sa_in_b = lin(D, 3 * D)
        sa_out_w, sa_out_b = lin(D, D)
        off_w, off_b = lin(D, H * L * P * 2)
        aw_w, aw_b = lin(D, H * L * P)
        val_w, val_b = lin(D, D)
        co_w, co_b = lin(D, D)
        w1, b1 = lin(D, Fd)
        w2, b2 = lin(Fd, D)
        layers.append(dict(
            sa_in_w=sa_in_w, sa_in_b=sa_in_b, sa_out_w=sa_out_w, sa_out_b=sa_out_b,
            ln2_g=jnp.ones((D,), jnp.float32), ln2_b=jnp.zeros((D,), jnp.float32),
            off_w=off_w, off_b=off_b, aw_w=aw_w, aw_b=aw_b,
            val_w=val_w, val_b=val_b, co_w=co_w, co_b=co_b,
            ln1_g=jnp.ones((D,), jnp.float32), ln1_b=jnp.zeros((D,), jnp.float32),
            w1=w1, b1=b1, w2=w2, b2=b2,
            ln3_g=jnp.ones((D,), jnp.float32), ln3_b=jnp.zeros((D,), jnp.float32),
        ))
    return layers


# ----------------------------------------------------------------------------
# Main
# ----------------------------------------------------------------------------
if __name__ == "__main__":
    # small shapes consistent with the module (B, num_queries, d_model, ...)
    B, Q, D = 2, 16, 32
    n_heads, n_points, num_layers, d_ffn = 4, 2, 3, 64
    spatial_shapes = [(8, 8), (4, 4)]          # multi-scale levels
    n_levels = len(spatial_shapes)
    level_start_index = [0]
    for (h, w) in spatial_shapes[:-1]:
        level_start_index.append(level_start_index[-1] + h * w)
    S = sum(h * w for (h, w) in spatial_shapes)

    key = jax.random.PRNGKey(0)
    k0, k1, k2, k3, k4, k5 = jax.random.split(key, 6)

    tgt = jax.random.normal(k0, (B, Q, D), jnp.float32)
    query_pos = jax.random.normal(k1, (B, Q, D), jnp.float32)
    src = jax.random.normal(k2, (B, S, D), jnp.float32)
    reference_points = jax.nn.sigmoid(jax.random.normal(k3, (B, Q, 2), jnp.float32))
    src_valid_ratios = jnp.clip(
        0.8 + 0.2 * jax.random.uniform(k4, (B, n_levels, 2), jnp.float32), 0.0, 1.0)

    params = init_params(k5, num_layers, D, n_heads, n_levels, n_points, d_ffn)

    @jax.jit
    def run(params, tgt, reference_points, src, valid_ratios, query_pos):
        return deformable_transformer_decoder_forward(
            params, tgt, reference_points, src, spatial_shapes, level_start_index,
            valid_ratios, query_pos, n_heads=n_heads, n_points=n_points,
            return_intermediate=True)

    outs = run(params, tgt, reference_points, src, src_valid_ratios, query_pos)
    jax.block_until_ready(outs)

    inter, inter_ref, samp_all, attnw_all = outs
    assert inter.shape == (num_layers, B, Q, D)
    assert inter_ref.shape == (num_layers, B, Q, 2)
    assert samp_all.shape == (B, num_layers, Q, n_heads, n_levels, n_points, 2)
    assert attnw_all.shape == (B, num_layers, Q, n_heads, n_levels, n_points)
    assert bool(jnp.all(jnp.isfinite(inter)))

    print("KERNEL_OK")
</pallas_src>

<mosaic_0001>
module attributes {stable_mosaic.version = 11 : i64} {
  func.func private @main(%arg0: i32) attributes {dimension_semantics = [#tpu.dimension_semantics<core_parallel>], iteration_bounds = array<i64: 2>, tpu.core_type = #tpu.core_type<sc_scalar_subcore>, window_params = []} {
    return
  }
}

module attributes {stable_mosaic.version = 11 : i64} {
  func.func private @main(%arg0: i32) attributes {dimension_semantics = [#tpu.dimension_semantics<core_parallel>], iteration_bounds = array<i64: 2>, tpu.core_type = #tpu.core_type<sc_scalar_subcore>, window_params = []} {
    return
  }
}

module attributes {stable_mosaic.version = 11 : i64} {
  func.func @_self_attn_kernel(%arg0: i32, %arg1: memref<1x16x32xf32, #tpu.memory_space<vmem>>, %arg2: memref<1x16x32xf32, #tpu.memory_space<vmem>>, %arg3: memref<32x32xf32, #tpu.memory_space<vmem>>, %arg4: memref<32x32xf32, #tpu.memory_space<vmem>>, %arg5: memref<32x32xf32, #tpu.memory_space<vmem>>, %arg6: memref<1x32xf32, #tpu.memory_space<vmem>>, %arg7: memref<1x32xf32, #tpu.memory_space<vmem>>, %arg8: memref<1x32xf32, #tpu.memory_space<vmem>>, %arg9: memref<32x32xf32, #tpu.memory_space<vmem>>, %arg10: memref<1x32xf32, #tpu.memory_space<vmem>>, %arg11: memref<1x32xf32, #tpu.memory_space<vmem>>, %arg12: memref<1x32xf32, #tpu.memory_space<vmem>>, %arg13: memref<1x16x32xf32, #tpu.memory_space<vmem>>) attributes {dimension_semantics = [#tpu.dimension_semantics<parallel>], iteration_bounds = array<i64: 2>, scalar_prefetch = 0 : i64, scratch_operands = 0 : i64, tpu.core_type = #tpu.core_type<tc>, window_params = [{transform_indices = @transform_0, window_bounds = array<i64: 1, 16, 32>}, {transform_indices = @transform_1, window_bounds = array<i64: 1, 16, 32>}, {pipeline_mode = #tpu.pipeline_mode<synchronous>, transform_indices = @transform_2, window_bounds = array<i64: 32, 32>}, {pipeline_mode = #tpu.pipeline_mode<synchronous>, transform_indices = @transform_3, window_bounds = array<i64: 32, 32>}, {pipeline_mode = #tpu.pipeline_mode<synchronous>, transform_indices = @transform_4, window_bounds = array<i64: 32, 32>}, {pipeline_mode = #tpu.pipeline_mode<synchronous>, transform_indices = @transform_5, window_bounds = array<i64: 1, 32>}, {pipeline_mode = #tpu.pipeline_mode<synchronous>, transform_indices = @transform_6, window_bounds = array<i64: 1, 32>}, {pipeline_mode = #tpu.pipeline_mode<synchronous>, transform_indices = @transform_7, window_bounds = array<i64: 1, 32>}, {pipeline_mode = #tpu.pipeline_mode<synchronous>, transform_indices = @transform_8, window_bounds = array<i64: 32, 32>}, {pipeline_mode = #tpu.pipeline_mode<synchronous>, transform_indices = @transform_9, window_bounds = array<i64: 1, 32>}, {pipeline_mode = #tpu.pipeline_mode<synchronous>, transform_indices = @transform_10, window_bounds = array<i64: 1, 32>}, {pipeline_mode = #tpu.pipeline_mode<synchronous>, transform_indices = @transform_11, window_bounds = array<i64: 1, 32>}, {transform_indices = @transform_12, window_bounds = array<i64: 1, 16, 32>}]} {
    %c0 = arith.constant 0 : index
    %c0_0 = arith.constant 0 : index
    %c0_1 = arith.constant 0 : index
    %0 = vector.load %arg1[%c0, %c0_0, %c0_1] : memref<1x16x32xf32, #tpu.memory_space<vmem>>, vector<1x16x32xf32>
    %1 = vector.shape_cast %0 : vector<1x16x32xf32> to vector<16x32xf32>
    %c0_2 = arith.constant 0 : index
    %c0_3 = arith.constant 0 : index
    %c0_4 = arith.constant 0 : index
    %2 = vector.load %arg2[%c0_2, %c0_3, %c0_4] : memref<1x16x32xf32, #tpu.memory_space<vmem>>, vector<1x16x32xf32>
    %3 = vector.shape_cast %2 : vector<1x16x32xf32> to vector<16x32xf32>
    %4 = arith.addf %1, %3 : vector<16x32xf32>
    %5 = arith.truncf %4 : vector<16x32xf32> to vector<16x32xbf16>
    %c0_5 = arith.constant 0 : index
    %c0_6 = arith.constant 0 : index
    %6 = vector.load %arg3[%c0_5, %c0_6] : memref<32x32xf32, #tpu.memory_space<vmem>>, vector<32x32xf32>
    %7 = arith.truncf %6 : vector<32x32xf32> to vector<32x32xbf16>
    %cst = arith.constant dense<0.000000e+00> : vector<16x32xf32>
    %8 = tpu.matmul %5, %7, %cst {dimension_numbers = #tpu.dot_dimension_numbers<[1], [0], [0], [1], [0, 0, 1, 1], [], []>} : vector<16x32xbf16>, vector<32x32xbf16>, vector<16x32xf32> -> vector<16x32xf32>
    %c0_7 = arith.constant 0 : index
    %c0_8 = arith.constant 0 : index
    %9 = vector.load %arg6[%c0_7, %c0_8] : memref<1x32xf32, #tpu.memory_space<vmem>>, vector<1x32xf32>
    %10 = vector.broadcast %9 : vector<1x32xf32> to vector<16x32xf32>
    %11 = arith.addf %8, %10 : vector<16x32xf32>
    %c0_9 = arith.constant 0 : index
    %c0_10 = arith.constant 0 : index
    %12 = vector.load %arg4[%c0_9, %c0_10] : memref<32x32xf32, #tpu.memory_space<vmem>>, vector<32x32xf32>
    %13 = arith.truncf %12 : vector<32x32xf32> to vector<32x32xbf16>
    %cst_11 = arith.constant dense<0.000000e+00> : vector<16x32xf32>
    %14 = tpu.matmul %5, %13, %cst_11 {dimension_numbers = #tpu.dot_dimension_numbers<[1], [0], [0], [1], [0, 0, 1, 1], [], []>} : vector<16x32xbf16>, vector<32x32xbf16>, vector<16x32xf32> -> vector<16x32xf32>
    %c0_12 = arith.constant 0 : index
    %c0_13 = arith.constant 0 : index
    %15 = vector.load %arg7[%c0_12, %c0_13] : memref<1x32xf32, #tpu.memory_space<vmem>>, vector<1x32xf32>
    %16 = vector.broadcast %15 : vector<1x32xf32> to vector<16x32xf32>
    %17 = arith.addf %14, %16 : vector<16x32xf32>
    %18 = arith.truncf %1 : vector<16x32xf32> to vector<16x32xbf16>
    %c0_14 = arith.constant 0 : index
    %c0_15 = arith.constant 0 : index
    %19 = vector.load %arg5[%c0_14, %c0_15] : memref<32x32xf32, #tpu.memory_space<vmem>>, vector<32x32xf32>
    %20 = arith.truncf %19 : vector<32x32xf32> to vector<32x32xbf16>
    %cst_16 = arith.constant dense<0.000000e+00> : vector<16x32xf32>
    %21 = tpu.matmul %18, %20, %cst_16 {dimension_numbers = #tpu.dot_dimension_numbers<[1], [0], [0], [1], [0, 0, 1, 1], [], []>} : vector<16x32xbf16>, vector<32x32xbf16>, vector<16x32xf32> -> vector<16x32xf32>
    %c0_17 = arith.constant 0 : index
    %c0_18 = arith.constant 0 : index
    %22 = vector.load %arg8[%c0_17, %c0_18] : memref<1x32xf32, #tpu.memory_space<vmem>>, vector<1x32xf32>
    %23 = vector.broadcast %22 : vector<1x32xf32> to vector<16x32xf32>
    %24 = arith.addf %21, %23 : vector<16x32xf32>
    %cst_19 = arith.constant 0.000000e+00 : f32
    %25 = vector.broadcast %cst_19 : f32 to vector<16x32xf32>
    %26 = vector.extract_strided_slice %11 {offsets = [0, 0], sizes = [16, 8], strides = [1, 1]} : vector<16x32xf32> to vector<16x8xf32>
    %27 = arith.truncf %26 : vector<16x8xf32> to vector<16x8xbf16>
    %28 = vector.extract_strided_slice %17 {offsets = [0, 0], sizes = [16, 8], strides = [1, 1]} : vector<16x32xf32> to vector<16x8xf32>
    %29 = arith.truncf %28 : vector<16x8xf32> to vector<16x8xbf16>
    %30 = vector.extract_strided_slice %24 {offsets = [0, 0], sizes = [16, 8], strides = [1, 1]} : vector<16x32xf32> to vector<16x8xf32>
    %31 = arith.truncf %30 : vector<16x8xf32> to vector<16x8xbf16>
    %cst_20 = arith.constant dense<0.000000e+00> : vector<16x16xf32>
    %32 = tpu.matmul %27, %29, %cst_20 {dimension_numbers = #tpu.dot_dimension_numbers<[1], [1], [0], [0], [0, 0, 1, 0], [], []>} : vector<16x8xbf16>, vector<16x8xbf16>, vector<16x16xf32> -> vector<16x16xf32>
    %cst_21 = arith.constant 0.353553385 : f32
    %33 = vector.broadcast %cst_21 : f32 to vector<16x16xf32>
    %34 = arith.mulf %32, %33 : vector<16x16xf32>
    %cst_22 = arith.constant dense<0xFF800000> : vector<16xf32>
    %35 = vector.multi_reduction <maximumf>, %34, %cst_22 [1] : vector<16x16xf32> to vector<16xf32>
    %36 = vector.shape_cast %35 : vector<16xf32> to vector<16x1xf32>
    %37 = vector.broadcast %36 : vector<16x1xf32> to vector<16x16xf32>
    %38 = arith.subf %34, %37 : vector<16x16xf32>
    %39 = math.exp %38 : vector<16x16xf32>
    %cst_23 = arith.constant dense<0.000000e+00> : vector<16xf32>
    %40 = vector.multi_reduction <add>, %39, %cst_23 [1] : vector<16x16xf32> to vector<16xf32>
    %41 = vector.shape_cast %40 : vector<16xf32> to vector<16x1xf32>
    %42 = tpu.reciprocal %41 {approx = true} : vector<16x1xf32> -> vector<16x1xf32>
    %43 = vector.broadcast %42 : vector<16x1xf32> to vector<16x16xf32>
    %44 = arith.mulf %39, %43 : vector<16x16xf32>
    %45 = arith.truncf %44 : vector<16x16xf32> to vector<16x16xbf16>
    %cst_24 = arith.constant dense<0.000000e+00> : vector<16x8xf32>
    %46 = tpu.matmul %45, %31, %cst_24 {dimension_numbers = #tpu.dot_dimension_numbers<[1], [0], [0], [1], [0, 0, 1, 1], [], []>} : vector<16x16xbf16>, vector<16x8xbf16>, vector<16x8xf32> -> vector<16x8xf32>
    %47 = arith.truncf %46 : vector<16x8xf32> to vector<16x8xbf16>
    %c0_25 = arith.constant 0 : index
    %c0_26 = arith.constant 0 : index
    %48 = vector.load %arg9[%c0_25, %c0_26] : memref<32x32xf32, #tpu.memory_space<vmem>>, vector<8x32xf32>
    %49 = arith.truncf %48 : vector<8x32xf32> to vector<8x32xbf16>
    %cst_27 = arith.constant dense<0.000000e+00> : vector<16x32xf32>
    %50 = tpu.matmul %47, %49, %cst_27 {dimension_numbers = #tpu.dot_dimension_numbers<[1], [0], [0], [1], [0, 0, 1, 1], [], []>} : vector<16x8xbf16>, vector<8x32xbf16>, vector<16x32xf32> -> vector<16x32xf32>
    %51 = arith.addf %25, %50 : vector<16x32xf32>
    %52 = vector.extract_strided_slice %11 {offsets = [0, 8], sizes = [16, 8], strides = [1, 1]} : vector<16x32xf32> to vector<16x8xf32>
    %53 = arith.truncf %52 : vector<16x8xf32> to vector<16x8xbf16>
    %54 = vector.extract_strided_slice %17 {offsets = [0, 8], sizes = [16, 8], strides = [1, 1]} : vector<16x32xf32> to vector<16x8xf32>
    %55 = arith.truncf %54 : vector<16x8xf32> to vector<16x8xbf16>
    %56 = vector.extract_strided_slice %24 {offsets = [0, 8], sizes = [16, 8], strides = [1, 1]} : vector<16x32xf32> to vector<16x8xf32>
    %57 = arith.truncf %56 : vector<16x8xf32> to vector<16x8xbf16>
    %cst_28 = arith.constant dense<0.000000e+00> : vector<16x16xf32>
    %58 = tpu.matmul %53, %55, %cst_28 {dimension_numbers = #tpu.dot_dimension_numbers<[1], [1], [0], [0], [0, 0, 1, 0], [], []>} : vector<16x8xbf16>, vector<16x8xbf16>, vector<16x16xf32> -> vector<16x16xf32>
    %cst_29 = arith.constant 0.353553385 : f32
    %59 = vector.broadcast %cst_29 : f32 to vector<16x16xf32>
    %60 = arith.mulf %58, %59 : vector<16x16xf32>
    %cst_30 = arith.constant dense<0xFF800000> : vector<16xf32>
    %61 = vector.multi_reduction <maximumf>, %60, %cst_30 [1] : vector<16x16xf32> to vector<16xf32>
    %62 = vector.shape_cast %61 : vector<16xf32> to vector<16x1xf32>
    %63 = vector.broadcast %62 : vector<16x1xf32> to vector<16x16xf32>
    %64 = arith.subf %60, %63 : vector<16x16xf32>
    %65 = math.exp %64 : vector<16x16xf32>
    %cst_31 = arith.constant dense<0.000000e+00> : vector<16xf32>
    %66 = vector.multi_reduction <add>, %65, %cst_31 [1] : vector<16x16xf32> to vector<16xf32>
    %67 = vector.shape_cast %66 : vector<16xf32> to vector<16x1xf32>
    %68 = tpu.reciprocal %67 {approx = true} : vector<16x1xf32> -> vector<16x1xf32>
    %69 = vector.broadcast %68 : vector<16x1xf32> to vector<16x16xf32>
    %70 = arith.mulf %65, %69 : vector<16x16xf32>
    %71 = arith.truncf %70 : vector<16x16xf32> to vector<16x16xbf16>
    %cst_32 = arith.constant dense<0.000000e+00> : vector<16x8xf32>
    %72 = tpu.matmul %71, %57, %cst_32 {dimension_numbers = #tpu.dot_dimension_numbers<[1], [0], [0], [1], [0, 0, 1, 1], [], []>} : vector<16x16xbf16>, vector<16x8xbf16>, vector<16x8xf32> -> vector<16x8xf32>
    %73 = arith.truncf %72 : vector<16x8xf32> to vector<16x8xbf16>
    %c8 = arith.constant 8 : index
    %c0_33 = arith.constant 0 : index
    %74 = vector.load %arg9[%c8, %c0_33] : memref<32x32xf32, #tpu.memory_space<vmem>>, vector<8x32xf32>
    %75 = arith.truncf %74 : vector<8x32xf32> to vector<8x32xbf16>
    %cst_34 = arith.constant dense<0.000000e+00> : vector<16x32xf32>
    %76 = tpu.matmul %73, %75, %cst_34 {dimension_numbers = #tpu.dot_dimension_numbers<[1], [0], [0], [1], [0, 0, 1, 1], [], []>} : vector<16x8xbf16>, vector<8x32xbf16>, vector<16x32xf32> -> vector<16x32xf32>
    %77 = arith.addf %51, %76 : vector<16x32xf32>
    %78 = vector.extract_strided_slice %11 {offsets = [0, 16], sizes = [16, 8], strides = [1, 1]} : vector<16x32xf32> to vector<16x8xf32>
    %79 = arith.truncf %78 : vector<16x8xf32> to vector<16x8xbf16>
    %80 = vector.extract_strided_slice %17 {offsets = [0, 16], sizes = [16, 8], strides = [1, 1]} : vector<16x32xf32> to vector<16x8xf32>
    %81 = arith.truncf %80 : vector<16x8xf32> to vector<16x8xbf16>
    %82 = vector.extract_strided_slice %24 {offsets = [0, 16], sizes = [16, 8], strides = [1, 1]} : vector<16x32xf32> to vector<16x8xf32>
    %83 = arith.truncf %82 : vector<16x8xf32> to vector<16x8xbf16>
    %cst_35 = arith.constant dense<0.000000e+00> : vector<16x16xf32>
    %84 = tpu.matmul %79, %81, %cst_35 {dimension_numbers = #tpu.dot_dimension_numbers<[1], [1], [0], [0], [0, 0, 1, 0], [], []>} : vector<16x8xbf16>, vector<16x8xbf16>, vector<16x16xf32> -> vector<16x16xf32>
    %cst_36 = arith.constant 0.353553385 : f32
    %85 = vector.broadcast %cst_36 : f32 to vector<16x16xf32>
    %86 = arith.mulf %84, %85 : vector<16x16xf32>
    %cst_37 = arith.constant dense<0xFF800000> : vector<16xf32>
    %87 = vector.multi_reduction <maximumf>, %86, %cst_37 [1] : vector<16x16xf32> to vector<16xf32>
    %88 = vector.shape_cast %87 : vector<16xf32> to vector<16x1xf32>
    %89 = vector.broadcast %88 : vector<16x1xf32> to vector<16x16xf32>
    %90 = arith.subf %86, %89 : vector<16x16xf32>
    %91 = math.exp %90 : vector<16x16xf32>
    %cst_38 = arith.constant dense<0.000000e+00> : vector<16xf32>
    %92 = vector.multi_reduction <add>, %91, %cst_38 [1] : vector<16x16xf32> to vector<16xf32>
    %93 = vector.shape_cast %92 : vector<16xf32> to vector<16x1xf32>
    %94 = tpu.reciprocal %93 {approx = true} : vector<16x1xf32> -> vector<16x1xf32>
    %95 = vector.broadcast %94 : vector<16x1xf32> to vector<16x16xf32>
    %96 = arith.mulf %91, %95 : vector<16x16xf32>
    %97 = arith.truncf %96 : vector<16x16xf32> to vector<16x16xbf16>
    %cst_39 = arith.constant dense<0.000000e+00> : vector<16x8xf32>
    %98 = tpu.matmul %97, %83, %cst_39 {dimension_numbers = #tpu.dot_dimension_numbers<[1], [0], [0], [1], [0, 0, 1, 1], [], []>} : vector<16x16xbf16>, vector<16x8xbf16>, vector<16x8xf32> -> vector<16x8xf32>
    %99 = arith.truncf %98 : vector<16x8xf32> to vector<16x8xbf16>
    %c16 = arith.constant 16 : index
    %c0_40 = arith.constant 0 : index
    %100 = vector.load %arg9[%c16, %c0_40] : memref<32x32xf32, #tpu.memory_space<vmem>>, vector<8x32xf32>
    %101 = arith.truncf %100 : vector<8x32xf32> to vector<8x32xbf16>
    %cst_41 = arith.constant dense<0.000000e+00> : vector<16x32xf32>
    %102 = tpu.matmul %99, %101, %cst_41 {dimension_numbers = #tpu.dot_dimension_numbers<[1], [0], [0], [1], [0, 0, 1, 1], [], []>} : vector<16x8xbf16>, vector<8x32xbf16>, vector<16x32xf32> -> vector<16x32xf32>
    %103 = arith.addf %77, %102 : vector<16x32xf32>
    %104 = vector.extract_strided_slice %11 {offsets = [0, 24], sizes = [16, 8], strides = [1, 1]} : vector<16x32xf32> to vector<16x8xf32>
    %105 = arith.truncf %104 : vector<16x8xf32> to vector<16x8xbf16>
    %106 = vector.extract_strided_slice %17 {offsets = [0, 24], sizes = [16, 8], strides = [1, 1]} : vector<16x32xf32> to vector<16x8xf32>
    %107 = arith.truncf %106 : vector<16x8xf32> to vector<16x8xbf16>
    %108 = vector.extract_strided_slice %24 {offsets = [0, 24], sizes = [16, 8], strides = [1, 1]} : vector<16x32xf32> to vector<16x8xf32>
    %109 = arith.truncf %108 : vector<16x8xf32> to vector<16x8xbf16>
    %cst_42 = arith.constant dense<0.000000e+00> : vector<16x16xf32>
    %110 = tpu.matmul %105, %107, %cst_42 {dimension_numbers = #tpu.dot_dimension_numbers<[1], [1], [0], [0], [0, 0, 1, 0], [], []>} : vector<16x8xbf16>, vector<16x8xbf16>, vector<16x16xf32> -> vector<16x16xf32>
    %cst_43 = arith.constant 0.353553385 : f32
    %111 = vector.broadcast %cst_43 : f32 to vector<16x16xf32>
    %112 = arith.mulf %110, %111 : vector<16x16xf32>
    %cst_44 = arith.constant dense<0xFF800000> : vector<16xf32>
    %113 = vector.multi_reduction <maximumf>, %112, %cst_44 [1] : vector<16x16xf32> to vector<16xf32>
    %114 = vector.shape_cast %113 : vector<16xf32> to vector<16x1xf32>
    %115 = vector.broadcast %114 : vector<16x1xf32> to vector<16x16xf32>
    %116 = arith.subf %112, %115 : vector<16x16xf32>
    %117 = math.exp %116 : vector<16x16xf32>
    %cst_45 = arith.constant dense<0.000000e+00> : vector<16xf32>
    %118 = vector.multi_reduction <add>, %117, %cst_45 [1] : vector<16x16xf32> to vector<16xf32>
    %119 = vector.shape_cast %118 : vector<16xf32> to vector<16x1xf32>
    %120 = tpu.reciprocal %119 {approx = true} : vector<16x1xf32> -> vector<16x1xf32>
    %121 = vector.broadcast %120 : vector<16x1xf32> to vector<16x16xf32>
    %122 = arith.mulf %117, %121 : vector<16x16xf32>
    %123 = arith.truncf %122 : vector<16x16xf32> to vector<16x16xbf16>
    %cst_46 = arith.constant dense<0.000000e+00> : vector<16x8xf32>
    %124 = tpu.matmul %123, %109, %cst_46 {dimension_numbers = #tpu.dot_dimension_numbers<[1], [0], [0], [1], [0, 0, 1, 1], [], []>} : vector<16x16xbf16>, vector<16x8xbf16>, vector<16x8xf32> -> vector<16x8xf32>
    %125 = arith.truncf %124 : vector<16x8xf32> to vector<16x8xbf16>
    %c24 = arith.constant 24 : index
    %c0_47 = arith.constant 0 : index
    %126 = vector.load %arg9[%c24, %c0_47] : memref<32x32xf32, #tpu.memory_space<vmem>>, vector<8x32xf32>
    %127 = arith.truncf %126 : vector<8x32xf32> to vector<8x32xbf16>
    %cst_48 = arith.constant dense<0.000000e+00> : vector<16x32xf32>
    %128 = tpu.matmul %125, %127, %cst_48 {dimension_numbers = #tpu.dot_dimension_numbers<[1], [0], [0], [1], [0, 0, 1, 1], [], []>} : vector<16x8xbf16>, vector<8x32xbf16>, vector<16x32xf32> -> vector<16x32xf32>
    %129 = arith.addf %103, %128 : vector<16x32xf32>
    %c0_49 = arith.constant 0 : index
    %c0_50 = arith.constant 0 : index
    %130 = vector.load %arg10[%c0_49, %c0_50] : memref<1x32xf32, #tpu.memory_space<vmem>>, vector<1x32xf32>
    %131 = vector.broadcast %130 : vector<1x32xf32> to vector<16x32xf32>
    %132 = arith.addf %129, %131 : vector<16x32xf32>
    %133 = arith.addf %1, %132 : vector<16x32xf32>
    %cst_51 = arith.constant dense<0.000000e+00> : vector<16xf32>
    %134 = vector.multi_reduction <add>, %133, %cst_51 [1] : vector<16x32xf32> to vector<16xf32>
    %135 = vector.shape_cast %134 : vector<16xf32> to vector<16x1xf32>
    %cst_52 = arith.constant 3.200000e+01 : f32
    %136 = vector.broadcast %cst_52 : f32 to vector<16x1xf32>
    %137 = arith.divf %135, %136 : vector<16x1xf32>
    %138 = vector.broadcast %137 : vector<16x1xf32> to vector<16x32xf32>
    %139 = arith.subf %133, %138 : vector<16x32xf32>
    %140 = arith.mulf %139, %139 : vector<16x32xf32>
    %cst_53 = arith.constant dense<0.000000e+00> : vector<16xf32>
    %141 = vector.multi_reduction <add>, %140, %cst_53 [1] : vector<16x32xf32> to vector<16xf32>
    %142 = vector.shape_cast %141 : vector<16xf32> to vector<16x1xf32>
    %cst_54 = arith.constant 3.200000e+01 : f32
    %143 = vector.broadcast %cst_54 : f32 to vector<16x1xf32>
    %144 = arith.divf %142, %143 : vector<16x1xf32>
    %145 = vector.broadcast %137 : vector<16x1xf32> to vector<16x32xf32>
    %146 = arith.subf %133, %145 : vector<16x32xf32>
    %cst_55 = arith.constant 9.99999974E-6 : f32
    %147 = vector.broadcast %cst_55 : f32 to vector<16x1xf32>
    %148 = arith.addf %144, %147 : vector<16x1xf32>
    %149 = math.rsqrt %148 : vector<16x1xf32>
    %150 = vector.broadcast %149 : vector<16x1xf32> to vector<16x32xf32>
    %151 = arith.mulf %146, %150 : vector<16x32xf32>
    %c0_56 = arith.constant 0 : index
    %c0_57 = arith.constant 0 : index
    %152 = vector.load %arg11[%c0_56, %c0_57] : memref<1x32xf32, #tpu.memory_space<vmem>>, vector<1x32xf32>
    %153 = vector.broadcast %152 : vector<1x32xf32> to vector<16x32xf32>
    %154 = arith.mulf %151, %153 : vector<16x32xf32>
    %c0_58 = arith.constant 0 : index
    %c0_59 = arith.constant 0 : index
    %155 = vector.load %arg12[%c0_58, %c0_59] : memref<1x32xf32, #tpu.memory_space<vmem>>, vector<1x32xf32>
    %156 = vector.broadcast %155 : vector<1x32xf32> to vector<16x32xf32>
    %157 = arith.addf %154, %156 : vector<16x32xf32>
    %c0_60 = arith.constant 0 : index
    %c0_61 = arith.constant 0 : index
    %c0_62 = arith.constant 0 : index
    %158 = vector.load %arg13[%c0_60, %c0_61, %c0_62] : memref<1x16x32xf32, #tpu.memory_space<vmem>>, vector<1x16x32xf32>
    %159 = vector.shape_cast %158 : vector<1x16x32xf32> to vector<16x32xf32>
    %160 = vector.shape_cast %157 : vector<16x32xf32> to vector<1x16x32xf32>
    tpu.vector_store %arg13[%c0_60, %c0_61, %c0_62], %160 {strides = array<i32>} : memref<1x16x32xf32, #tpu.memory_space<vmem>>, vector<1x16x32xf32>,
    return
  }
  func.func @transform_0(%arg0: i32) -> (i32, i32, i32) {
    %c0_i32 = arith.constant 0 : i32
    %c0_i32_0 = arith.constant 0 : i32
    %c0_i32_1 = arith.constant 0 : i32
    return %arg0, %c0_i32, %c0_i32_0 : i32, i32, i32
  }
  func.func @transform_1(%arg0: i32) -> (i32, i32, i32) {
    %c0_i32 = arith.constant 0 : i32
    %c0_i32_0 = arith.constant 0 : i32
    %c0_i32_1 = arith.constant 0 : i32
    return %arg0, %c0_i32, %c0_i32_0 : i32, i32, i32
  }
  func.func @transform_2(%arg0: i32) -> (i32, i32) {
    %c0_i32 = arith.constant 0 : i32
    %c0_i32_0 = arith.constant 0 : i32
    %c0_i32_1 = arith.constant 0 : i32
    return %c0_i32, %c0_i32_0 : i32, i32
  }
  func.func @transform_3(%arg0: i32) -> (i32, i32) {
    %c0_i32 = arith.constant 0 : i32
    %c0_i32_0 = arith.constant 0 : i32
    %c0_i32_1 = arith.constant 0 : i32
    return %c0_i32, %c0_i32_0 : i32, i32
  }
  func.func @transform_4(%arg0: i32) -> (i32, i32) {
    %c0_i32 = arith.constant 0 : i32
    %c0_i32_0 = arith.constant 0 : i32
    %c0_i32_1 = arith.constant 0 : i32
    return %c0_i32, %c0_i32_0 : i32, i32
  }
  func.func @transform_5(%arg0: i32) -> (i32, i32) {
    %c0_i32 = arith.constant 0 : i32
    %c0_i32_0 = arith.constant 0 : i32
    %c0_i32_1 = arith.constant 0 : i32
    return %c0_i32, %c0_i32_0 : i32, i32
  }
  func.func @transform_6(%arg0: i32) -> (i32, i32) {
    %c0_i32 = arith.constant 0 : i32
    %c0_i32_0 = arith.constant 0 : i32
    %c0_i32_1 = arith.constant 0 : i32
    return %c0_i32, %c0_i32_0 : i32, i32
  }
  func.func @transform_7(%arg0: i32) -> (i32, i32) {
    %c0_i32 = arith.constant 0 : i32
    %c0_i32_0 = arith.constant 0 : i32
    %c0_i32_1 = arith.constant 0 : i32
    return %c0_i32, %c0_i32_0 : i32, i32
  }
  func.func @transform_8(%arg0: i32) -> (i32, i32) {
    %c0_i32 = arith.constant 0 : i32
    %c0_i32_0 = arith.constant 0 : i32
    %c0_i32_1 = arith.constant 0 : i32
    return %c0_i32, %c0_i32_0 : i32, i32
  }
  func.func @transform_9(%arg0: i32) -> (i32, i32) {
    %c0_i32 = arith.constant 0 : i32
    %c0_i32_0 = arith.constant 0 : i32
    %c0_i32_1 = arith.constant 0 : i32
    return %c0_i32, %c0_i32_0 : i32, i32
  }
  func.func @transform_10(%arg0: i32) -> (i32, i32) {
    %c0_i32 = arith.constant 0 : i32
    %c0_i32_0 = arith.constant 0 : i32
    %c0_i32_1 = arith.constant 0 : i32
    return %c0_i32, %c0_i32_0 : i32, i32
  }
  func.func @transform_11(%arg0: i32) -> (i32, i32) {
    %c0_i32 = arith.constant 0 : i32
    %c0_i32_0 = arith.constant 0 : i32
    %c0_i32_1 = arith.constant 0 : i32
    return %c0_i32, %c0_i32_0 : i32, i32
  }
  func.func @transform_12(%arg0: i32) -> (i32, i32, i32) {
    %c0_i32 = arith.constant 0 : i32
    %c0_i32_0 = arith.constant 0 : i32
    %c0_i32_1 = arith.constant 0 : i32
    return %arg0, %c0_i32, %c0_i32_0 : i32, i32, i32
  }
}

module attributes {stable_mosaic.version = 11 : i64} {
  func.func @_off_aw_kernel(%arg0: i32, %arg1: memref<32x32xf32, #tpu.memory_space<vmem>>, %arg2: memref<32x32xf32, #tpu.memory_space<vmem>>, %arg3: memref<32x32xf32, #tpu.memory_space<vmem>>, %arg4: memref<1x32xf32, #tpu.memory_space<vmem>>, %arg5: memref<32x16xf32, #tpu.memory_space<vmem>>, %arg6: memref<1x16xf32, #tpu.memory_space<vmem>>, %arg7: memref<32x32xf32, #tpu.memory_space<vmem>>, %arg8: memref<32x16xf32, #tpu.memory_space<vmem>>) attributes {dimension_semantics = [#tpu.dimension_semantics<parallel>], iteration_bounds = array<i64: 1>, scalar_prefetch = 0 : i64, scratch_operands = 0 : i64, tpu.core_type = #tpu.core_type<tc>, window_params = [{transform_indices = @transform_0, window_bounds = array<i64: 32, 32>}, {transform_indices = @transform_1, window_bounds = array<i64: 32, 32>}, {pipeline_mode = #tpu.pipeline_mode<synchronous>, transform_indices = @transform_2, window_bounds = array<i64: 32, 32>}, {pipeline_mode = #tpu.pipeline_mode<synchronous>, transform_indices = @transform_3, window_bounds = array<i64: 1, 32>}, {pipeline_mode = #tpu.pipeline_mode<synchronous>, transform_indices = @transform_4, window_bounds = array<i64: 32, 16>}, {pipeline_mode = #tpu.pipeline_mode<synchronous>, transform_indices = @transform_5, window_bounds = array<i64: 1, 16>}, {transform_indices = @transform_6, window_bounds = array<i64: 32, 32>}, {transform_indices = @transform_7, window_bounds = array<i64: 32, 16>}]} {
    %c0 = arith.constant 0 : index
    %c0_0 = arith.constant 0 : index
    %0 = vector.load %arg1[%c0, %c0_0] : memref<32x32xf32, #tpu.memory_space<vmem>>, vector<32x32xf32>
    %c0_1 = arith.constant 0 : index
    %c0_2 = arith.constant 0 : index
    %1 = vector.load %arg2[%c0_1, %c0_2] : memref<32x32xf32, #tpu.memory_space<vmem>>, vector<32x32xf32>
    %2 = arith.addf %0, %1 : vector<32x32xf32>
    %3 = arith.truncf %2 : vector<32x32xf32> to vector<32x32xbf16>
    %c0_3 = arith.constant 0 : index
    %c0_4 = arith.constant 0 : index
    %4 = vector.load %arg3[%c0_3, %c0_4] : memref<32x32xf32, #tpu.memory_space<vmem>>, vector<32x32xf32>
    %5 = arith.truncf %4 : vector<32x32xf32> to vector<32x32xbf16>
    %cst = arith.constant dense<0.000000e+00> : vector<32x32xf32>
    %6 = tpu.matmul %3, %5, %cst {dimension_numbers = #tpu.dot_dimension_numbers<[1], [0], [0], [1], [0, 0, 1, 1], [], []>} : vector<32x32xbf16>, vector<32x32xbf16>, vector<32x32xf32> -> vector<32x32xf32>
    %c0_5 = arith.constant 0 : index
    %c0_6 = arith.constant 0 : index
    %7 = vector.load %arg4[%c0_5, %c0_6] : memref<1x32xf32, #tpu.memory_space<vmem>>, vector<1x32xf32>
    %8 = vector.broadcast %7 : vector<1x32xf32> to vector<32x32xf32>
    %9 = arith.addf %6, %8 : vector<32x32xf32>
    %c0_7 = arith.constant 0 : index
    %c0_8 = arith.constant 0 : index
    %10 = vector.load %arg5[%c0_7, %c0_8] : memref<32x16xf32, #tpu.memory_space<vmem>>, vector<32x16xf32>
    %11 = arith.truncf %10 : vector<32x16xf32> to vector<32x16xbf16>
    %cst_9 = arith.constant dense<0.000000e+00> : vector<32x16xf32>
    %12 = tpu.matmul %3, %11, %cst_9 {dimension_numbers = #tpu.dot_dimension_numbers<[1], [0], [0], [1], [0, 0, 1, 1], [], []>} : vector<32x32xbf16>, vector<32x16xbf16>, vector<32x16xf32> -> vector<32x16xf32>
    %c0_10 = arith.constant 0 : index
    %c0_11 = arith.constant 0 : index
    %13 = vector.load %arg6[%c0_10, %c0_11] : memref<1x16xf32, #tpu.memory_space<vmem>>, vector<1x16xf32>
    %14 = vector.broadcast %13 : vector<1x16xf32> to vector<32x16xf32>
    %15 = arith.addf %12, %14 : vector<32x16xf32>
    %c0_12 = arith.constant 0 : index
    %c0_13 = arith.constant 0 : index
    %16 = vector.load %arg7[%c0_12, %c0_13] : memref<32x32xf32, #tpu.memory_space<vmem>>, vector<32x32xf32>
    tpu.vector_store %arg7[%c0_12, %c0_13], %9 {strides = array<i32>} : memref<32x32xf32, #tpu.memory_space<vmem>>, vector<32x32xf32>,
    %c0_14 = arith.constant 0 : index
    %c0_15 = arith.constant 0 : index
    %17 = vector.load %arg8[%c0_14, %c0_15] : memref<32x16xf32, #tpu.memory_space<vmem>>, vector<32x16xf32>
    tpu.vector_store %arg8[%c0_14, %c0_15], %15 {strides = array<i32>} : memref<32x16xf32, #tpu.memory_space<vmem>>, vector<32x16xf32>,
    return
  }
  func.func @transform_0(%arg0: i32) -> (i32, i32) {
    %c0_i32 = arith.constant 0 : i32
    %c0_i32_0 = arith.constant 0 : i32
    return %arg0, %c0_i32 : i32, i32
  }
  func.func @transform_1(%arg0: i32) -> (i32, i32) {
    %c0_i32 = arith.constant 0 : i32
    %c0_i32_0 = arith.constant 0 : i32
    return %arg0, %c0_i32 : i32, i32
  }
  func.func @transform_2(%arg0: i32) -> (i32, i32) {
    %c0_i32 = arith.constant 0 : i32
    %c0_i32_0 = arith.constant 0 : i32
    %c0_i32_1 = arith.constant 0 : i32
    return %c0_i32, %c0_i32_0 : i32, i32
  }
  func.func @transform_3(%arg0: i32) -> (i32, i32) {
    %c0_i32 = arith.constant 0 : i32
    %c0_i32_0 = arith.constant 0 : i32
    %c0_i32_1 = arith.constant 0 : i32
    return %c0_i32, %c0_i32_0 : i32, i32
  }
  func.func @transform_4(%arg0: i32) -> (i32, i32) {
    %c0_i32 = arith.constant 0 : i32
    %c0_i32_0 = arith.constant 0 : i32
    %c0_i32_1 = arith.constant 0 : i32
    return %c0_i32, %c0_i32_0 : i32, i32
  }
  func.func @transform_5(%arg0: i32) -> (i32, i32) {
    %c0_i32 = arith.constant 0 : i32
    %c0_i32_0 = arith.constant 0 : i32
    %c0_i32_1 = arith.constant 0 : i32
    return %c0_i32, %c0_i32_0 : i32, i32
  }
  func.func @transform_6(%arg0: i32) -> (i32, i32) {
    %c0_i32 = arith.constant 0 : i32
    %c0_i32_0 = arith.constant 0 : i32
    return %arg0, %c0_i32 : i32, i32
  }
  func.func @transform_7(%arg0: i32) -> (i32, i32) {
    %c0_i32 = arith.constant 0 : i32
    %c0_i32_0 = arith.constant 0 : i32
    return %arg0, %c0_i32 : i32, i32
  }
}

module attributes {stable_mosaic.version = 11 : i64} {
  func.func @_linear_kernel(%arg0: i32, %arg1: memref<160x32xf32, #tpu.memory_space<vmem>>, %arg2: memref<32x32xf32, #tpu.memory_space<vmem>>, %arg3: memref<1x32xf32, #tpu.memory_space<vmem>>, %arg4: memref<160x32xf32, #tpu.memory_space<vmem>>) attributes {dimension_semantics = [#tpu.dimension_semantics<parallel>], iteration_bounds = array<i64: 1>, scalar_prefetch = 0 : i64, scratch_operands = 0 : i64, tpu.core_type = #tpu.core_type<tc>, window_params = [{transform_indices = @transform_0, window_bounds = array<i64: 160, 32>}, {pipeline_mode = #tpu.pipeline_mode<synchronous>, transform_indices = @transform_1, window_bounds = array<i64: 32, 32>}, {pipeline_mode = #tpu.pipeline_mode<synchronous>, transform_indices = @transform_2, window_bounds = array<i64: 1, 32>}, {transform_indices = @transform_3, window_bounds = array<i64: 160, 32>}]} {
    %c0 = arith.constant 0 : index
    %c0_0 = arith.constant 0 : index
    %0 = vector.load %arg1[%c0, %c0_0] : memref<160x32xf32, #tpu.memory_space<vmem>>, vector<160x32xf32>
    %1 = arith.truncf %0 : vector<160x32xf32> to vector<160x32xbf16>
    %c0_1 = arith.constant 0 : index
    %c0_2 = arith.constant 0 : index
    %2 = vector.load %arg2[%c0_1, %c0_2] : memref<32x32xf32, #tpu.memory_space<vmem>>, vector<32x32xf32>
    %3 = arith.truncf %2 : vector<32x32xf32> to vector<32x32xbf16>
    %cst = arith.constant dense<0.000000e+00> : vector<160x32xf32>
    %4 = tpu.matmul %1, %3, %cst {dimension_numbers = #tpu.dot_dimension_numbers<[1], [0], [0], [1], [0, 0, 1, 1], [], []>} : vector<160x32xbf16>, vector<32x32xbf16>, vector<160x32xf32> -> vector<160x32xf32>
    %c0_3 = arith.constant 0 : index
    %c0_4 = arith.constant 0 : index
    %5 = vector.load %arg3[%c0_3, %c0_4] : memref<1x32xf32, #tpu.memory_space<vmem>>, vector<1x32xf32>
    %6 = vector.broadcast %5 : vector<1x32xf32> to vector<160x32xf32>
    %7 = arith.addf %4, %6 : vector<160x32xf32>
    %c0_5 = arith.constant 0 : index
    %c0_6 = arith.constant 0 : index
    %8 = vector.load %arg4[%c0_5, %c0_6] : memref<160x32xf32, #tpu.memory_space<vmem>>, vector<160x32xf32>
    tpu.vector_store %arg4[%c0_5, %c0_6], %7 {strides = array<i32>} : memref<160x32xf32, #tpu.memory_space<vmem>>, vector<160x32xf32>,
    return
  }
  func.func @transform_0(%arg0: i32) -> (i32, i32) {
    %c0_i32 = arith.constant 0 : i32
    %c0_i32_0 = arith.constant 0 : i32
    return %arg0, %c0_i32 : i32, i32
  }
  func.func @transform_1(%arg0: i32) -> (i32, i32) {
    %c0_i32 = arith.constant 0 : i32
    %c0_i32_0 = arith.constant 0 : i32
    %c0_i32_1 = arith.constant 0 : i32
    return %c0_i32, %c0_i32_0 : i32, i32
  }
  func.func @transform_2(%arg0: i32) -> (i32, i32) {
    %c0_i32 = arith.constant 0 : i32
    %c0_i32_0 = arith.constant 0 : i32
    %c0_i32_1 = arith.constant 0 : i32
    return %c0_i32, %c0_i32_0 : i32, i32
  }
  func.func @transform_3(%arg0: i32) -> (i32, i32) {
    %c0_i32 = arith.constant 0 : i32
    %c0_i32_0 = arith.constant 0 : i32
    return %arg0, %c0_i32 : i32, i32
  }
}

module attributes {stable_mosaic.version = 11 : i64} {
  func.func @_proj_add_ln_kernel(%arg0: i32, %arg1: memref<32x32xf32, #tpu.memory_space<vmem>>, %arg2: memref<32x32xf32, #tpu.memory_space<vmem>>, %arg3: memref<32x32xf32, #tpu.memory_space<vmem>>, %arg4: memref<1x32xf32, #tpu.memory_space<vmem>>, %arg5: memref<1x32xf32, #tpu.memory_space<vmem>>, %arg6: memref<1x32xf32, #tpu.memory_space<vmem>>, %arg7: memref<32x32xf32, #tpu.memory_space<vmem>>) attributes {dimension_semantics = [#tpu.dimension_semantics<parallel>], iteration_bounds = array<i64: 1>, scalar_prefetch = 0 : i64, scratch_operands = 0 : i64, tpu.core_type = #tpu.core_type<tc>, window_params = [{transform_indices = @transform_0, window_bounds = array<i64: 32, 32>}, {transform_indices = @transform_1, window_bounds = array<i64: 32, 32>}, {pipeline_mode = #tpu.pipeline_mode<synchronous>, transform_indices = @transform_2, window_bounds = array<i64: 32, 32>}, {pipeline_mode = #tpu.pipeline_mode<synchronous>, transform_indices = @transform_3, window_bounds = array<i64: 1, 32>}, {pipeline_mode = #tpu.pipeline_mode<synchronous>, transform_indices = @transform_4, window_bounds = array<i64: 1, 32>}, {pipeline_mode = #tpu.pipeline_mode<synchronous>, transform_indices = @transform_5, window_bounds = array<i64: 1, 32>}, {transform_indices = @transform_6, window_bounds = array<i64: 32, 32>}]} {
    %c0 = arith.constant 0 : index
    %c0_0 = arith.constant 0 : index
    %0 = vector.load %arg1[%c0, %c0_0] : memref<32x32xf32, #tpu.memory_space<vmem>>, vector<32x32xf32>
    %1 = arith.truncf %0 : vector<32x32xf32> to vector<32x32xbf16>
    %c0_1 = arith.constant 0 : index
    %c0_2 = arith.constant 0 : index
    %2 = vector.load %arg3[%c0_1, %c0_2] : memref<32x32xf32, #tpu.memory_space<vmem>>, vector<32x32xf32>
    %3 = arith.truncf %2 : vector<32x32xf32> to vector<32x32xbf16>
    %cst = arith.constant dense<0.000000e+00> : vector<32x32xf32>
    %4 = tpu.matmul %1, %3, %cst {dimension_numbers = #tpu.dot_dimension_numbers<[1], [0], [0], [1], [0, 0, 1, 1], [], []>} : vector<32x32xbf16>, vector<32x32xbf16>, vector<32x32xf32> -> vector<32x32xf32>
    %c0_3 = arith.constant 0 : index
    %c0_4 = arith.constant 0 : index
    %5 = vector.load %arg4[%c0_3, %c0_4] : memref<1x32xf32, #tpu.memory_space<vmem>>, vector<1x32xf32>
    %6 = vector.broadcast %5 : vector<1x32xf32> to vector<32x32xf32>
    %7 = arith.addf %4, %6 : vector<32x32xf32>
    %c0_5 = arith.constant 0 : index
    %c0_6 = arith.constant 0 : index
    %8 = vector.load %arg2[%c0_5, %c0_6] : memref<32x32xf32, #tpu.memory_space<vmem>>, vector<32x32xf32>
    %9 = arith.addf %8, %7 : vector<32x32xf32>
    %cst_7 = arith.constant dense<0.000000e+00> : vector<32xf32>
    %10 = vector.multi_reduction <add>, %9, %cst_7 [1] : vector<32x32xf32> to vector<32xf32>
    %11 = vector.shape_cast %10 : vector<32xf32> to vector<32x1xf32>
    %cst_8 = arith.constant 3.200000e+01 : f32
    %12 = vector.broadcast %cst_8 : f32 to vector<32x1xf32>
    %13 = arith.divf %11, %12 : vector<32x1xf32>
    %14 = vector.broadcast %13 : vector<32x1xf32> to vector<32x32xf32>
    %15 = arith.subf %9, %14 : vector<32x32xf32>
    %16 = arith.mulf %15, %15 : vector<32x32xf32>
    %cst_9 = arith.constant dense<0.000000e+00> : vector<32xf32>
    %17 = vector.multi_reduction <add>, %16, %cst_9 [1] : vector<32x32xf32> to vector<32xf32>
    %18 = vector.shape_cast %17 : vector<32xf32> to vector<32x1xf32>
    %cst_10 = arith.constant 3.200000e+01 : f32
    %19 = vector.broadcast %cst_10 : f32 to vector<32x1xf32>
    %20 = arith.divf %18, %19 : vector<32x1xf32>
    %21 = vector.broadcast %13 : vector<32x1xf32> to vector<32x32xf32>
    %22 = arith.subf %9, %21 : vector<32x32xf32>
    %cst_11 = arith.constant 9.99999974E-6 : f32
    %23 = vector.broadcast %cst_11 : f32 to vector<32x1xf32>
    %24 = arith.addf %20, %23 : vector<32x1xf32>
    %25 = math.rsqrt %24 : vector<32x1xf32>
    %26 = vector.broadcast %25 : vector<32x1xf32> to vector<32x32xf32>
    %27 = arith.mulf %22, %26 : vector<32x32xf32>
    %c0_12 = arith.constant 0 : index
    %c0_13 = arith.constant 0 : index
    %28 = vector.load %arg5[%c0_12, %c0_13] : memref<1x32xf32, #tpu.memory_space<vmem>>, vector<1x32xf32>
    %29 = vector.broadcast %28 : vector<1x32xf32> to vector<32x32xf32>
    %30 = arith.mulf %27, %29 : vector<32x32xf32>
    %c0_14 = arith.constant 0 : index
    %c0_15 = arith.constant 0 : index
    %31 = vector.load %arg6[%c0_14, %c0_15] : memref<1x32xf32, #tpu.memory_space<vmem>>, vector<1x32xf32>
    %32 = vector.broadcast %31 : vector<1x32xf32> to vector<32x32xf32>
    %33 = arith.addf %30, %32 : vector<32x32xf32>
    %c0_16 = arith.constant 0 : index
    %c0_17 = arith.constant 0 : index
    %34 = vector.load %arg7[%c0_16, %c0_17] : memref<32x32xf32, #tpu.memory_space<vmem>>, vector<32x32xf32>
    tpu.vector_store %arg7[%c0_16, %c0_17], %33 {strides = array<i32>} : memref<32x32xf32, #tpu.memory_space<vmem>>, vector<32x32xf32>,
    return
  }
  func.func @transform_0(%arg0: i32) -> (i32, i32) {
    %c0_i32 = arith.constant 0 : i32
    %c0_i32_0 = arith.constant 0 : i32
    return %arg0, %c0_i32 : i32, i32
  }
  func.func @transform_1(%arg0: i32) -> (i32, i32) {
    %c0_i32 = arith.constant 0 : i32
    %c0_i32_0 = arith.constant 0 : i32
    return %arg0, %c0_i32 : i32, i32
  }
  func.func @transform_2(%arg0: i32) -> (i32, i32) {
    %c0_i32 = arith.constant 0 : i32
    %c0_i32_0 = arith.constant 0 : i32
    %c0_i32_1 = arith.constant 0 : i32
    return %c0_i32, %c0_i32_0 : i32, i32
  }
  func.func @transform_3(%arg0: i32) -> (i32, i32) {
    %c0_i32 = arith.constant 0 : i32
    %c0_i32_0 = arith.constant 0 : i32
    %c0_i32_1 = arith.constant 0 : i32
    return %c0_i32, %c0_i32_0 : i32, i32
  }
  func.func @transform_4(%arg0: i32) -> (i32, i32) {
    %c0_i32 = arith.constant 0 : i32
    %c0_i32_0 = arith.constant 0 : i32
    %c0_i32_1 = arith.constant 0 : i32
    return %c0_i32, %c0_i32_0 : i32, i32
  }
  func.func @transform_5(%arg0: i32) -> (i32, i32) {
    %c0_i32 = arith.constant 0 : i32
    %c0_i32_0 = arith.constant 0 : i32
    %c0_i32_1 = arith.constant 0 : i32
    return %c0_i32, %c0_i32_0 : i32, i32
  }
  func.func @transform_6(%arg0: i32) -> (i32, i32) {
    %c0_i32 = arith.constant 0 : i32
    %c0_i32_0 = arith.constant 0 : i32
    return %arg0, %c0_i32 : i32, i32
  }
}

module attributes {stable_mosaic.version = 11 : i64} {
  func.func @_ffn_ln_kernel(%arg0: i32, %arg1: memref<32x32xf32, #tpu.memory_space<vmem>>, %arg2: memref<32x64xf32, #tpu.memory_space<vmem>>, %arg3: memref<1x64xf32, #tpu.memory_space<vmem>>, %arg4: memref<64x32xf32, #tpu.memory_space<vmem>>, %arg5: memref<1x32xf32, #tpu.memory_space<vmem>>, %arg6: memref<1x32xf32, #tpu.memory_space<vmem>>, %arg7: memref<1x32xf32, #tpu.memory_space<vmem>>, %arg8: memref<32x32xf32, #tpu.memory_space<vmem>>) attributes {dimension_semantics = [#tpu.dimension_semantics<parallel>], iteration_bounds = array<i64: 1>, scalar_prefetch = 0 : i64, scratch_operands = 0 : i64, tpu.core_type = #tpu.core_type<tc>, window_params = [{transform_indices = @transform_0, window_bounds = array<i64: 32, 32>}, {pipeline_mode = #tpu.pipeline_mode<synchronous>, transform_indices = @transform_1, window_bounds = array<i64: 32, 64>}, {pipeline_mode = #tpu.pipeline_mode<synchronous>, transform_indices = @transform_2, window_bounds = array<i64: 1, 64>}, {pipeline_mode = #tpu.pipeline_mode<synchronous>, transform_indices = @transform_3, window_bounds = array<i64: 64, 32>}, {pipeline_mode = #tpu.pipeline_mode<synchronous>, transform_indices = @transform_4, window_bounds = array<i64: 1, 32>}, {pipeline_mode = #tpu.pipeline_mode<synchronous>, transform_indices = @transform_5, window_bounds = array<i64: 1, 32>}, {pipeline_mode = #tpu.pipeline_mode<synchronous>, transform_indices = @transform_6, window_bounds = array<i64: 1, 32>}, {transform_indices = @transform_7, window_bounds = array<i64: 32, 32>}]} {
    %c0 = arith.constant 0 : index
    %c0_0 = arith.constant 0 : index
    %0 = vector.load %arg1[%c0, %c0_0] : memref<32x32xf32, #tpu.memory_space<vmem>>, vector<32x32xf32>
    %1 = arith.truncf %0 : vector<32x32xf32> to vector<32x32xbf16>
    %c0_1 = arith.constant 0 : index
    %c0_2 = arith.constant 0 : index
    %2 = vector.load %arg2[%c0_1, %c0_2] : memref<32x64xf32, #tpu.memory_space<vmem>>, vector<32x64xf32>
    %3 = arith.truncf %2 : vector<32x64xf32> to vector<32x64xbf16>
    %cst = arith.constant dense<0.000000e+00> : vector<32x64xf32>
    %4 = tpu.matmul %1, %3, %cst {dimension_numbers = #tpu.dot_dimension_numbers<[1], [0], [0], [1], [0, 0, 1, 1], [], []>} : vector<32x32xbf16>, vector<32x64xbf16>, vector<32x64xf32> -> vector<32x64xf32>
    %c0_3 = arith.constant 0 : index
    %c0_4 = arith.constant 0 : index
    %5 = vector.load %arg3[%c0_3, %c0_4] : memref<1x64xf32, #tpu.memory_space<vmem>>, vector<1x64xf32>
    %6 = vector.broadcast %5 : vector<1x64xf32> to vector<32x64xf32>
    %7 = arith.addf %4, %6 : vector<32x64xf32>
    %cst_5 = arith.constant 0.000000e+00 : f32
    %8 = vector.broadcast %cst_5 : f32 to vector<32x64xf32>
    %9 = arith.maximumf %7, %8 : vector<32x64xf32>
    %10 = arith.truncf %9 : vector<32x64xf32> to vector<32x64xbf16>
    %c0_6 = arith.constant 0 : index
    %c0_7 = arith.constant 0 : index
    %11 = vector.load %arg4[%c0_6, %c0_7] : memref<64x32xf32, #tpu.memory_space<vmem>>, vector<64x32xf32>
    %12 = arith.truncf %11 : vector<64x32xf32> to vector<64x32xbf16>
    %cst_8 = arith.constant dense<0.000000e+00> : vector<32x32xf32>
    %13 = tpu.matmul %10, %12, %cst_8 {dimension_numbers = #tpu.dot_dimension_numbers<[1], [0], [0], [1], [0, 0, 1, 1], [], []>} : vector<32x64xbf16>, vector<64x32xbf16>, vector<32x32xf32> -> vector<32x32xf32>
    %c0_9 = arith.constant 0 : index
    %c0_10 = arith.constant 0 : index
    %14 = vector.load %arg5[%c0_9, %c0_10] : memref<1x32xf32, #tpu.memory_space<vmem>>, vector<1x32xf32>
    %15 = vector.broadcast %14 : vector<1x32xf32> to vector<32x32xf32>
    %16 = arith.addf %13, %15 : vector<32x32xf32>
    %17 = arith.addf %0, %16 : vector<32x32xf32>
    %cst_11 = arith.constant dense<0.000000e+00> : vector<32xf32>
    %18 = vector.multi_reduction <add>, %17, %cst_11 [1] : vector<32x32xf32> to vector<32xf32>
    %19 = vector.shape_cast %18 : vector<32xf32> to vector<32x1xf32>
    %cst_12 = arith.constant 3.200000e+01 : f32
    %20 = vector.broadcast %cst_12 : f32 to vector<32x1xf32>
    %21 = arith.divf %19, %20 : vector<32x1xf32>
    %22 = vector.broadcast %21 : vector<32x1xf32> to vector<32x32xf32>
    %23 = arith.subf %17, %22 : vector<32x32xf32>
    %24 = arith.mulf %23, %23 : vector<32x32xf32>
    %cst_13 = arith.constant dense<0.000000e+00> : vector<32xf32>
    %25 = vector.multi_reduction <add>, %24, %cst_13 [1] : vector<32x32xf32> to vector<32xf32>
    %26 = vector.shape_cast %25 : vector<32xf32> to vector<32x1xf32>
    %cst_14 = arith.constant 3.200000e+01 : f32
    %27 = vector.broadcast %cst_14 : f32 to vector<32x1xf32>
    %28 = arith.divf %26, %27 : vector<32x1xf32>
    %29 = vector.broadcast %21 : vector<32x1xf32> to vector<32x32xf32>
    %30 = arith.subf %17, %29 : vector<32x32xf32>
    %cst_15 = arith.constant 9.99999974E-6 : f32
    %31 = vector.broadcast %cst_15 : f32 to vector<32x1xf32>
    %32 = arith.addf %28, %31 : vector<32x1xf32>
    %33 = math.rsqrt %32 : vector<32x1xf32>
    %34 = vector.broadcast %33 : vector<32x1xf32> to vector<32x32xf32>
    %35 = arith.mulf %30, %34 : vector<32x32xf32>
    %c0_16 = arith.constant 0 : index
    %c0_17 = arith.constant 0 : index
    %36 = vector.load %arg6[%c0_16, %c0_17] : memref<1x32xf32, #tpu.memory_space<vmem>>, vector<1x32xf32>
    %37 = vector.broadcast %36 : vector<1x32xf32> to vector<32x32xf32>
    %38 = arith.mulf %35, %37 : vector<32x32xf32>
    %c0_18 = arith.constant 0 : index
    %c0_19 = arith.constant 0 : index
    %39 = vector.load %arg7[%c0_18, %c0_19] : memref<1x32xf32, #tpu.memory_space<vmem>>, vector<1x32xf32>
    %40 = vector.broadcast %39 : vector<1x32xf32> to vector<32x32xf32>
    %41 = arith.addf %38, %40 : vector<32x32xf32>
    %c0_20 = arith.constant 0 : index
    %c0_21 = arith.constant 0 : index
    %42 = vector.load %arg8[%c0_20, %c0_21] : memref<32x32xf32, #tpu.memory_space<vmem>>, vector<32x32xf32>
    tpu.vector_store %arg8[%c0_20, %c0_21], %41 {strides = array<i32>} : memref<32x32xf32, #tpu.memory_space<vmem>>, vector<32x32xf32>,
    return
  }
  func.func @transform_0(%arg0: i32) -> (i32, i32) {
    %c0_i32 = arith.constant 0 : i32
    %c0_i32_0 = arith.constant 0 : i32
    return %arg0, %c0_i32 : i32, i32
  }
  func.func @transform_1(%arg0: i32) -> (i32, i32) {
    %c0_i32 = arith.constant 0 : i32
    %c0_i32_0 = arith.constant 0 : i32
    %c0_i32_1 = arith.constant 0 : i32
    return %c0_i32, %c0_i32_0 : i32, i32
  }
  func.func @transform_2(%arg0: i32) -> (i32, i32) {
    %c0_i32 = arith.constant 0 : i32
    %c0_i32_0 = arith.constant 0 : i32
    %c0_i32_1 = arith.constant 0 : i32
    return %c0_i32, %c0_i32_0 : i32, i32
  }
  func.func @transform_3(%arg0: i32) -> (i32, i32) {
    %c0_i32 = arith.constant 0 : i32
    %c0_i32_0 = arith.constant 0 : i32
    %c0_i32_1 = arith.constant 0 : i32
    return %c0_i32, %c0_i32_0 : i32, i32
  }
  func.func @transform_4(%arg0: i32) -> (i32, i32) {
    %c0_i32 = arith.constant 0 : i32
    %c0_i32_0 = arith.constant 0 : i32
    %c0_i32_1 = arith.constant 0 : i32
    return %c0_i32, %c0_i32_0 : i32, i32
  }
  func.func @transform_5(%arg0: i32) -> (i32, i32) {
    %c0_i32 = arith.constant 0 : i32
    %c0_i32_0 = arith.constant 0 : i32
    %c0_i32_1 = arith.constant 0 : i32
    return %c0_i32, %c0_i32_0 : i32, i32
  }
  func.func @transform_6(%arg0: i32) -> (i32, i32) {
    %c0_i32 = arith.constant 0 : i32
    %c0_i32_0 = arith.constant 0 : i32
    %c0_i32_1 = arith.constant 0 : i32
    return %c0_i32, %c0_i32_0 : i32, i32
  }
  func.func @transform_7(%arg0: i32) -> (i32, i32) {
    %c0_i32 = arith.constant 0 : i32
    %c0_i32_0 = arith.constant 0 : i32
    return %arg0, %c0_i32 : i32, i32
  }
}

module attributes {stable_mosaic.version = 11 : i64} {
  func.func @_self_attn_kernel(%arg0: i32, %arg1: memref<1x16x32xf32, #tpu.memory_space<vmem>>, %arg2: memref<1x16x32xf32, #tpu.memory_space<vmem>>, %arg3: memref<32x32xf32, #tpu.memory_space<vmem>>, %arg4: memref<32x32xf32, #tpu.memory_space<vmem>>, %arg5: memref<32x32xf32, #tpu.memory_space<vmem>>, %arg6: memref<1x32xf32, #tpu.memory_space<vmem>>, %arg7: memref<1x32xf32, #tpu.memory_space<vmem>>, %arg8: memref<1x32xf32, #tpu.memory_space<vmem>>, %arg9: memref<32x32xf32, #tpu.memory_space<vmem>>, %arg10: memref<1x32xf32, #tpu.memory_space<vmem>>, %arg11: memref<1x32xf32, #tpu.memory_space<vmem>>, %arg12: memref<1x32xf32, #tpu.memory_space<vmem>>, %arg13: memref<1x16x32xf32, #tpu.memory_space<vmem>>) attributes {dimension_semantics = [#tpu.dimension_semantics<parallel>], iteration_bounds = array<i64: 2>, scalar_prefetch = 0 : i64, scratch_operands = 0 : i64, tpu.core_type = #tpu.core_type<tc>, window_params = [{transform_indices = @transform_0, window_bounds = array<i64: 1, 16, 32>}, {transform_indices = @transform_1, window_bounds = array<i64: 1, 16, 32>}, {pipeline_mode = #tpu.pipeline_mode<synchronous>, transform_indices = @transform_2, window_bounds = array<i64: 32, 32>}, {pipeline_mode = #tpu.pipeline_mode<synchronous>, transform_indices = @transform_3, window_bounds = array<i64: 32, 32>}, {pipeline_mode = #tpu.pipeline_mode<synchronous>, transform_indices = @transform_4, window_bounds = array<i64: 32, 32>}, {pipeline_mode = #tpu.pipeline_mode<synchronous>, transform_indices = @transform_5, window_bounds = array<i64: 1, 32>}, {pipeline_mode = #tpu.pipeline_mode<synchronous>, transform_indices = @transform_6, window_bounds = array<i64: 1, 32>}, {pipeline_mode = #tpu.pipeline_mode<synchronous>, transform_indices = @transform_7, window_bounds = array<i64: 1, 32>}, {pipeline_mode = #tpu.pipeline_mode<synchronous>, transform_indices = @transform_8, window_bounds = array<i64: 32, 32>}, {pipeline_mode = #tpu.pipeline_mode<synchronous>, transform_indices = @transform_9, window_bounds = array<i64: 1, 32>}, {pipeline_mode = #tpu.pipeline_mode<synchronous>, transform_indices = @transform_10, window_bounds = array<i64: 1, 32>}, {pipeline_mode = #tpu.pipeline_mode<synchronous>, transform_indices = @transform_11, window_bounds = array<i64: 1, 32>}, {transform_indices = @transform_12, window_bounds = array<i64: 1, 16, 32>}]} {
    %c0 = arith.constant 0 : index
    %c0_0 = arith.constant 0 : index
    %c0_1 = arith.constant 0 : index
    %0 = vector.load %arg1[%c0, %c0_0, %c0_1] : memref<1x16x32xf32, #tpu.memory_space<vmem>>, vector<1x16x32xf32>
    %1 = vector.shape_cast %0 : vector<1x16x32xf32> to vector<16x32xf32>
    %c0_2 = arith.constant 0 : index
    %c0_3 = arith.constant 0 : index
    %c0_4 = arith.constant 0 : index
    %2 = vector.load %arg2[%c0_2, %c0_3, %c0_4] : memref<1x16x32xf32, #tpu.memory_space<vmem>>, vector<1x16x32xf32>
    %3 = vector.shape_cast %2 : vector<1x16x32xf32> to vector<16x32xf32>
    %4 = arith.addf %1, %3 : vector<16x32xf32>
    %5 = arith.truncf %4 : vector<16x32xf32> to vector<16x32xbf16>
    %c0_5 = arith.constant 0 : index
    %c0_6 = arith.constant 0 : index
    %6 = vector.load %arg3[%c0_5, %c0_6] : memref<32x32xf32, #tpu.memory_space<vmem>>, vector<32x32xf32>
    %7 = arith.truncf %6 : vector<32x32xf32> to vector<32x32xbf16>
    %cst = arith.constant dense<0.000000e+00> : vector<16x32xf32>
    %8 = tpu.matmul %5, %7, %cst {dimension_numbers = #tpu.dot_dimension_numbers<[1], [0], [0], [1], [0, 0, 1, 1], [], []>} : vector<16x32xbf16>, vector<32x32xbf16>, vector<16x32xf32> -> vector<16x32xf32>
    %c0_7 = arith.constant 0 : index
    %c0_8 = arith.constant 0 : index
    %9 = vector.load %arg6[%c0_7, %c0_8] : memref<1x32xf32, #tpu.memory_space<vmem>>, vector<1x32xf32>
    %10 = vector.broadcast %9 : vector<1x32xf32> to vector<16x32xf32>
    %11 = arith.addf %8, %10 : vector<16x32xf32>
    %c0_9 = arith.constant 0 : index
    %c0_10 = arith.constant 0 : index
    %12 = vector.load %arg4[%c0_9, %c0_10] : memref<32x32xf32, #tpu.memory_space<vmem>>, vector<32x32xf32>
    %13 = arith.truncf %12 : vector<32x32xf32> to vector<32x32xbf16>
    %cst_11 = arith.constant dense<0.000000e+00> : vector<16x32xf32>
    %14 = tpu.matmul %5, %13, %cst_11 {dimension_numbers = #tpu.dot_dimension_numbers<[1], [0], [0], [1], [0, 0, 1, 1], [], []>} : vector<16x32xbf16>, vector<32x32xbf16>, vector<16x32xf32> -> vector<16x32xf32>
    %c0_12 = arith.constant 0 : index
    %c0_13 = arith.constant 0 : index
    %15 = vector.load %arg7[%c0_12, %c0_13] : memref<1x32xf32, #tpu.memory_space<vmem>>, vector<1x32xf32>
    %16 = vector.broadcast %15 : vector<1x32xf32> to vector<16x32xf32>
    %17 = arith.addf %14, %16 : vector<16x32xf32>
    %18 = arith.truncf %1 : vector<16x32xf32> to vector<16x32xbf16>
    %c0_14 = arith.constant 0 : index
    %c0_15 = arith.constant 0 : index
    %19 = vector.load %arg5[%c0_14, %c0_15] : memref<32x32xf32, #tpu.memory_space<vmem>>, vector<32x32xf32>
    %20 = arith.truncf %19 : vector<32x32xf32> to vector<32x32xbf16>
    %cst_16 = arith.constant dense<0.000000e+00> : vector<16x32xf32>
    %21 = tpu.matmul %18, %20, %cst_16 {dimension_numbers = #tpu.dot_dimension_numbers<[1], [0], [0], [1], [0, 0, 1, 1], [], []>} : vector<16x32xbf16>, vector<32x32xbf16>, vector<16x32xf32> -> vector<16x32xf32>
    %c0_17 = arith.constant 0 : index
    %c0_18 = arith.constant 0 : index
    %22 = vector.load %arg8[%c0_17, %c0_18] : memref<1x32xf32, #tpu.memory_space<vmem>>, vector<1x32xf32>
    %23 = vector.broadcast %22 : vector<1x32xf32> to vector<16x32xf32>
    %24 = arith.addf %21, %23 : vector<16x32xf32>
    %cst_19 = arith.constant 0.000000e+00 : f32
    %25 = vector.broadcast %cst_19 : f32 to vector<16x32xf32>
    %26 = vector.extract_strided_slice %11 {offsets = [0, 0], sizes = [16, 8], strides = [1, 1]} : vector<16x32xf32> to vector<16x8xf32>
    %27 = arith.truncf %26 : vector<16x8xf32> to vector<16x8xbf16>
    %28 = vector.extract_strided_slice %17 {offsets = [0, 0], sizes = [16, 8], strides = [1, 1]} : vector<16x32xf32> to vector<16x8xf32>
    %29 = arith.truncf %28 : vector<16x8xf32> to vector<16x8xbf16>
    %30 = vector.extract_strided_slice %24 {offsets = [0, 0], sizes = [16, 8], strides = [1, 1]} : vector<16x32xf32> to vector<16x8xf32>
    %31 = arith.truncf %30 : vector<16x8xf32> to vector<16x8xbf16>
    %cst_20 = arith.constant dense<0.000000e+00> : vector<16x16xf32>
    %32 = tpu.matmul %27, %29, %cst_20 {dimension_numbers = #tpu.dot_dimension_numbers<[1], [1], [0], [0], [0, 0, 1, 0], [], []>} : vector<16x8xbf16>, vector<16x8xbf16>, vector<16x16xf32> -> vector<16x16xf32>
    %cst_21 = arith.constant 0.353553385 : f32
    %33 = vector.broadcast %cst_21 : f32 to vector<16x16xf32>
    %34 = arith.mulf %32, %33 : vector<16x16xf32>
    %cst_22 = arith.constant dense<0xFF800000> : vector<16xf32>
    %35 = vector.multi_reduction <maximumf>, %34, %cst_22 [1] : vector<16x16xf32> to vector<16xf32>
    %36 = vector.shape_cast %35 : vector<16xf32> to vector<16x1xf32>
    %37 = vector.broadcast %36 : vector<16x1xf32> to vector<16x16xf32>
    %38 = arith.subf %34, %37 : vector<16x16xf32>
    %39 = math.exp %38 : vector<16x16xf32>
    %cst_23 = arith.constant dense<0.000000e+00> : vector<16xf32>
    %40 = vector.multi_reduction <add>, %39, %cst_23 [1] : vector<16x16xf32> to vector<16xf32>
    %41 = vector.shape_cast %40 : vector<16xf32> to vector<16x1xf32>
    %42 = tpu.reciprocal %41 {approx = true} : vector<16x1xf32> -> vector<16x1xf32>
    %43 = vector.broadcast %42 : vector<16x1xf32> to vector<16x16xf32>
    %44 = arith.mulf %39, %43 : vector<16x16xf32>
    %45 = arith.truncf %44 : vector<16x16xf32> to vector<16x16xbf16>
    %cst_24 = arith.constant dense<0.000000e+00> : vector<16x8xf32>
    %46 = tpu.matmul %45, %31, %cst_24 {dimension_numbers = #tpu.dot_dimension_numbers<[1], [0], [0], [1], [0, 0, 1, 1], [], []>} : vector<16x16xbf16>, vector<16x8xbf16>, vector<16x8xf32> -> vector<16x8xf32>
    %47 = arith.truncf %46 : vector<16x8xf32> to vector<16x8xbf16>
    %c0_25 = arith.constant 0 : index
    %c0_26 = arith.constant 0 : index
    %48 = vector.load %arg9[%c0_25, %c0_26] : memref<32x32xf32, #tpu.memory_space<vmem>>, vector<8x32xf32>
    %49 = arith.truncf %48 : vector<8x32xf32> to vector<8x32xbf16>
    %cst_27 = arith.constant dense<0.000000e+00> : vector<16x32xf32>
    %50 = tpu.matmul %47, %49, %cst_27 {dimension_numbers = #tpu.dot_dimension_numbers<[1], [0], [0], [1], [0, 0, 1, 1], [], []>} : vector<16x8xbf16>, vector<8x32xbf16>, vector<16x32xf32> -> vector<16x32xf32>
    %51 = arith.addf %25, %50 : vector<16x32xf32>
    %52 = vector.extract_strided_slice %11 {offsets = [0, 8], sizes = [16, 8], strides = [1, 1]} : vector<16x32xf32> to vector<16x8xf32>
    %53 = arith.truncf %52 : vector<16x8xf32> to vector<16x8xbf16>
    %54 = vector.extract_strided_slice %17 {offsets = [0, 8], sizes = [16, 8], strides = [1, 1]} : vector<16x32xf32> to vector<16x8xf32>
    %55 = arith.truncf %54 : vector<16x8xf32> to vector<16x8xbf16>
    %56 = vector.extract_strided_slice %24 {offsets = [0, 8], sizes = [16, 8], strides = [1, 1]} : vector<16x32xf32> to vector<16x8xf32>
    %57 = arith.truncf %56 : vector<16x8xf32> to vector<16x8xbf16>
    %cst_28 = arith.constant dense<0.000000e+00> : vector<16x16xf32>
    %58 = tpu.matmul %53, %55, %cst_28 {dimension_numbers = #tpu.dot_dimension_numbers<[1], [1], [0], [0], [0, 0, 1, 0], [], []>} : vector<16x8xbf16>, vector<16x8xbf16>, vector<16x16xf32> -> vector<16x16xf32>
    %cst_29 = arith.constant 0.353553385 : f32
    %59 = vector.broadcast %cst_29 : f32 to vector<16x16xf32>
    %60 = arith.mulf %58, %59 : vector<16x16xf32>
    %cst_30 = arith.constant dense<0xFF800000> : vector<16xf32>
    %61 = vector.multi_reduction <maximumf>, %60, %cst_30 [1] : vector<16x16xf32> to vector<16xf32>
    %62 = vector.shape_cast %61 : vector<16xf32> to vector<16x1xf32>
    %63 = vector.broadcast %62 : vector<16x1xf32> to vector<16x16xf32>
    %64 = arith.subf %60, %63 : vector<16x16xf32>
    %65 = math.exp %64 : vector<16x16xf32>
    %cst_31 = arith.constant dense<0.000000e+00> : vector<16xf32>
    %66 = vector.multi_reduction <add>, %65, %cst_31 [1] : vector<16x16xf32> to vector<16xf32>
    %67 = vector.shape_cast %66 : vector<16xf32> to vector<16x1xf32>
    %68 = tpu.reciprocal %67 {approx = true} : vector<16x1xf32> -> vector<16x1xf32>
    %69 = vector.broadcast %68 : vector<16x1xf32> to vector<16x16xf32>
    %70 = arith.mulf %65, %69 : vector<16x16xf32>
    %71 = arith.truncf %70 : vector<16x16xf32> to vector<16x16xbf16>
    %cst_32 = arith.constant dense<0.000000e+00> : vector<16x8xf32>
    %72 = tpu.matmul %71, %57, %cst_32 {dimension_numbers = #tpu.dot_dimension_numbers<[1], [0], [0], [1], [0, 0, 1, 1], [], []>} : vector<16x16xbf16>, vector<16x8xbf16>, vector<16x8xf32> -> vector<16x8xf32>
    %73 = arith.truncf %72 : vector<16x8xf32> to vector<16x8xbf16>
    %c8 = arith.constant 8 : index
    %c0_33 = arith.constant 0 : index
    %74 = vector.load %arg9[%c8, %c0_33] : memref<32x32xf32, #tpu.memory_space<vmem>>, vector<8x32xf32>
    %75 = arith.truncf %74 : vector<8x32xf32> to vector<8x32xbf16>
    %cst_34 = arith.constant dense<0.000000e+00> : vector<16x32xf32>
    %76 = tpu.matmul %73, %75, %cst_34 {dimension_numbers = #tpu.dot_dimension_numbers<[1], [0], [0], [1], [0, 0, 1, 1], [], []>} : vector<16x8xbf16>, vector<8x32xbf16>, vector<16x32xf32> -> vector<16x32xf32>
    %77 = arith.addf %51, %76 : vector<16x32xf32>
    %78 = vector.extract_strided_slice %11 {offsets = [0, 16], sizes = [16, 8], strides = [1, 1]} : vector<16x32xf32> to vector<16x8xf32>
    %79 = arith.truncf %78 : vector<16x8xf32> to vector<16x8xbf16>
    %80 = vector.extract_strided_slice %17 {offsets = [0, 16], sizes = [16, 8], strides = [1, 1]} : vector<16x32xf32> to vector<16x8xf32>
    %81 = arith.truncf %80 : vector<16x8xf32> to vector<16x8xbf16>
    %82 = vector.extract_strided_slice %24 {offsets = [0, 16], sizes = [16, 8], strides = [1, 1]} : vector<16x32xf32> to vector<16x8xf32>
    %83 = arith.truncf %82 : vector<16x8xf32> to vector<16x8xbf16>
    %cst_35 = arith.constant dense<0.000000e+00> : vector<16x16xf32>
    %84 = tpu.matmul %79, %81, %cst_35 {dimension_numbers = #tpu.dot_dimension_numbers<[1], [1], [0], [0], [0, 0, 1, 0], [], []>} : vector<16x8xbf16>, vector<16x8xbf16>, vector<16x16xf32> -> vector<16x16xf32>
    %cst_36 = arith.constant 0.353553385 : f32
    %85 = vector.broadcast %cst_36 : f32 to vector<16x16xf32>
    %86 = arith.mulf %84, %85 : vector<16x16xf32>
    %cst_37 = arith.constant dense<0xFF800000> : vector<16xf32>
    %87 = vector.multi_reduction <maximumf>, %86, %cst_37 [1] : vector<16x16xf32> to vector<16xf32>
    %88 = vector.shape_cast %87 : vector<16xf32> to vector<16x1xf32>
    %89 = vector.broadcast %88 : vector<16x1xf32> to vector<16x16xf32>
    %90 = arith.subf %86, %89 : vector<16x16xf32>
    %91 = math.exp %90 : vector<16x16xf32>
    %cst_38 = arith.constant dense<0.000000e+00> : vector<16xf32>
    %92 = vector.multi_reduction <add>, %91, %cst_38 [1] : vector<16x16xf32> to vector<16xf32>
    %93 = vector.shape_cast %92 : vector<16xf32> to vector<16x1xf32>
    %94 = tpu.reciprocal %93 {approx = true} : vector<16x1xf32> -> vector<16x1xf32>
    %95 = vector.broadcast %94 : vector<16x1xf32> to vector<16x16xf32>
    %96 = arith.mulf %91, %95 : vector<16x16xf32>
    %97 = arith.truncf %96 : vector<16x16xf32> to vector<16x16xbf16>
    %cst_39 = arith.constant dense<0.000000e+00> : vector<16x8xf32>
    %98 = tpu.matmul %97, %83, %cst_39 {dimension_numbers = #tpu.dot_dimension_numbers<[1], [0], [0], [1], [0, 0, 1, 1], [], []>} : vector<16x16xbf16>, vector<16x8xbf16>, vector<16x8xf32> -> vector<16x8xf32>
    %99 = arith.truncf %98 : vector<16x8xf32> to vector<16x8xbf16>
    %c16 = arith.constant 16 : index
    %c0_40 = arith.constant 0 : index
    %100 = vector.load %arg9[%c16, %c0_40] : memref<32x32xf32, #tpu.memory_space<vmem>>, vector<8x32xf32>
    %101 = arith.truncf %100 : vector<8x32xf32> to vector<8x32xbf16>
    %cst_41 = arith.constant dense<0.000000e+00> : vector<16x32xf32>
    %102 = tpu.matmul %99, %101, %cst_41 {dimension_numbers = #tpu.dot_dimension_numbers<[1], [0], [0], [1], [0, 0, 1, 1], [], []>} : vector<16x8xbf16>, vector<8x32xbf16>, vector<16x32xf32> -> vector<16x32xf32>
    %103 = arith.addf %77, %102 : vector<16x32xf32>
    %104 = vector.extract_strided_slice %11 {offsets = [0, 24], sizes = [16, 8], strides = [1, 1]} : vector<16x32xf32> to vector<16x8xf32>
    %105 = arith.truncf %104 : vector<16x8xf32> to vector<16x8xbf16>
    %106 = vector.extract_strided_slice %17 {offsets = [0, 24], sizes = [16, 8], strides = [1, 1]} : vector<16x32xf32> to vector<16x8xf32>
    %107 = arith.truncf %106 : vector<16x8xf32> to vector<16x8xbf16>
    %108 = vector.extract_strided_slice %24 {offsets = [0, 24], sizes = [16, 8], strides = [1, 1]} : vector<16x32xf32> to vector<16x8xf32>
    %109 = arith.truncf %108 : vector<16x8xf32> to vector<16x8xbf16>
    %cst_42 = arith.constant dense<0.000000e+00> : vector<16x16xf32>
    %110 = tpu.matmul %105, %107, %cst_42 {dimension_numbers = #tpu.dot_dimension_numbers<[1], [1], [0], [0], [0, 0, 1, 0], [], []>} : vector<16x8xbf16>, vector<16x8xbf16>, vector<16x16xf32> -> vector<16x16xf32>
    %cst_43 = arith.constant 0.353553385 : f32
    %111 = vector.broadcast %cst_43 : f32 to vector<16x16xf32>
    %112 = arith.mulf %110, %111 : vector<16x16xf32>
    %cst_44 = arith.constant dense<0xFF800000> : vector<16xf32>
    %113 = vector.multi_reduction <maximumf>, %112, %cst_44 [1] : vector<16x16xf32> to vector<16xf32>
    %114 = vector.shape_cast %113 : vector<16xf32> to vector<16x1xf32>
    %115 = vector.broadcast %114 : vector<16x1xf32> to vector<16x16xf32>
    %116 = arith.subf %112, %115 : vector<16x16xf32>
    %117 = math.exp %116 : vector<16x16xf32>
    %cst_45 = arith.constant dense<0.000000e+00> : vector<16xf32>
    %118 = vector.multi_reduction <add>, %117, %cst_45 [1] : vector<16x16xf32> to vector<16xf32>
    %119 = vector.shape_cast %118 : vector<16xf32> to vector<16x1xf32>
    %120 = tpu.reciprocal %119 {approx = true} : vector<16x1xf32> -> vector<16x1xf32>
    %121 = vector.broadcast %120 : vector<16x1xf32> to vector<16x16xf32>
    %122 = arith.mulf %117, %121 : vector<16x16xf32>
    %123 = arith.truncf %122 : vector<16x16xf32> to vector<16x16xbf16>
    %cst_46 = arith.constant dense<0.000000e+00> : vector<16x8xf32>
    %124 = tpu.matmul %123, %109, %cst_46 {dimension_numbers = #tpu.dot_dimension_numbers<[1], [0], [0], [1], [0, 0, 1, 1], [], []>} : vector<16x16xbf16>, vector<16x8xbf16>, vector<16x8xf32> -> vector<16x8xf32>
    %125 = arith.truncf %124 : vector<16x8xf32> to vector<16x8xbf16>
    %c24 = arith.constant 24 : index
    %c0_47 = arith.constant 0 : index
    %126 = vector.load %arg9[%c24, %c0_47] : memref<32x32xf32, #tpu.memory_space<vmem>>, vector<8x32xf32>
    %127 = arith.truncf %126 : vector<8x32xf32> to vector<8x32xbf16>
    %cst_48 = arith.constant dense<0.000000e+00> : vector<16x32xf32>
    %128 = tpu.matmul %125, %127, %cst_48 {dimension_numbers = #tpu.dot_dimension_numbers<[1], [0], [0], [1], [0, 0, 1, 1], [], []>} : vector<16x8xbf16>, vector<8x32xbf16>, vector<16x32xf32> -> vector<16x32xf32>
    %129 = arith.addf %103, %128 : vector<16x32xf32>
    %c0_49 = arith.constant 0 : index
    %c0_50 = arith.constant 0 : index
    %130 = vector.load %arg10[%c0_49, %c0_50] : memref<1x32xf32, #tpu.memory_space<vmem>>, vector<1x32xf32>
    %131 = vector.broadcast %130 : vector<1x32xf32> to vector<16x32xf32>
    %132 = arith.addf %129, %131 : vector<16x32xf32>
    %133 = arith.addf %1, %132 : vector<16x32xf32>
    %cst_51 = arith.constant dense<0.000000e+00> : vector<16xf32>
    %134 = vector.multi_reduction <add>, %133, %cst_51 [1] : vector<16x32xf32> to vector<16xf32>
    %135 = vector.shape_cast %134 : vector<16xf32> to vector<16x1xf32>
    %cst_52 = arith.constant 3.200000e+01 : f32
    %136 = vector.broadcast %cst_52 : f32 to vector<16x1xf32>
    %137 = arith.divf %135, %136 : vector<16x1xf32>
    %138 = vector.broadcast %137 : vector<16x1xf32> to vector<16x32xf32>
    %139 = arith.subf %133, %138 : vector<16x32xf32>
    %140 = arith.mulf %139, %139 : vector<16x32xf32>
    %cst_53 = arith.constant dense<0.000000e+00> : vector<16xf32>
    %141 = vector.multi_reduction <add>, %140, %cst_53 [1] : vector<16x32xf32> to vector<16xf32>
    %142 = vector.shape_cast %141 : vector<16xf32> to vector<16x1xf32>
    %cst_54 = arith.constant 3.200000e+01 : f32
    %143 = vector.broadcast %cst_54 : f32 to vector<16x1xf32>
    %144 = arith.divf %142, %143 : vector<16x1xf32>
    %145 = vector.broadcast %137 : vector<16x1xf32> to vector<16x32xf32>
    %146 = arith.subf %133, %145 : vector<16x32xf32>
    %cst_55 = arith.constant 9.99999974E-6 : f32
    %147 = vector.broadcast %cst_55 : f32 to vector<16x1xf32>
    %148 = arith.addf %144, %147 : vector<16x1xf32>
    %149 = math.rsqrt %148 : vector<16x1xf32>
    %150 = vector.broadcast %149 : vector<16x1xf32> to vector<16x32xf32>
    %151 = arith.mulf %146, %150 : vector<16x32xf32>
    %c0_56 = arith.constant 0 : index
    %c0_57 = arith.constant 0 : index
    %152 = vector.load %arg11[%c0_56, %c0_57] : memref<1x32xf32, #tpu.memory_space<vmem>>, vector<1x32xf32>
    %153 = vector.broadcast %152 : vector<1x32xf32> to vector<16x32xf32>
    %154 = arith.mulf %151, %153 : vector<16x32xf32>
    %c0_58 = arith.constant 0 : index
    %c0_59 = arith.constant 0 : index
    %155 = vector.load %arg12[%c0_58, %c0_59] : memref<1x32xf32, #tpu.memory_space<vmem>>, vector<1x32xf32>
    %156 = vector.broadcast %155 : vector<1x32xf32> to vector<16x32xf32>
    %157 = arith.addf %154, %156 : vector<16x32xf32>
    %c0_60 = arith.constant 0 : index
    %c0_61 = arith.constant 0 : index
    %c0_62 = arith.constant 0 : index
    %158 = vector.load %arg13[%c0_60, %c0_61, %c0_62] : memref<1x16x32xf32, #tpu.memory_space<vmem>>, vector<1x16x32xf32>
    %159 = vector.shape_cast %158 : vector<1x16x32xf32> to vector<16x32xf32>
    %160 = vector.shape_cast %157 : vector<16x32xf32> to vector<1x16x32xf32>
    tpu.vector_store %arg13[%c0_60, %c0_61, %c0_62], %160 {strides = array<i32>} : memref<1x16x32xf32, #tpu.memory_space<vmem>>, vector<1x16x32xf32>,
    return
  }
  func.func @transform_0(%arg0: i32) -> (i32, i32, i32) {
    %c0_i32 = arith.constant 0 : i32
    %c0_i32_0 = arith.constant 0 : i32
    %c0_i32_1 = arith.constant 0 : i32
    return %arg0, %c0_i32, %c0_i32_0 : i32, i32, i32
  }
  func.func @transform_1(%arg0: i32) -> (i32, i32, i32) {
    %c0_i32 = arith.constant 0 : i32
    %c0_i32_0 = arith.constant 0 : i32
    %c0_i32_1 = arith.constant 0 : i32
    return %arg0, %c0_i32, %c0_i32_0 : i32, i32, i32
  }
  func.func @transform_2(%arg0: i32) -> (i32, i32) {
    %c0_i32 = arith.constant 0 : i32
    %c0_i32_0 = arith.constant 0 : i32
    %c0_i32_1 = arith.constant 0 : i32
    return %c0_i32, %c0_i32_0 : i32, i32
  }
  func.func @transform_3(%arg0: i32) -> (i32, i32) {
    %c0_i32 = arith.constant 0 : i32
    %c0_i32_0 = arith.constant 0 : i32
    %c0_i32_1 = arith.constant 0 : i32
    return %c0_i32, %c0_i32_0 : i32, i32
  }
  func.func @transform_4(%arg0: i32) -> (i32, i32) {
    %c0_i32 = arith.constant 0 : i32
    %c0_i32_0 = arith.constant 0 : i32
    %c0_i32_1 = arith.constant 0 : i32
    return %c0_i32, %c0_i32_0 : i32, i32
  }
  func.func @transform_5(%arg0: i32) -> (i32, i32) {
    %c0_i32 = arith.constant 0 : i32
    %c0_i32_0 = arith.constant 0 : i32
    %c0_i32_1 = arith.constant 0 : i32
    return %c0_i32, %c0_i32_0 : i32, i32
  }
  func.func @transform_6(%arg0: i32) -> (i32, i32) {
    %c0_i32 = arith.constant 0 : i32
    %c0_i32_0 = arith.constant 0 : i32
    %c0_i32_1 = arith.constant 0 : i32
    return %c0_i32, %c0_i32_0 : i32, i32
  }
  func.func @transform_7(%arg0: i32) -> (i32, i32) {
    %c0_i32 = arith.constant 0 : i32
    %c0_i32_0 = arith.constant 0 : i32
    %c0_i32_1 = arith.constant 0 : i32
    return %c0_i32, %c0_i32_0 : i32, i32
  }
  func.func @transform_8(%arg0: i32) -> (i32, i32) {
    %c0_i32 = arith.constant 0 : i32
    %c0_i32_0 = arith.constant 0 : i32
    %c0_i32_1 = arith.constant 0 : i32
    return %c0_i32, %c0_i32_0 : i32, i32
  }
  func.func @transform_9(%arg0: i32) -> (i32, i32) {
    %c0_i32 = arith.constant 0 : i32
    %c0_i32_0 = arith.constant 0 : i32
    %c0_i32_1 = arith.constant 0 : i32
    return %c0_i32, %c0_i32_0 : i32, i32
  }
  func.func @transform_10(%arg0: i32) -> (i32, i32) {
    %c0_i32 = arith.constant 0 : i32
    %c0_i32_0 = arith.constant 0 : i32
    %c0_i32_1 = arith.constant 0 : i32
    return %c0_i32, %c0_i32_0 : i32, i32
  }
  func.func @transform_11(%arg0: i32) -> (i32, i32) {
    %c0_i32 = arith.constant 0 : i32
    %c0_i32_0 = arith.constant 0 : i32
    %c0_i32_1 = arith.constant 0 : i32
    return %c0_i32, %c0_i32_0 : i32, i32
  }
  func.func @transform_12(%arg0: i32) -> (i32, i32, i32) {
    %c0_i32 = arith.constant 0 : i32
    %c0_i32_0 = arith.constant 0 : i32
    %c0_i32_1 = arith.constant 0 : i32
    return %arg0, %c0_i32, %c0_i32_0 : i32, i32, i32
  }
}

module attributes {stable_mosaic.version = 11 : i64} {
  func.func @_off_aw_kernel(%arg0: i32, %arg1: memref<32x32xf32, #tpu.memory_space<vmem>>, %arg2: memref<32x32xf32, #tpu.memory_space<vmem>>, %arg3: memref<32x32xf32, #tpu.memory_space<vmem>>, %arg4: memref<1x32xf32, #tpu.memory_space<vmem>>, %arg5: memref<32x16xf32, #tpu.memory_space<vmem>>, %arg6: memref<1x16xf32, #tpu.memory_space<vmem>>, %arg7: memref<32x32xf32, #tpu.memory_space<vmem>>, %arg8: memref<32x16xf32, #tpu.memory_space<vmem>>) attributes {dimension_semantics = [#tpu.dimension_semantics<parallel>], iteration_bounds = array<i64: 1>, scalar_prefetch = 0 : i64, scratch_operands = 0 : i64, tpu.core_type = #tpu.core_type<tc>, window_params = [{transform_indices = @transform_0, window_bounds = array<i64: 32, 32>}, {transform_indices = @transform_1, window_bounds = array<i64: 32, 32>}, {pipeline_mode = #tpu.pipeline_mode<synchronous>, transform_indices = @transform_2, window_bounds = array<i64: 32, 32>}, {pipeline_mode = #tpu.pipeline_mode<synchronous>, transform_indices = @transform_3, window_bounds = array<i64: 1, 32>}, {pipeline_mode = #tpu.pipeline_mode<synchronous>, transform_indices = @transform_4, window_bounds = array<i64: 32, 16>}, {pipeline_mode = #tpu.pipeline_mode<synchronous>, transform_indices = @transform_5, window_bounds = array<i64: 1, 16>}, {transform_indices = @transform_6, window_bounds = array<i64: 32, 32>}, {transform_indices = @transform_7, window_bounds = array<i64: 32, 16>}]} {
    %c0 = arith.constant 0 : index
    %c0_0 = arith.constant 0 : index
    %0 = vector.load %arg1[%c0, %c0_0] : memref<32x32xf32, #tpu.memory_space<vmem>>, vector<32x32xf32>
    %c0_1 = arith.constant 0 : index
    %c0_2 = arith.constant 0 : index
    %1 = vector.load %arg2[%c0_1, %c0_2] : memref<32x32xf32, #tpu.memory_space<vmem>>, vector<32x32xf32>
    %2 = arith.addf %0, %1 : vector<32x32xf32>
    %3 = arith.truncf %2 : vector<32x32xf32> to vector<32x32xbf16>
    %c0_3 = arith.constant 0 : index
    %c0_4 = arith.constant 0 : index
    %4 = vector.load %arg3[%c0_3, %c0_4] : memref<32x32xf32, #tpu.memory_space<vmem>>, vector<32x32xf32>
    %5 = arith.truncf %4 : vector<32x32xf32> to vector<32x32xbf16>
    %cst = arith.constant dense<0.000000e+00> : vector<32x32xf32>
    %6 = tpu.matmul %3, %5, %cst {dimension_numbers = #tpu.dot_dimension_numbers<[1], [0], [0], [1], [0, 0, 1, 1], [], []>} : vector<32x32xbf16>, vector<32x32xbf16>, vector<32x32xf32> -> vector<32x32xf32>
    %c0_5 = arith.constant 0 : index
    %c0_6 = arith.constant 0 : index
    %7 = vector.load %arg4[%c0_5, %c0_6] : memref<1x32xf32, #tpu.memory_space<vmem>>, vector<1x32xf32>
    %8 = vector.broadcast %7 : vector<1x32xf32> to vector<32x32xf32>
    %9 = arith.addf %6, %8 : vector<32x32xf32>
    %c0_7 = arith.constant 0 : index
    %c0_8 = arith.constant 0 : index
    %10 = vector.load %arg5[%c0_7, %c0_8] : memref<32x16xf32, #tpu.memory_space<vmem>>, vector<32x16xf32>
    %11 = arith.truncf %10 : vector<32x16xf32> to vector<32x16xbf16>
    %cst_9 = arith.constant dense<0.000000e+00> : vector<32x16xf32>
    %12 = tpu.matmul %3, %11, %cst_9 {dimension_numbers = #tpu.dot_dimension_numbers<[1], [0], [0], [1], [0, 0, 1, 1], [], []>} : vector<32x32xbf16>, vector<32x16xbf16>, vector<32x16xf32> -> vector<32x16xf32>
    %c0_10 = arith.constant 0 : index
    %c0_11 = arith.constant 0 : index
    %13 = vector.load %arg6[%c0_10, %c0_11] : memref<1x16xf32, #tpu.memory_space<vmem>>, vector<1x16xf32>
    %14 = vector.broadcast %13 : vector<1x16xf32> to vector<32x16xf32>
    %15 = arith.addf %12, %14 : vector<32x16xf32>
    %c0_12 = arith.constant 0 : index
    %c0_13 = arith.constant 0 : index
    %16 = vector.load %arg7[%c0_12, %c0_13] : memref<32x32xf32, #tpu.memory_space<vmem>>, vector<32x32xf32>
    tpu.vector_store %arg7[%c0_12, %c0_13], %9 {strides = array<i32>} : memref<32x32xf32, #tpu.memory_space<vmem>>, vector<32x32xf32>,
    %c0_14 = arith.constant 0 : index
    %c0_15 = arith.constant 0 : index
    %17 = vector.load %arg8[%c0_14, %c0_15] : memref<32x16xf32, #tpu.memory_space<vmem>>, vector<32x16xf32>
    tpu.vector_store %arg8[%c0_14, %c0_15], %15 {strides = array<i32>} : memref<32x16xf32, #tpu.memory_space<vmem>>, vector<32x16xf32>,
    return
  }
  func.func @transform_0(%arg0: i32) -> (i32, i32) {
    %c0_i32 = arith.constant 0 : i32
    %c0_i32_0 = arith.constant 0 : i32
    return %arg0, %c0_i32 : i32, i32
  }
  func.func @transform_1(%arg0: i32) -> (i32, i32) {
    %c0_i32 = arith.constant 0 : i32
    %c0_i32_0 = arith.constant 0 : i32
    return %arg0, %c0_i32 : i32, i32
  }
  func.func @transform_2(%arg0: i32) -> (i32, i32) {
    %c0_i32 = arith.constant 0 : i32
    %c0_i32_0 = arith.constant 0 : i32
    %c0_i32_1 = arith.constant 0 : i32
    return %c0_i32, %c0_i32_0 : i32, i32
  }
  func.func @transform_3(%arg0: i32) -> (i32, i32) {
    %c0_i32 = arith.constant 0 : i32
    %c0_i32_0 = arith.constant 0 : i32
    %c0_i32_1 = arith.constant 0 : i32
    return %c0_i32, %c0_i32_0 : i32, i32
  }
  func.func @transform_4(%arg0: i32) -> (i32, i32) {
    %c0_i32 = arith.constant 0 : i32
    %c0_i32_0 = arith.constant 0 : i32
    %c0_i32_1 = arith.constant 0 : i32
    return %c0_i32, %c0_i32_0 : i32, i32
  }
  func.func @transform_5(%arg0: i32) -> (i32, i32) {
    %c0_i32 = arith.constant 0 : i32
    %c0_i32_0 = arith.constant 0 : i32
    %c0_i32_1 = arith.constant 0 : i32
    return %c0_i32, %c0_i32_0 : i32, i32
  }
  func.func @transform_6(%arg0: i32) -> (i32, i32) {
    %c0_i32 = arith.constant 0 : i32
    %c0_i32_0 = arith.constant 0 : i32
    return %arg0, %c0_i32 : i32, i32
  }
  func.func @transform_7(%arg0: i32) -> (i32, i32) {
    %c0_i32 = arith.constant 0 : i32
    %c0_i32_0 = arith.constant 0 : i32
    return %arg0, %c0_i32 : i32, i32
  }
}

</mosaic_0001>

<llo_original>
// kernel: run.17
$region0: #{run.17}
  #allocation0 [shape = 'u32[]', space=smem, size = 0x4, offset = 0x4, fixed_abs, tag = 'smem constant byte address 0x4 - core index']
  #allocation1 [shape = 'u32[144,128]{1,0:T(1,128)}', space=vmem, size = 0x12000, scoped, tag = 'internal scratch']
  %s0 = inlined_call_operand.vmem [shape: f32[32,32], index: 0, kind: input, shape index: {}]
  %s1 = inlined_call_operand.vmem [shape: f32[32,32], index: 1, kind: input, shape index: {}]
  %s2 = inlined_call_operand.vmem [shape: f32[32,32], index: 2, kind: input, shape index: {}]
  %s3 = inlined_call_operand.vmem [shape: f32[1,32], index: 3, kind: input, shape index: {}]
  %s4 = inlined_call_operand.vmem [shape: f32[32,16], index: 4, kind: input, shape index: {}]
  %s5 = inlined_call_operand.vmem [shape: f32[1,16], index: 5, kind: input, shape index: {}]
  %s6 = inlined_call_operand.vmem [shape: f32[32,32], index: 6, kind: output, shape index: {0}]
  %s7 = inlined_call_operand.hbm [shape: f32[32,16], index: 7, kind: output, shape index: {1}]
  %8 = xla_tuple %s6, %s7
  %s9 = sld [smem:[#allocation0]]
  $region42: #{run.17} parent=0
    _
  %s11 = ssub.s32 1, %s9
  %s12 = scalar_select 0, %s11, %s9
  $region1: #{run.17} parent=0
    #allocation2 [shape = 'u8[16384]{0}', space=vmem, size = 0x4000, scoped, tag = 'output window, operand 1, single buffered']
    #allocation3 [shape = 's32[1]{0}', space=sflag, size = 0x4, scoped, tag = 'scoped memory for run.17']
    %13 = vsyncpa [#allocation3], 0
    // Predicated region
    $region2: #{run.17} parent=1 // pred_check
      _
    $region3: #{run.17} parent=1 // pred_check_branch
      %15 = sbr.rel (0) target = $region5
    $region4: #{run.17} parent=1 // pred_region
      _
    $region5: #{run.17} parent=1 // pred_fallthru
      _
    // Predicated region
    $region6: #{run.17} parent=1 // pred_check
      _
    $region7: #{run.17} parent=1 // pred_check_branch
      %17 = sbr.rel (0) target = $region9
    $region8: #{run.17} parent=1 // pred_region
      _
    $region9: #{run.17} parent=1 // pred_fallthru
      _
    // Predicated region
    $region10: #{run.17} parent=1 // pred_check
      _
    $region11: #{run.17} parent=1 // pred_check_branch
      %19 = sbr.rel (0) target = $region13
    $region12: #{run.17} parent=1 // pred_region
      _
    $region13: #{run.17} parent=1 // pred_fallthru
      _
    // Predicated region
    $region14: #{run.17} parent=1 // pred_check
      _
    $region15: #{run.17} parent=1 // pred_check_branch
      %21 = sbr.rel (0) target = $region17
    $region16: #{run.17} parent=1 // pred_region
      _
    $region17: #{run.17} parent=1 // pred_fallthru
      _
    // Predicated region
    $region18: #{run.17} parent=1 // pred_check
      _
    $region19: #{run.17} parent=1 // pred_check_branch
      %23 = sbr.rel (0) target = $region21
    $region20: #{run.17} parent=1 // pred_region
      _
    $region21: #{run.17} parent=1 // pred_fallthru
      _
    // Predicated region
    $region22: #{run.17} parent=1 // pred_check
      _
    $region23: #{run.17} parent=1 // pred_check_branch
      %25 = sbr.rel (0) target = $region25
    $region24: #{run.17} parent=1 // pred_region
      _
    $region25: #{run.17} parent=1 // pred_fallthru
      _
    %v27 = vld [vmem:[%s0] sm:$0xff]
    %v28 = vld [vmem:[%s0 + $0x8] sm:$0xff]
    %v29 = vld [vmem:[%s0 + $0x10] sm:$0xff]
    %v30 = vld [vmem:[%s0 + $0x18] sm:$0xff]
    %v31 = vld [vmem:[%s1] sm:$0xff]
    %v32 = vld [vmem:[%s1 + $0x8] sm:$0xff]
    %v33 = vld [vmem:[%s1 + $0x10] sm:$0xff]
    %v34 = vld [vmem:[%s1 + $0x18] sm:$0xff]
    %v35 = vadd.f32 %v27, %v31
    %v36 = vadd.f32 %v28, %v32
    %v37 = vadd.f32 %v29, %v33
    %v38 = vadd.f32 %v30, %v34
    %v39 = vpack.c.bf16 %v36, %v35
    %v40 = vpack.c.bf16 %v38, %v37
    %v41 = vld [vmem:[%s2] sm:$0xff]
    %v42 = vld [vmem:[%s2 + $0x8] sm:$0xff]
    %v43 = vld [vmem:[%s2 + $0x10] sm:$0xff]
    %v44 = vld [vmem:[%s2 + $0x18] sm:$0xff]
    %v45 = vpack.c.bf16 %v42, %v41
    %v46 = vpack.c.bf16 %v44, %v43
    %v47 = vld [vmem:[%s3] sm:$0x1]
    %v49 = vlaneseq
    %v50 = vshrl.u32 %v49, 7
    %v51 = vsub.s32 0, %v50
    %v52 = vrot.slane %v47, %v51
    %vm54 = vcmask 261120
    %v56 = vsel %vm54, %v39, 0
    %v59 = vsel %vm54, %v40, 0
    %61 = vmatprep.subr.bf16.mxu0 0
    %62 = vmatpush1.bf16.msra.mxu0 %v45
    %63 = vmatprep.subr.bf16.mxu0 0
    %64 = vmatpush1.bf16.msra.mxu0 %v46
    %65 = vmatprep.subr.bf16.mxu0 0
    %66 = vmatpush1.bf16.msra.mxu0 0
    %67 = vmatprep.subr.bf16.mxu0 0
    %68 = vmatpush1.bf16.msra.mxu0 0
    %69 = vmatprep.subr.bf16.mxu0 0
    %70 = vmatpush1.bf16.msra.mxu0 0
    %71 = vmatprep.subr.bf16.mxu0 0
    %72 = vmatpush1.bf16.msra.mxu0 0
    %73 = vmatprep.subr.bf16.mxu0 0
    %74 = vmatpush1.bf16.msra.mxu0 0
    %75 = vmatprep.subr.bf16.mxu0 0
    %76 = vmatpush1.bf16.msra.mxu0 0
    %77 = vmatprep.subr.bf16.mxu0 0
    %78 = vmatpush1.bf16.msra.mxu0 0
    %79 = vmatprep.subr.bf16.mxu0 0
    %80 = vmatpush1.bf16.msra.mxu0 0
    %81 = vmatprep.subr.bf16.mxu0 0
    %82 = vmatpush1.bf16.msra.mxu0 0
    %83 = vmatprep.subr.bf16.mxu0 0
    %84 = vmatpush1.bf16.msra.mxu0 0
    %85 = vmatprep.subr.bf16.mxu0 0
    %86 = vmatpush1.bf16.msra.mxu0 0
    %87 = vmatprep.subr.bf16.mxu0 0
    %88 = vmatpush1.bf16.msra.mxu0 0
    %89 = vmatprep.subr.bf16.mxu0 0
    %90 = vmatpush1.bf16.msra.mxu0 0
    %91 = vmatprep.subr.bf16.mxu0 0
    %92 = vmatpush1.bf16.msra.mxu0 0
    %93 = vmatprep.mubr.bf16.mxu0 0
    %94 = vmatmul.mubr.bf16.gmra.mrb[0].mxu0 %v56
    %v95 = vpop.f32.mrb[0].mxu0
    %v96 = vadd.f32 %v52, %v95
    %v97 = vpop.f32.mrb[0].mxu0
    %v98 = vpop.f32.mrb[0].mxu0
    %v99 = vadd.f32 %v52, %v98
    %v100 = vpop.f32.mrb[0].mxu0
    %101 = vmatprep.mubr.bf16.mxu0 0
    %102 = vmatmul.mubr.bf16.gmra.mrb[0].mxu0 %v59
    %v103 = vpop.f32.mrb[0].mxu0
    %v104 = vadd.f32 %v52, %v103
    %v105 = vpop.f32.mrb[0].mxu0
    %v106 = vpop.f32.mrb[0].mxu0
    %v107 = vadd.f32 %v52, %v106
    %v108 = vpop.f32.mrb[0].mxu0
    %109 = vdwg.mxu0
    %v110 = vld [vmem:[%s4] sm:$0xff]
    %v111 = vld [vmem:[%s4 + $0x8] sm:$0xff]
    %v112 = vld [vmem:[%s4 + $0x10] sm:$0xff]
    %v113 = vld [vmem:[%s4 + $0x18] sm:$0xff]
    %v114 = vpack.c.bf16 %v111, %v110
    %v115 = vpack.c.bf16 %v113, %v112
    %v116 = vld [vmem:[%s5] sm:$0x1]
    %v118 = vlaneseq
    %v119 = vshrl.u32 %v118, 7
    %v120 = vsub.s32 0, %v119
    %v121 = vrot.slane %v116, %v120
    %123 = vmatprep.subr.bf16.mxu0 0
    %124 = vmatpush1.bf16.msra.mxu0 %v114
    %125 = vmatprep.subr.bf16.mxu0 0
    %126 = vmatpush1.bf16.msra.mxu0 %v115
    %127 = vmatprep.subr.bf16.mxu0 0
    %128 = vmatpush1.bf16.msra.mxu0 0
    %129 = vmatprep.subr.bf16.mxu0 0
    %130 = vmatpush1.bf16.msra.mxu0 0
    %131 = vmatprep.subr.bf16.mxu0 0
    %132 = vmatpush1.bf16.msra.mxu0 0
    %133 = vmatprep.subr.bf16.mxu0 0
    %134 = vmatpush1.bf16.msra.mxu0 0
    %135 = vmatprep.subr.bf16.mxu0 0
    %136 = vmatpush1.bf16.msra.mxu0 0
    %137 = vmatprep.subr.bf16.mxu0 0
    %138 = vmatpush1.bf16.msra.mxu0 0
    %139 = vmatprep.subr.bf16.mxu0 0
    %140 = vmatpush1.bf16.msra.mxu0 0
    %141 = vmatprep.subr.bf16.mxu0 0
    %142 = vmatpush1.bf16.msra.mxu0 0
    %143 = vmatprep.subr.bf16.mxu0 0
    %144 = vmatpush1.bf16.msra.mxu0 0
    %145 = vmatprep.subr.bf16.mxu0 0
    %146 = vmatpush1.bf16.msra.mxu0 0
    %147 = vmatprep.subr.bf16.mxu0 0
    %148 = vmatpush1.bf16.msra.mxu0 0
    %149 = vmatprep.subr.bf16.mxu0 0
    %150 = vmatpush1.bf16.msra.mxu0 0
    %151 = vmatprep.subr.bf16.mxu0 0
    %152 = vmatpush1.bf16.msra.mxu0 0
    %153 = vmatprep.subr.bf16.mxu0 0
    %154 = vmatpush1.bf16.msra.mxu0 0
    %155 = vmatprep.mubr.bf16.mxu0 0
    %156 = vmatmul.mubr.bf16.gmra.mrb[0].mxu0 %v56
    %v157 = vpop.f32.mrb[0].mxu0
    %v158 = vadd.f32 %v121, %v157
    %v159 = vpop.f32.mrb[0].mxu0
    %v160 = vpop.f32.mrb[0].mxu0
    %v161 = vadd.f32 %v121, %v160
    %v162 = vpop.f32.mrb[0].mxu0
    %163 = vmatprep.mubr.bf16.mxu0 0
    %164 = vmatmul.mubr.bf16.gmra.mrb[0].mxu0 %v59
    %v165 = vpop.f32.mrb[0].mxu0
    %v166 = vadd.f32 %v121, %v165
    %v167 = vpop.f32.mrb[0].mxu0
    %v168 = vpop.f32.mrb[0].mxu0
    %v169 = vadd.f32 %v121, %v168
    %v170 = vpop.f32.mrb[0].mxu0
    %171 = vdwg.mxu0
    %172 = vst.msk [vmem:[%s6] sm:$0xff] %vm54, %v96
    %173 = vst.msk [vmem:[%s6 + $0x8] sm:$0xff] %vm54, %v99
    %174 = vst.msk [vmem:[%s6 + $0x10] sm:$0xff] %vm54, %v104
    %175 = vst.msk [vmem:[%s6 + $0x18] sm:$0xff] %vm54, %v107
    %vm176 = vcmask 130048
    %177 = vst.msk [vmem:[#allocation2] sm:$0xff] %vm176, %v158
    %178 = vst.msk [vmem:[#allocation2 + $0x8] sm:$0xff] %vm176, %v161
    %179 = vst.msk [vmem:[#allocation2 + $0x10] sm:$0xff] %vm176, %v166
    %180 = vst.msk [vmem:[#allocation2 + $0x18] sm:$0xff] %vm176, %v169
    // Predicated region
    $region26: #{run.17} parent=1 // pred_check
      _
    $region27: #{run.17} parent=1 // pred_check_branch
      %182 = sbr.rel (0) target = $region29
    $region28: #{run.17} parent=1 // pred_region
      _
    $region29: #{run.17} parent=1 // pred_fallthru
      _
    // Predicated region
    $region30: #{run.17} parent=1 // pred_check
      _
    $region31: #{run.17} parent=1 // pred_check_branch
      %184 = sbr.rel (0) target = $region33
    $region32: #{run.17} parent=1 // pred_region
      %s186 = ssub.s32 512, 512
      %187 = vsyncadd [#allocation3], %s186
      %s188 = sshll.u32 [#allocation2], 4
      %s189 = int_to_ptr.vmem [resolvable:$true] %s188
      %194 = dma.vmem_to_hbm [thread:$0]  %s189, 512, %s7, [#allocation3], 128, 128, 8
    $region33: #{run.17} parent=1 // pred_fallthru
      _
    // Predicated region
    $region34: #{run.17} parent=1 // pred_check
      _
    $region35: #{run.17} parent=1 // pred_check_branch
      %196 = sbr.rel (0) target = $region37
    $region36: #{run.17} parent=1 // pred_region
      _
    $region37: #{run.17} parent=1 // pred_fallthru
      _
    // Predicated region
    $region38: #{run.17} parent=1 // pred_check
      _
    $region39: #{run.17} parent=1 // pred_check_branch
      %198 = sbr.rel (0) target = $region41
    $region40: #{run.17} parent=1 // pred_region
      %199 = dma.done [#allocation3], 512
    $region41: #{run.17} parent=1 // pred_fallthru
      _
    %200 = vsyncpa [#allocation3], 1

// kernel: run.15
$region0: #{run.15}
  #allocation0 [shape = 'u32[]', space=smem, size = 0x4, offset = 0x4, fixed_abs, tag = 'smem constant byte address 0x4 - core index']
  #allocation1 [shape = 'u32[144,128]{1,0:T(1,128)}', space=vmem, size = 0x12000, scoped, tag = 'internal scratch']
  %s0 = inlined_call_operand.vmem [shape: f32[2,16,32], index: 0, kind: input, shape index: {}]
  %s1 = inlined_call_operand.vmem [shape: f32[2,16,32], index: 1, kind: input, shape index: {}]
  %s2 = inlined_call_operand.vmem [shape: f32[32,32], index: 2, kind: input, shape index: {}]
  %s3 = inlined_call_operand.vmem [shape: f32[32,32], index: 3, kind: input, shape index: {}]
  %s4 = inlined_call_operand.vmem [shape: f32[32,32], index: 4, kind: input, shape index: {}]
  %s5 = inlined_call_operand.vmem [shape: f32[1,32], index: 5, kind: input, shape index: {}]
  %s6 = inlined_call_operand.vmem [shape: f32[1,32], index: 6, kind: input, shape index: {}]
  %s7 = inlined_call_operand.vmem [shape: f32[1,32], index: 7, kind: input, shape index: {}]
  %s8 = inlined_call_operand.vmem [shape: f32[32,32], index: 8, kind: input, shape index: {}]
  %s9 = inlined_call_operand.vmem [shape: f32[1,32], index: 9, kind: input, shape index: {}]
  %s10 = inlined_call_operand.vmem [shape: f32[1,32], index: 10, kind: input, shape index: {}]
  %s11 = inlined_call_operand.vmem [shape: f32[1,32], index: 11, kind: input, shape index: {}]
  %s12 = inlined_call_operand.vmem [shape: f32[2,16,32], index: 12, kind: output, shape index: {}]
  %s13 = sld [smem:[#allocation0]]
  $region81: #{run.15} parent=0
    _
  %s15 = ssub.s32 1, %s13
  %s16 = scalar_select 0, %s15, %s13
  loop: start=0, step=1, limit=4
  $region2: #{run.15} parent=0 // loop_pre_header
    _
  $region3: #{run.15} parent=0 // loop_header
    %s18 = sphi 0, %s22
    %p19 = scmp.ge.s32.totalorder %s18, 4
    %s28 = sphi 0, %s30
    %s31 = sphi 0, %s28
    %s32 = sphi 0, %s31
    %s48 = sphi 0, %s32
    %s54 = sphi 0, %s56
    %s57 = sphi 0, %s54
    %s58 = sphi 0, %s57
    %s74 = sphi 0, %s58
    %s78 = sphi 0, %s78
    %s80 = sphi 0, %s78
    %s81 = sphi 0, %s80
    %s95 = sphi 0, %s81
    %s99 = sphi 0, %s99
    %s101 = sphi 0, %s99
    %s102 = sphi 0, %s101
    %s116 = sphi 0, %s102
    %s120 = sphi 0, %s120
    %s122 = sphi 0, %s120
    %s123 = sphi 0, %s122
    %s137 = sphi 0, %s123
    %s141 = sphi 0, %s141
    %s143 = sphi 0, %s141
    %s144 = sphi 0, %s143
    %s158 = sphi 0, %s144
    %s162 = sphi 0, %s162
    %s164 = sphi 0, %s162
    %s165 = sphi 0, %s164
    %s179 = sphi 0, %s165
    %s183 = sphi 0, %s183
    %s185 = sphi 0, %s183
    %s186 = sphi 0, %s185
    %s200 = sphi 0, %s186
    %s204 = sphi 0, %s204
    %s206 = sphi 0, %s204
    %s207 = sphi 0, %s206
    %s221 = sphi 0, %s207
    %s225 = sphi 0, %s225
    %s227 = sphi 0, %s225
    %s228 = sphi 0, %s227
    %s242 = sphi 0, %s228
    %s246 = sphi 0, %s246
    %s248 = sphi 0, %s246
    %s249 = sphi 0, %s248
    %s263 = sphi 0, %s249
    %s267 = sphi 0, %s267
    %s269 = sphi 0, %s267
    %s270 = sphi 0, %s269
    %s284 = sphi 0, %s270
    %s290 = sphi 0, %s292
    %s293 = sphi 0, %s290
    %s294 = sphi 0, %s293
    %s310 = sphi 0, %s294
  $region4: #{run.15} parent=0 // loop_header_branch
    %21 = sbr.rel (%p19) target = $region8
  $region5: #{run.15} parent=0 // loop_body
    %s23 = ssub.s32 %s18, 1
    %s24 = ssub.s32 %s18, 2
    %s25 = sadd.s32 %s18, 1
    %s26 = ssub.s32 %s18, %s25
    %p27 = scmp.eq.s32.totalorder %s26, 0
    %s29 = sadd.s32 %s28, 1
    %s30 = scalar_select %p27, %s28, %s29
    %p33 = pneg %p27
    %p34 = scmp.eq.s32.totalorder %s18, 1
    %p35 = por %p33, %p34
    %p36 = scmp.ne.s32.totalorder %s28, %s31
    %p37 = scmp.eq.s32.totalorder %s18, 0
    %p38 = por %p36, %p37
    %p39 = scmp.ne.s32.totalorder %s28, %s31
    %p40 = scmp.eq.s32.totalorder %s23, 1
    %p41 = por %p39, %p40
    %p42 = scmp.ne.s32.totalorder %s31, %s32
    %p43 = scmp.eq.s32.totalorder %s23, 0
    %p44 = por %p42, %p43
    %p45 = scmp.ne.s32.totalorder %s31, %s32
    %p46 = scmp.eq.s32.totalorder %s24, 1
    %p47 = por %p45, %p46
    %p49 = scmp.ne.s32.totalorder %s32, %s48
    %p50 = scmp.eq.s32.totalorder %s24, 0
    %p51 = por %p49, %p50
    %s52 = ssub.s32 %s18, %s25
    %p53 = scmp.eq.s32.totalorder %s52, 0
    %s55 = sadd.s32 %s54, 1
    %s56 = scalar_select %p53, %s54, %s55
    %p59 = pneg %p53
    %p60 = scmp.eq.s32.totalorder %s18, 1
    %p61 = por %p59, %p60
    %p62 = scmp.ne.s32.totalorder %s54, %s57
    %p63 = scmp.eq.s32.totalorder %s18, 0
    %p64 = por %p62, %p63
    %p65 = scmp.ne.s32.totalorder %s54, %s57
    %p66 = scmp.eq.s32.totalorder %s23, 1
    %p67 = por %p65, %p66
    %p68 = scmp.ne.s32.totalorder %s57, %s58
    %p69 = scmp.eq.s32.totalorder %s23, 0
    %p70 = por %p68, %p69
    %p71 = scmp.ne.s32.totalorder %s57, %s58
    %p72 = scmp.eq.s32.totalorder %s24, 1
    %p73 = por %p71, %p72
    %p75 = scmp.ne.s32.totalorder %s58, %s74
    %p76 = scmp.eq.s32.totalorder %s24, 0
    %p77 = por %p75, %p76
    %s79 = sadd.s32 %s78, 1
    %p82 = scmp.eq.s32.totalorder %s18, 1
    %p83 = scmp.ne.s32.totalorder %s78, %s80
    %p84 = scmp.eq.s32.totalorder %s18, 0
    %p85 = por %p83, %p84
    %p86 = scmp.ne.s32.totalorder %s78, %s80
    %p87 = scmp.eq.s32.totalorder %s23, 1
    %p88 = por %p86, %p87
    %p89 = scmp.ne.s32.totalorder %s80, %s81
    %p90 = scmp.eq.s32.totalorder %s23, 0
    %p91 = por %p89, %p90
    %p92 = scmp.ne.s32.totalorder %s80, %s81
    %p93 = scmp.eq.s32.totalorder %s24, 1
    %p94 = por %p92, %p93
    %p96 = scmp.ne.s32.totalorder %s81, %s95
    %p97 = scmp.eq.s32.totalorder %s24, 0
    %p98 = por %p96, %p97
    %s100 = sadd.s32 %s99, 1
    %p103 = scmp.eq.s32.totalorder %s18, 1
    %p104 = scmp.ne.s32.totalorder %s99, %s101
    %p105 = scmp.eq.s32.totalorder %s18, 0
    %p106 = por %p104, %p105
    %p107 = scmp.ne.s32.totalorder %s99, %s101
    %p108 = scmp.eq.s32.totalorder %s23, 1
    %p109 = por %p107, %p108
    %p110 = scmp.ne.s32.totalorder %s101, %s102
    %p111 = scmp.eq.s32.totalorder %s23, 0
    %p112 = por %p110, %p111
    %p113 = scmp.ne.s32.totalorder %s101, %s102
    %p114 = scmp.eq.s32.totalorder %s24, 1
    %p115 = por %p113, %p114
    %p117 = scmp.ne.s32.totalorder %s102, %s116
    %p118 = scmp.eq.s32.totalorder %s24, 0
    %p119 = por %p117, %p118
    %s121 = sadd.s32 %s120, 1
    %p124 = scmp.eq.s32.totalorder %s18, 1
    %p125 = scmp.ne.s32.totalorder %s120, %s122
    %p126 = scmp.eq.s32.totalorder %s18, 0
    %p127 = por %p125, %p126
    %p128 = scmp.ne.s32.totalorder %s120, %s122
    %p129 = scmp.eq.s32.totalorder %s23, 1
    %p130 = por %p128, %p129
    %p131 = scmp.ne.s32.totalorder %s122, %s123
    %p132 = scmp.eq.s32.totalorder %s23, 0
    %p133 = por %p131, %p132
    %p134 = scmp.ne.s32.totalorder %s122, %s123
    %p135 = scmp.eq.s32.totalorder %s24, 1
    %p136 = por %p134, %p135
    %p138 = scmp.ne.s32.totalorder %s123, %s137
    %p139 = scmp.eq.s32.totalorder %s24, 0
    %p140 = por %p138, %p139
    %s142 = sadd.s32 %s141, 1
    %p145 = scmp.eq.s32.totalorder %s18, 1
    %p146 = scmp.ne.s32.totalorder %s141, %s143
    %p147 = scmp.eq.s32.totalorder %s18, 0
    %p148 = por %p146, %p147
    %p149 = scmp.ne.s32.totalorder %s141, %s143
    %p150 = scmp.eq.s32.totalorder %s23, 1
    %p151 = por %p149, %p150
    %p152 = scmp.ne.s32.totalorder %s143, %s144
    %p153 = scmp.eq.s32.totalorder %s23, 0
    %p154 = por %p152, %p153
    %p155 = scmp.ne.s32.totalorder %s143, %s144
    %p156 = scmp.eq.s32.totalorder %s24, 1
    %p157 = por %p155, %p156
    %p159 = scmp.ne.s32.totalorder %s144, %s158
    %p160 = scmp.eq.s32.totalorder %s24, 0
    %p161 = por %p159, %p160
    %s163 = sadd.s32 %s162, 1
    %p166 = scmp.eq.s32.totalorder %s18, 1
    %p167 = scmp.ne.s32.totalorder %s162, %s164
    %p168 = scmp.eq.s32.totalorder %s18, 0
    %p169 = por %p167, %p168
    %p170 = scmp.ne.s32.totalorder %s162, %s164
    %p171 = scmp.eq.s32.totalorder %s23, 1
    %p172 = por %p170, %p171
    %p173 = scmp.ne.s32.totalorder %s164, %s165
    %p174 = scmp.eq.s32.totalorder %s23, 0
    %p175 = por %p173, %p174
    %p176 = scmp.ne.s32.totalorder %s164, %s165
    %p177 = scmp.eq.s32.totalorder %s24, 1
    %p178 = por %p176, %p177
    %p180 = scmp.ne.s32.totalorder %s165, %s179
    %p181 = scmp.eq.s32.totalorder %s24, 0
    %p182 = por %p180, %p181
    %s184 = sadd.s32 %s183, 1
    %p187 = scmp.eq.s32.totalorder %s18, 1
    %p188 = scmp.ne.s32.totalorder %s183, %s185
    %p189 = scmp.eq.s32.totalorder %s18, 0
    %p190 = por %p188, %p189
    %p191 = scmp.ne.s32.totalorder %s183, %s185
    %p192 = scmp.eq.s32.totalorder %s23, 1
    %p193 = por %p191, %p192
    %p194 = scmp.ne.s32.totalorder %s185, %s186
    %p195 = scmp.eq.s32.totalorder %s23, 0
    %p196 = por %p194, %p195
    %p197 = scmp.ne.s32.totalorder %s185, %s186
    %p198 = scmp.eq.s32.totalorder %s24, 1
    %p199 = por %p197, %p198
    %p201 = scmp.ne.s32.totalorder %s186, %s200
    %p202 = scmp.eq.s32.totalorder %s24, 0
    %p203 = por %p201, %p202
    %s205 = sadd.s32 %s204, 1
    %p208 = scmp.eq.s32.totalorder %s18, 1
    %p209 = scmp.ne.s32.totalorder %s204, %s206
    %p210 = scmp.eq.s32.totalorder %s18, 0
    %p211 = por %p209, %p210
    %p212 = scmp.ne.s32.totalorder %s204, %s206
    %p213 = scmp.eq.s32.totalorder %s23, 1
    %p214 = por %p212, %p213
    %p215 = scmp.ne.s32.totalorder %s206, %s207
    %p216 = scmp.eq.s32.totalorder %s23, 0
    %p217 = por %p215, %p216
    %p218 = scmp.ne.s32.totalorder %s206, %s207
    %p219 = scmp.eq.s32.totalorder %s24, 1
    %p220 = por %p218, %p219
    %p222 = scmp.ne.s32.totalorder %s207, %s221
    %p223 = scmp.eq.s32.totalorder %s24, 0
    %p224 = por %p222, %p223
    %s226 = sadd.s32 %s225, 1
    %p229 = scmp.eq.s32.totalorder %s18, 1
    %p230 = scmp.ne.s32.totalorder %s225, %s227
    %p231 = scmp.eq.s32.totalorder %s18, 0
    %p232 = por %p230, %p231
    %p233 = scmp.ne.s32.totalorder %s225, %s227
    %p234 = scmp.eq.s32.totalorder %s23, 1
    %p235 = por %p233, %p234
    %p236 = scmp.ne.s32.totalorder %s227, %s228
    %p237 = scmp.eq.s32.totalorder %s23, 0
    %p238 = por %p236, %p237
    %p239 = scmp.ne.s32.totalorder %s227, %s228
    %p240 = scmp.eq.s32.totalorder %s24, 1
    %p241 = por %p239, %p240
    %p243 = scmp.ne.s32.totalorder %s228, %s242
    %p244 = scmp.eq.s32.totalorder %s24, 0
    %p245 = por %p243, %p244
    %s247 = sadd.s32 %s246, 1
    %p250 = scmp.eq.s32.totalorder %s18, 1
    %p251 = scmp.ne.s32.totalorder %s246, %s248
    %p252 = scmp.eq.s32.totalorder %s18, 0
    %p253 = por %p251, %p252
    %p254 = scmp.ne.s32.totalorder %s246, %s248
    %p255 = scmp.eq.s32.totalorder %s23, 1
    %p256 = por %p254, %p255
    %p257 = scmp.ne.s32.totalorder %s248, %s249
    %p258 = scmp.eq.s32.totalorder %s23, 0
    %p259 = por %p257, %p258
    %p260 = scmp.ne.s32.totalorder %s248, %s249
    %p261 = scmp.eq.s32.totalorder %s24, 1
    %p262 = por %p260, %p261
    %p264 = scmp.ne.s32.totalorder %s249, %s263
    %p265 = scmp.eq.s32.totalorder %s24, 0
    %p266 = por %p264, %p265
    %s268 = sadd.s32 %s267, 1
    %p271 = scmp.eq.s32.totalorder %s18, 1
    %p272 = scmp.ne.s32.totalorder %s267, %s269
    %p273 = scmp.eq.s32.totalorder %s18, 0
    %p274 = por %p272, %p273
    %p275 = scmp.ne.s32.totalorder %s267, %s269
    %p276 = scmp.eq.s32.totalorder %s23, 1
    %p277 = por %p275, %p276
    %p278 = scmp.ne.s32.totalorder %s269, %s270
    %p279 = scmp.eq.s32.totalorder %s23, 0
    %p280 = por %p278, %p279
    %p281 = scmp.ne.s32.totalorder %s269, %s270
    %p282 = scmp.eq.s32.totalorder %s24, 1
    %p283 = por %p281, %p282
    %p285 = scmp.ne.s32.totalorder %s270, %s284
    %p286 = scmp.eq.s32.totalorder %s24, 0
    %p287 = por %p285, %p286
    %s288 = ssub.s32 %s18, %s25
    %p289 = scmp.eq.s32.totalorder %s288, 0
    %s291 = sadd.s32 %s290, 1
    %s292 = scalar_select %p289, %s290, %s291
    %p295 = pneg %p289
    %p296 = scmp.eq.s32.totalorder %s18, 1
    %p297 = por %p295, %p296
    %p298 = scmp.ne.s32.totalorder %s290, %s293
    %p299 = scmp.eq.s32.totalorder %s18, 0
    %p300 = por %p298, %p299
    %p301 = scmp.ne.s32.totalorder %s290, %s293
    %p302 = scmp.eq.s32.totalorder %s23, 1
    %p303 = por %p301, %p302
    %p304 = scmp.ne.s32.totalorder %s293, %s294
    %p305 = scmp.eq.s32.totalorder %s23, 0
    %p306 = por %p304, %p305
    %p307 = scmp.ne.s32.totalorder %s293, %s294
    %p308 = scmp.eq.s32.totalorder %s24, 1
    %p309 = por %p307, %p308
    %p311 = scmp.ne.s32.totalorder %s294, %s310
    %p312 = scmp.eq.s32.totalorder %s24, 0
    %p313 = por %p311, %p312
    %p314 = scmp.le.s32.totalorder 1, %s18
    %p315 = scmp.lt.s32.totalorder %s18, 3
    %p316 = pnand %p314, %p315
    %p317 = pneg %p316
    // Predicated region
    $region9: #{run.15} parent=5 // pred_check
      _
    $region10: #{run.15} parent=5 // pred_check_branch
      %319 = sbr.rel (%p316) target = $region12
    $region11: #{run.15} parent=5 // pred_region
      %s320 = ssub.s32 %s18, 1
      // Predicated region
      $region13: #{run.15} parent=11 // pred_check
        %p321 = pneg %p91
      $region14: #{run.15} parent=11 // pred_check_branch
        %323 = sbr.rel (%p321) target = $region16
      $region15: #{run.15} parent=11 // pred_region
        _
      $region16: #{run.15} parent=11 // pred_fallthru
        _
      // Predicated region
      $region17: #{run.15} parent=11 // pred_check
        %p324 = pneg %p112
      $region18: #{run.15} parent=11 // pred_check_branch
        %326 = sbr.rel (%p324) target = $region20
      $region19: #{run.15} parent=11 // pred_region
        _
      $region20: #{run.15} parent=11 // pred_fallthru
        _
      // Predicated region
      $region21: #{run.15} parent=11 // pred_check
        %p327 = pneg %p133
      $region22: #{run.15} parent=11 // pred_check_branch
        %329 = sbr.rel (%p327) target = $region24
      $region23: #{run.15} parent=11 // pred_region
        _
      $region24: #{run.15} parent=11 // pred_fallthru
        _
      // Predicated region
      $region25: #{run.15} parent=11 // pred_check
        %p330 = pneg %p154
      $region26: #{run.15} parent=11 // pred_check_branch
        %332 = sbr.rel (%p330) target = $region28
      $region27: #{run.15} parent=11 // pred_region
        _
      $region28: #{run.15} parent=11 // pred_fallthru
        _
      // Predicated region
      $region29: #{run.15} parent=11 // pred_check
        %p333 = pneg %p175
      $region30: #{run.15} parent=11 // pred_check_branch
        %335 = sbr.rel (%p333) target = $region32
      $region31: #{run.15} parent=11 // pred_region
        _
      $region32: #{run.15} parent=11 // pred_fallthru
        _
      // Predicated region
      $region33: #{run.15} parent=11 // pred_check
        %p336 = pneg %p196
      $region34: #{run.15} parent=11 // pred_check_branch
        %338 = sbr.rel (%p336) target = $region36
      $region35: #{run.15} parent=11 // pred_region
        _
      $region36: #{run.15} parent=11 // pred_fallthru
        _
      // Predicated region
      $region37: #{run.15} parent=11 // pred_check
        %p339 = pneg %p217
      $region38: #{run.15} parent=11 // pred_check_branch
        %341 = sbr.rel (%p339) target = $region40
      $region39: #{run.15} parent=11 // pred_region
        _
      $region40: #{run.15} parent=11 // pred_fallthru
        _
      // Predicated region
      $region41: #{run.15} parent=11 // pred_check
        %p342 = pneg %p238
      $region42: #{run.15} parent=11 // pred_check_branch
        %344 = sbr.rel (%p342) target = $region44
      $region43: #{run.15} parent=11 // pred_region
        _
      $region44: #{run.15} parent=11 // pred_fallthru
        _
      // Predicated region
      $region45: #{run.15} parent=11 // pred_check
        %p345 = pneg %p259
      $region46: #{run.15} parent=11 // pred_check_branch
        %347 = sbr.rel (%p345) target = $region48
      $region47: #{run.15} parent=11 // pred_region
        _
      $region48: #{run.15} parent=11 // pred_fallthru
        _
      // Predicated region
      $region49: #{run.15} parent=11 // pred_check
        %p348 = pneg %p280
      $region50: #{run.15} parent=11 // pred_check_branch
        %350 = sbr.rel (%p348) target = $region52
      $region51: #{run.15} parent=11 // pred_region
        _
      $region52: #{run.15} parent=11 // pred_fallthru
        _
    $region12: #{run.15} parent=5 // pred_fallthru
      _
    %p351 = scmp.lt.s32.totalorder %s18, 2
    // Predicated region
    $region53: #{run.15} parent=5 // pred_check
      %p352 = pneg %p351
    $region54: #{run.15} parent=5 // pred_check_branch
      %354 = sbr.rel (%p352) target = $region56
    $region55: #{run.15} parent=5 // pred_region
      // Predicated region
      $region57: #{run.15} parent=55 // pred_check
        %p355 = pneg %p38
      $region58: #{run.15} parent=55 // pred_check_branch
        %357 = sbr.rel (%p355) target = $region60
      $region59: #{run.15} parent=55 // pred_region
        %p358 = scmp.lt.s32.totalorder %s18, 1
        %s359 = scalar_select %p358, %s18, 1
        %s360 = smul.addr %s359, 2
        %s361 = smul.addr %s360, 8
        %s362 = scalar_lea.vmem %s0, %s361
      $region60: #{run.15} parent=55 // pred_fallthru
        _
      // Predicated region
      $region61: #{run.15} parent=55 // pred_check
        %p363 = pneg %p64
      $region62: #{run.15} parent=55 // pred_check_branch
        %365 = sbr.rel (%p363) target = $region64
      $region63: #{run.15} parent=55 // pred_region
        %p366 = scmp.lt.s32.totalorder %s18, 1
        %s367 = scalar_select %p366, %s18, 1
        %s368 = smul.addr %s367, 2
        %s369 = smul.addr %s368, 8
        %s370 = scalar_lea.vmem %s1, %s369
      $region64: #{run.15} parent=55 // pred_fallthru
        _
    $region56: #{run.15} parent=5 // pred_fallthru
      _
    %p371 = scmp.le.s32.totalorder 1, %s18
    %p372 = scmp.lt.s32.totalorder %s18, 3
    %p373 = pnand %p371, %p372
    %p374 = pneg %p373
    // Predicated region
    $region65: #{run.15} parent=5 // pred_check
      _
    $region66: #{run.15} parent=5 // pred_check_branch
      %376 = sbr.rel (%p373) target = $region68
    $region67: #{run.15} parent=5 // pred_region
      %s377 = ssub.s32 %s18, 1
      %p378 = scmp.lt.s32.totalorder %s23, 1
      %s379 = scalar_select %p378, %s23, 1
      %s380 = smul.addr %s379, 2
      %s381 = smul.addr %s380, 8
      %s382 = scalar_lea.vmem %s0, %s381
      %p383 = pneg %p44
      %p384 = pneg %p41
      %p385 = scmp.lt.s32.totalorder %s23, 1
      %s386 = scalar_select %p385, %s23, 1
      %s387 = smul.addr %s386, 2
      %s388 = smul.addr %s387, 8
      %s389 = scalar_lea.vmem %s1, %s388
      %p390 = pneg %p70
      %p391 = pneg %p67
      %p392 = pneg %p91
      %p393 = pneg %p88
      %p394 = pneg %p112
      %p395 = pneg %p109
      %p396 = pneg %p133
      %p397 = pneg %p130
      %p398 = pneg %p154
      %p399 = pneg %p151
      %p400 = pneg %p175
      %p401 = pneg %p172
      %p402 = pneg %p196
      %p403 = pneg %p193
      %p404 = pneg %p217
      %p405 = pneg %p214
      %p406 = pneg %p238
      %p407 = pneg %p235
      %p408 = pneg %p259
      %p409 = pneg %p256
      %p410 = pneg %p280
      %p411 = pneg %p277
      %p412 = pneg %p306
      %p413 = pneg %p303
      %p414 = scmp.lt.s32.totalorder %s23, 1
      %s415 = scalar_select %p414, %s23, 1
      %s416 = smul.addr %s415, 2
      %s417 = smul.addr %s416, 8
      %s418 = scalar_lea.vmem %s12, %s417
      %p419 = scmp.lt.s32.totalorder %s23, 1
      %s420 = scalar_select %p419, %s23, 1
      %s421 = smul.addr %s420, 2
      %s422 = smul.addr %s421, 8
      %s423 = scalar_lea.vmem %s0, %s422
      %p424 = scmp.lt.s32.totalorder %s23, 1
      %s425 = scalar_select %p424, %s23, 1
      %s426 = smul.addr %s425, 2
      %s427 = smul.addr %s426, 8
      %s428 = scalar_lea.vmem %s1, %s427
      %p429 = scmp.lt.s32.totalorder %s23, 1
      %s430 = scalar_select %p429, %s23, 1
      %s431 = smul.addr %s430, 2
      %s432 = smul.addr %s431, 8
      %s433 = scalar_lea.vmem %s12, %s432
      %v435 = vld [vmem:[%s423] sm:$0xff]
      %v436 = vld [vmem:[%s423 + $0x8] sm:$0xff]
      %v437 = vld [vmem:[%s428] sm:$0xff]
      %v438 = vld [vmem:[%s428 + $0x8] sm:$0xff]
      %v439 = vadd.f32 %v435, %v437
      %v440 = vadd.f32 %v436, %v438
      %v441 = vpack.c.bf16 %v440, %v439
      %v442 = vld [vmem:[%s2] sm:$0xff]
      %v443 = vld [vmem:[%s2 + $0x8] sm:$0xff]
      %v444 = vld [vmem:[%s2 + $0x10] sm:$0xff]
      %v445 = vld [vmem:[%s2 + $0x18] sm:$0xff]
      %v446 = vpack.c.bf16 %v443, %v442
      %v447 = vpack.c.bf16 %v445, %v444
      %v448 = vld [vmem:[%s5] sm:$0x1]
      %v450 = vlaneseq
      %v451 = vshrl.u32 %v450, 7
      %v452 = vsub.s32 0, %v451
      %v453 = vrot.slane %v448, %v452
      %vm455 = vcmask 261120
      %v457 = vsel %vm455, %v441, 0
      %459 = vmatprep.subr.bf16.mxu0 0
      %460 = vmatpush1.bf16.msra.mxu0 %v446
      %461 = vmatprep.subr.bf16.mxu0 0
      %462 = vmatpush1.bf16.msra.mxu0 %v447
      %463 = vmatprep.subr.bf16.mxu0 0
      %464 = vmatpush1.bf16.msra.mxu0 0
      %465 = vmatprep.subr.bf16.mxu0 0
      %466 = vmatpush1.bf16.msra.mxu0 0
      %467 = vmatprep.subr.bf16.mxu0 0
      %468 = vmatpush1.bf16.msra.mxu0 0
      %469 = vmatprep.subr.bf16.mxu0 0
      %470 = vmatpush1.bf16.msra.mxu0 0
      %471 = vmatprep.subr.bf16.mxu0 0
      %472 = vmatpush1.bf16.msra.mxu0 0
      %473 = vmatprep.subr.bf16.mxu0 0
      %474 = vmatpush1.bf16.msra.mxu0 0
      %475 = vmatprep.subr.bf16.mxu0 0
      %476 = vmatpush1.bf16.msra.mxu0 0
      %477 = vmatprep.subr.bf16.mxu0 0
      %478 = vmatpush1.bf16.msra.mxu0 0
      %479 = vmatprep.subr.bf16.mxu0 0
      %480 = vmatpush1.bf16.msra.mxu0 0
      %481 = vmatprep.subr.bf16.mxu0 0
      %482 = vmatpush1.bf16.msra.mxu0 0
      %483 = vmatprep.subr.bf16.mxu0 0
      %484 = vmatpush1.bf16.msra.mxu0 0
      %485 = vmatprep.subr.bf16.mxu0 0
      %486 = vmatpush1.bf16.msra.mxu0 0
      %487 = vmatprep.subr.bf16.mxu0 0
      %488 = vmatpush1.bf16.msra.mxu0 0
      %489 = vmatprep.subr.bf16.mxu0 0
      %490 = vmatpush1.bf16.msra.mxu0 0
      %491 = vmatprep.mubr.bf16.mxu0 0
      %492 = vmatmul.mubr.bf16.gmra.mrb[0].mxu0 %v457
      %v493 = vpop.f32.mrb[0].mxu0
      %v494 = vadd.f32 %v453, %v493
      %v495 = vpop.f32.mrb[0].mxu0
      %v496 = vpop.f32.mrb[0].mxu0
      %v497 = vadd.f32 %v453, %v496
      %v498 = vpop.f32.mrb[0].mxu0
      %499 = vdwg.mxu0
      %v500 = vld [vmem:[%s3] sm:$0xff]
      %v501 = vld [vmem:[%s3 + $0x8] sm:$0xff]
      %v502 = vld [vmem:[%s3 + $0x10] sm:$0xff]
      %v503 = vld [vmem:[%s3 + $0x18] sm:$0xff]
      %v504 = vpack.c.bf16 %v501, %v500
      %v505 = vpack.c.bf16 %v503, %v502
      %v506 = vld [vmem:[%s6] sm:$0x1]
      %v508 = vlaneseq
      %v509 = vshrl.u32 %v508, 7
      %v510 = vsub.s32 0, %v509
      %v511 = vrot.slane %v506, %v510
      %513 = vmatprep.subr.bf16.mxu0 0
      %514 = vmatpush1.bf16.msra.mxu0 %v504
      %515 = vmatprep.subr.bf16.mxu0 0
      %516 = vmatpush1.bf16.msra.mxu0 %v505
      %517 = vmatprep.subr.bf16.mxu0 0
      %518 = vmatpush1.bf16.msra.mxu0 0
      %519 = vmatprep.subr.bf16.mxu0 0
      %520 = vmatpush1.bf16.msra.mxu0 0
      %521 = vmatprep.subr.bf16.mxu0 0
      %522 = vmatpush1.bf16.msra.mxu0 0
      %523 = vmatprep.subr.bf16.mxu0 0
      %524 = vmatpush1.bf16.msra.mxu0 0
      %525 = vmatprep.subr.bf16.mxu0 0
      %526 = vmatpush1.bf16.msra.mxu0 0
      %527 = vmatprep.subr.bf16.mxu0 0
      %528 = vmatpush1.bf16.msra.mxu0 0
      %529 = vmatprep.subr.bf16.mxu0 0
      %530 = vmatpush1.bf16.msra.mxu0 0
      %531 = vmatprep.subr.bf16.mxu0 0
      %532 = vmatpush1.bf16.msra.mxu0 0
      %533 = vmatprep.subr.bf16.mxu0 0
      %534 = vmatpush1.bf16.msra.mxu0 0
      %535 = vmatprep.subr.bf16.mxu0 0
      %536 = vmatpush1.bf16.msra.mxu0 0
      %537 = vmatprep.subr.bf16.mxu0 0
      %538 = vmatpush1.bf16.msra.mxu0 0
      %539 = vmatprep.subr.bf16.mxu0 0
      %540 = vmatpush1.bf16.msra.mxu0 0
      %541 = vmatprep.subr.bf16.mxu0 0
      %542 = vmatpush1.bf16.msra.mxu0 0
      %543 = vmatprep.subr.bf16.mxu0 0
      %544 = vmatpush1.bf16.msra.mxu0 0
      %545 = vmatprep.mubr.bf16.mxu0 0
      %546 = vmatmul.mubr.bf16.gmra.mrb[0].mxu0 %v457
      %v547 = vpop.f32.mrb[0].mxu0
      %v548 = vadd.f32 %v511, %v547
      %v549 = vpop.f32.mrb[0].mxu0
      %v550 = vpop.f32.mrb[0].mxu0
      %v551 = vadd.f32 %v511, %v550
      %v552 = vpop.f32.mrb[0].mxu0
      %553 = vdwg.mxu0
      %v554 = vpack.c.bf16 %v436, %v435
      %v555 = vld [vmem:[%s4] sm:$0xff]
      %v556 = vld [vmem:[%s4 + $0x8] sm:$0xff]
      %v557 = vld [vmem:[%s4 + $0x10] sm:$0xff]
      %v558 = vld [vmem:[%s4 + $0x18] sm:$0xff]
      %v559 = vpack.c.bf16 %v556, %v555
      %v560 = vpack.c.bf16 %v558, %v557
      %v561 = vld [vmem:[%s7] sm:$0x1]
      %v563 = vlaneseq
      %v564 = vshrl.u32 %v563, 7
      %v565 = vsub.s32 0, %v564
      %v566 = vrot.slane %v561, %v565
      %v569 = vsel %vm455, %v554, 0
      %571 = vmatprep.subr.bf16.mxu0 0
      %572 = vmatpush1.bf16.msra.mxu0 %v559
      %573 = vmatprep.subr.bf16.mxu0 0
      %574 = vmatpush1.bf16.msra.mxu0 %v560
      %575 = vmatprep.subr.bf16.mxu0 0
      %576 = vmatpush1.bf16.msra.mxu0 0
      %577 = vmatprep.subr.bf16.mxu0 0
      %578 = vmatpush1.bf16.msra.mxu0 0
      %579 = vmatprep.subr.bf16.mxu0 0
      %580 = vmatpush1.bf16.msra.mxu0 0
      %581 = vmatprep.subr.bf16.mxu0 0
      %582 = vmatpush1.bf16.msra.mxu0 0
      %583 = vmatprep.subr.bf16.mxu0 0
      %584 = vmatpush1.bf16.msra.mxu0 0
      %585 = vmatprep.subr.bf16.mxu0 0
      %586 = vmatpush1.bf16.msra.mxu0 0
      %587 = vmatprep.subr.bf16.mxu0 0
      %588 = vmatpush1.bf16.msra.mxu0 0
      %589 = vmatprep.subr.bf16.mxu0 0
      %590 = vmatpush1.bf16.msra.mxu0 0
      %591 = vmatprep.subr.bf16.mxu0 0
      %592 = vmatpush1.bf16.msra.mxu0 0
      %593 = vmatprep.subr.bf16.mxu0 0
      %594 = vmatpush1.bf16.msra.mxu0 0
      %595 = vmatprep.subr.bf16.mxu0 0
      %596 = vmatpush1.bf16.msra.mxu0 0
      %597 = vmatprep.subr.bf16.mxu0 0
      %598 = vmatpush1.bf16.msra.mxu0 0
      %599 = vmatprep.subr.bf16.mxu0 0
      %600 = vmatpush1.bf16.msra.mxu0 0
      %601 = vmatprep.subr.bf16.mxu0 0
      %602 = vmatpush1.bf16.msra.mxu0 0
      %603 = vmatprep.mubr.bf16.mxu0 0
      %604 = vmatmul.mubr.bf16.gmra.mrb[0].mxu0 %v569
      %v605 = vpop.f32.mrb[0].mxu0
      %v606 = vadd.f32 %v566, %v605
      %v607 = vpop.f32.mrb[0].mxu0
      %v608 = vpop.f32.mrb[0].mxu0
      %v609 = vadd.f32 %v566, %v608
      %v610 = vpop.f32.mrb[0].mxu0
      %611 = vdwg.mxu0
      %v612 = vpack.c.bf16 %v497, %v494
      %v613 = vpack.c.bf16 %v551, %v548
      %v614 = vpack.c.bf16 %v609, %v606
      %vm615 = vcmask 64512
      %v617 = vsel %vm615, %v612, 0
      %v620 = vsel %vm615, %v613, 0
      %622 = vmatprep.subr.bf16.mxu0 0
      %623 = vmatpush1.bf16.xpose.msra.mxu0 %v620
      %624 = vmatprep.subr.bf16.mxu0 0
      %625 = vmatpush1.bf16.xpose.msra.mxu0 0
      %626 = vmatprep.subr.bf16.mxu0 0
      %627 = vmatpush1.bf16.xpose.msra.mxu0 0
      %628 = vmatprep.subr.bf16.mxu0 0
      %629 = vmatpush1.bf16.xpose.msra.mxu0 0
      %630 = vmatprep.subr.bf16.mxu0 0
      %631 = vmatpush1.bf16.xpose.msra.mxu0 0
      %632 = vmatprep.subr.bf16.mxu0 0
      %633 = vmatpush1.bf16.xpose.msra.mxu0 0
      %634 = vmatprep.subr.bf16.mxu0 0
      %635 = vmatpush1.bf16.xpose.msra.mxu0 0
      %636 = vmatprep.subr.bf16.mxu0 0
      %637 = vmatpush1.bf16.xpose.msra.mxu0 0
      %638 = vmatprep.subr.bf16.mxu0 0
      %639 = vmatpush1.bf16.xpose.msra.mxu0 0
      %640 = vmatprep.subr.bf16.mxu0 0
      %641 = vmatpush1.bf16.xpose.msra.mxu0 0
      %642 = vmatprep.subr.bf16.mxu0 0
      %643 = vmatpush1.bf16.xpose.msra.mxu0 0
      %644 = vmatprep.subr.bf16.mxu0 0
      %645 = vmatpush1.bf16.xpose.msra.mxu0 0
      %646 = vmatprep.subr.bf16.mxu0 0
      %647 = vmatpush1.bf16.xpose.msra.mxu0 0
      %648 = vmatprep.subr.bf16.mxu0 0
      %649 = vmatpush1.bf16.xpose.msra.mxu0 0
      %650 = vmatprep.subr.bf16.mxu0 0
      %651 = vmatpush1.bf16.xpose.msra.mxu0 0
      %652 = vmatprep.subr.bf16.mxu0 0
      %653 = vmatpush1.bf16.xpose.msra.mxu0 0
      %654 = vmatprep.mubr.bf16.mxu0 0
      %655 = vmatmul.mubr.bf16.gmra.mrb[0].mxu0 %v617
      %v656 = vpop.f32.mrb[0].mxu0
      %v657 = vadd.f32 0.0, %v656
      %v658 = vpop.f32.mrb[0].mxu0
      %v659 = vpop.f32.mrb[0].mxu0
      %v660 = vadd.f32 0.0, %v659
      %v661 = vpop.f32.mrb[0].mxu0
      %662 = vdwg.mxu0
      %v663 = vmul.f32 %v657, 0.35355338
      %v664 = vmul.f32 %v660, 0.35355338
      %vm665 = vcmask 130048
      %v666 = vsel %vm665, %v663, -inf
      %667 = vmax.xlane.f32.xlu0 %v666
      %v668 = vpop.xlane.xlu0 %667
      %v669 = vsel %vm665, %v664, -inf
      %670 = vmax.xlane.f32.xlu0 %v669
      %v671 = vpop.xlane.xlu0 %670
      %v672 = vsub.f32 %v663, %v668
      %v673 = vsub.f32 %v664, %v671
      %v674 = vmul.f32 %v672, 1.442695
      %v675 = vpow.pop %v674
      %v676 = vmul.f32 %v673, 1.442695
      %v677 = vpow.pop %v676
      %v678 = vsel %vm665, %v675, 0.0
      %679 = vadd.xlane.f32.xlu0 %v678
      %v680 = vpop.xlane.xlu0 %679
      %v681 = vsel %vm665, %v677, 0.0
      %682 = vadd.xlane.f32.xlu0 %v681
      %v683 = vpop.xlane.xlu0 %682
      %v684 = vrcp.pop %v680
      %v685 = vrcp.pop %v683
      %v686 = vmul.f32 %v675, %v684
      %v687 = vmul.f32 %v677, %v685
      %v688 = vpack.c.bf16 %v687, %v686
      %v690 = vsel %vm665, %v688, 0
      %692 = vmatprep.subr.bf16.mxu0 0
      %693 = vmatpush1.bf16.msra.mxu0 %v614
      %694 = vmatprep.subr.bf16.mxu0 0
      %695 = vmatpush1.bf16.msra.mxu0 0
      %696 = vmatprep.subr.bf16.mxu0 0
      %697 = vmatpush1.bf16.msra.mxu0 0
      %698 = vmatprep.subr.bf16.mxu0 0
      %699 = vmatpush1.bf16.msra.mxu0 0
      %700 = vmatprep.subr.bf16.mxu0 0
      %701 = vmatpush1.bf16.msra.mxu0 0
      %702 = vmatprep.subr.bf16.mxu0 0
      %703 = vmatpush1.bf16.msra.mxu0 0
      %704 = vmatprep.subr.bf16.mxu0 0
      %705 = vmatpush1.bf16.msra.mxu0 0
      %706 = vmatprep.subr.bf16.mxu0 0
      %707 = vmatpush1.bf16.msra.mxu0 0
      %708 = vmatprep.subr.bf16.mxu0 0
      %709 = vmatpush1.bf16.msra.mxu0 0
      %710 = vmatprep.subr.bf16.mxu0 0
      %711 = vmatpush1.bf16.msra.mxu0 0
      %712 = vmatprep.subr.bf16.mxu0 0
      %713 = vmatpush1.bf16.msra.mxu0 0
      %714 = vmatprep.subr.bf16.mxu0 0
      %715 = vmatpush1.bf16.msra.mxu0 0
      %716 = vmatprep.subr.bf16.mxu0 0
      %717 = vmatpush1.bf16.msra.mxu0 0
      %718 = vmatprep.subr.bf16.mxu0 0
      %719 = vmatpush1.bf16.msra.mxu0 0
      %720 = vmatprep.subr.bf16.mxu0 0
      %721 = vmatpush1.bf16.msra.mxu0 0
      %722 = vmatprep.subr.bf16.mxu0 0
      %723 = vmatpush1.bf16.msra.mxu0 0
      %724 = vmatprep.mubr.bf16.mxu0 0
      %725 = vmatmul.mubr.bf16.gmra.mrb[0].mxu0 %v690
      %v726 = vpop.f32.mrb[0].mxu0
      %v727 = vadd.f32 0.0, %v726
      %v728 = vpop.f32.mrb[0].mxu0
      %v729 = vpop.f32.mrb[0].mxu0
      %v730 = vadd.f32 0.0, %v729
      %v731 = vpop.f32.mrb[0].mxu0
      %732 = vdwg.mxu0
      %v733 = vpack.c.bf16 %v730, %v727
      %v734 = vld [vmem:[%s8] sm:$0xff]
      %v735 = vpack.c.bf16 %v734, %v734
      %737 = vrot.lane.b32.xlu0 %v612, 120
      %v738 = vpop.permute.xlu0 %737
      %740 = vrot.lane.b32.xlu0 %v613, 120
      %v741 = vpop.permute.xlu0 %740
      %v743 = vsel %vm615, %v738, 0
      %v746 = vsel %vm615, %v741, 0
      %748 = vmatprep.subr.bf16.mxu0 0
      %749 = vmatpush1.bf16.xpose.msra.mxu0 %v746
      %750 = vmatprep.subr.bf16.mxu0 0
      %751 = vmatpush1.bf16.xpose.msra.mxu0 0
      %752 = vmatprep.subr.bf16.mxu0 0
      %753 = vmatpush1.bf16.xpose.msra.mxu0 0
      %754 = vmatprep.subr.bf16.mxu0 0
      %755 = vmatpush1.bf16.xpose.msra.mxu0 0
      %756 = vmatprep.subr.bf16.mxu0 0
      %757 = vmatpush1.bf16.xpose.msra.mxu0 0
      %758 = vmatprep.subr.bf16.mxu0 0
      %759 = vmatpush1.bf16.xpose.msra.mxu0 0
      %760 = vmatprep.subr.bf16.mxu0 0
      %761 = vmatpush1.bf16.xpose.msra.mxu0 0
      %762 = vmatprep.subr.bf16.mxu0 0
      %763 = vmatpush1.bf16.xpose.msra.mxu0 0
      %764 = vmatprep.subr.bf16.mxu0 0
      %765 = vmatpush1.bf16.xpose.msra.mxu0 0
      %766 = vmatprep.subr.bf16.mxu0 0
      %767 = vmatpush1.bf16.xpose.msra.mxu0 0
      %768 = vmatprep.subr.bf16.mxu0 0
      %769 = vmatpush1.bf16.xpose.msra.mxu0 0
      %770 = vmatprep.subr.bf16.mxu0 0
      %771 = vmatpush1.bf16.xpose.msra.mxu0 0
      %772 = vmatprep.subr.bf16.mxu0 0
      %773 = vmatpush1.bf16.xpose.msra.mxu0 0
      %774 = vmatprep.subr.bf16.mxu0 0
      %775 = vmatpush1.bf16.xpose.msra.mxu0 0
      %776 = vmatprep.subr.bf16.mxu0 0
      %777 = vmatpush1.bf16.xpose.msra.mxu0 0
      %778 = vmatprep.subr.bf16.mxu0 0
      %779 = vmatpush1.bf16.xpose.msra.mxu0 0
      %780 = vmatprep.mubr.bf16.mxu0 0
      %781 = vmatmul.mubr.bf16.gmra.mrb[0].mxu0 %v743
      %v782 = vpop.f32.mrb[0].mxu0
      %v783 = vadd.f32 0.0, %v782
      %v784 = vpop.f32.mrb[0].mxu0
      %v785 = vpop.f32.mrb[0].mxu0
      %v786 = vadd.f32 0.0, %v785
      %v787 = vpop.f32.mrb[0].mxu0
      %788 = vdwg.mxu0
      %v789 = vmul.f32 %v783, 0.35355338
      %v790 = vmul.f32 %v786, 0.35355338
      %v791 = vsel %vm665, %v789, -inf
      %792 = vmax.xlane.f32.xlu0 %v791
      %v793 = vpop.xlane.xlu0 %792
      %v794 = vsel %vm665, %v790, -inf
      %795 = vmax.xlane.f32.xlu0 %v794
      %v796 = vpop.xlane.xlu0 %795
      %v797 = vsub.f32 %v789, %v793
      %v798 = vsub.f32 %v790, %v796
      %v799 = vmul.f32 %v797, 1.442695
      %v800 = vpow.pop %v799
      %v801 = vmul.f32 %v798, 1.442695
      %v802 = vpow.pop %v801
      %v803 = vsel %vm665, %v800, 0.0
      %804 = vadd.xlane.f32.xlu0 %v803
      %v805 = vpop.xlane.xlu0 %804
      %v806 = vsel %vm665, %v802, 0.0
      %807 = vadd.xlane.f32.xlu0 %v806
      %v808 = vpop.xlane.xlu0 %807
      %v809 = vrcp.pop %v805
      %v810 = vrcp.pop %v808
      %v811 = vmul.f32 %v800, %v809
      %v812 = vmul.f32 %v802, %v810
      %v813 = vpack.c.bf16 %v812, %v811
      %815 = vrot.lane.b32.xlu0 %v614, 120
      %v816 = vpop.permute.xlu0 %815
      %v819 = vsel %vm665, %v813, 0
      %821 = vmatprep.subr.bf16.mxu0 0
      %822 = vmatpush1.bf16.msra.mxu0 %v816
      %823 = vmatprep.subr.bf16.mxu0 0
      %824 = vmatpush1.bf16.msra.mxu0 0
      %825 = vmatprep.subr.bf16.mxu0 0
      %826 = vmatpush1.bf16.msra.mxu0 0
      %827 = vmatprep.subr.bf16.mxu0 0
      %828 = vmatpush1.bf16.msra.mxu0 0
      %829 = vmatprep.subr.bf16.mxu0 0
      %830 = vmatpush1.bf16.msra.mxu0 0
      %831 = vmatprep.subr.bf16.mxu0 0
      %832 = vmatpush1.bf16.msra.mxu0 0
      %833 = vmatprep.subr.bf16.mxu0 0
      %834 = vmatpush1.bf16.msra.mxu0 0
      %835 = vmatprep.subr.bf16.mxu0 0
      %836 = vmatpush1.bf16.msra.mxu0 0
      %837 = vmatprep.subr.bf16.mxu0 0
      %838 = vmatpush1.bf16.msra.mxu0 0
      %839 = vmatprep.subr.bf16.mxu0 0
      %840 = vmatpush1.bf16.msra.mxu0 0
      %841 = vmatprep.subr.bf16.mxu0 0
      %842 = vmatpush1.bf16.msra.mxu0 0
      %843 = vmatprep.subr.bf16.mxu0 0
      %844 = vmatpush1.bf16.msra.mxu0 0
      %845 = vmatprep.subr.bf16.mxu0 0
      %846 = vmatpush1.bf16.msra.mxu0 0
      %847 = vmatprep.subr.bf16.mxu0 0
      %848 = vmatpush1.bf16.msra.mxu0 0
      %849 = vmatprep.subr.bf16.mxu0 0
      %850 = vmatpush1.bf16.msra.mxu0 0
      %851 = vmatprep.subr.bf16.mxu0 0
      %852 = vmatpush1.bf16.msra.mxu0 0
      %853 = vmatprep.mubr.bf16.mxu0 0
      %854 = vmatmul.mubr.bf16.gmra.mrb[0].mxu0 %v819
      %v855 = vpop.f32.mrb[0].mxu0
      %v856 = vadd.f32 0.0, %v855
      %v857 = vpop.f32.mrb[0].mxu0
      %v858 = vpop.f32.mrb[0].mxu0
      %v859 = vadd.f32 0.0, %v858
      %v860 = vpop.f32.mrb[0].mxu0
      %861 = vdwg.mxu0
      %v862 = vpack.c.bf16 %v859, %v856
      %v863 = vld [vmem:[%s8 + $0x8] sm:$0xff]
      %v864 = vpack.c.bf16 %v863, %v863
      %v866 = vsel %vm615, %v862, 0
      %vm868 = vcmask 1043456
      %v870 = vsel %vm868, %v864, 0
      %872 = vmatprep.subr.bf16.mxu0 0
      %873 = vmatpush1.bf16.msra.mxu0 %v870
      %874 = vmatprep.subr.bf16.mxu0 0
      %875 = vmatpush1.bf16.msra.mxu0 0
      %876 = vmatprep.subr.bf16.mxu0 0
      %877 = vmatpush1.bf16.msra.mxu0 0
      %878 = vmatprep.subr.bf16.mxu0 0
      %879 = vmatpush1.bf16.msra.mxu0 0
      %880 = vmatprep.subr.bf16.mxu0 0
      %881 = vmatpush1.bf16.msra.mxu0 0
      %882 = vmatprep.subr.bf16.mxu0 0
      %883 = vmatpush1.bf16.msra.mxu0 0
      %884 = vmatprep.subr.bf16.mxu0 0
      %885 = vmatpush1.bf16.msra.mxu0 0
      %886 = vmatprep.subr.bf16.mxu0 0
      %887 = vmatpush1.bf16.msra.mxu0 0
      %888 = vmatprep.subr.bf16.mxu0 0
      %889 = vmatpush1.bf16.msra.mxu0 0
      %890 = vmatprep.subr.bf16.mxu0 0
      %891 = vmatpush1.bf16.msra.mxu0 0
      %892 = vmatprep.subr.bf16.mxu0 0
      %893 = vmatpush1.bf16.msra.mxu0 0
      %894 = vmatprep.subr.bf16.mxu0 0
      %895 = vmatpush1.bf16.msra.mxu0 0
      %896 = vmatprep.subr.bf16.mxu0 0
      %897 = vmatpush1.bf16.msra.mxu0 0
      %898 = vmatprep.subr.bf16.mxu0 0
      %899 = vmatpush1.bf16.msra.mxu0 0
      %900 = vmatprep.subr.bf16.mxu0 0
      %901 = vmatpush1.bf16.msra.mxu0 0
      %902 = vmatprep.subr.bf16.mxu0 0
      %903 = vmatpush1.bf16.msra.mxu0 0
      %904 = vmatprep.mubr.bf16.mxu0 0
      %905 = vmatmul.mubr.bf16.gmra.mrb[0].mxu0 %v866
      %v906 = vpop.f32.mrb[0].mxu0
      %v907 = vadd.f32 0.0, %v906
      %v908 = vpop.f32.mrb[0].mxu0
      %v909 = vpop.f32.mrb[0].mxu0
      %v910 = vadd.f32 0.0, %v909
      %v911 = vpop.f32.mrb[0].mxu0
      %912 = vdwg.mxu0
      %v914 = vsel %vm615, %v733, 0
      %v917 = vsel %vm868, %v735, 0
      %919 = vmatprep.subr.bf16.mxu0 0
      %920 = vmatpush1.bf16.msra.mxu0 %v917
      %921 = vmatprep.subr.bf16.mxu0 0
      %922 = vmatpush1.bf16.msra.mxu0 0
      %923 = vmatprep.subr.bf16.mxu0 0
      %924 = vmatpush1.bf16.msra.mxu0 0
      %925 = vmatprep.subr.bf16.mxu0 0
      %926 = vmatpush1.bf16.msra.mxu0 0
      %927 = vmatprep.subr.bf16.mxu0 0
      %928 = vmatpush1.bf16.msra.mxu0 0
      %929 = vmatprep.subr.bf16.mxu0 0
      %930 = vmatpush1.bf16.msra.mxu0 0
      %931 = vmatprep.subr.bf16.mxu0 0
      %932 = vmatpush1.bf16.msra.mxu0 0
      %933 = vmatprep.subr.bf16.mxu0 0
      %934 = vmatpush1.bf16.msra.mxu0 0
      %935 = vmatprep.subr.bf16.mxu0 0
      %936 = vmatpush1.bf16.msra.mxu0 0
      %937 = vmatprep.subr.bf16.mxu0 0
      %938 = vmatpush1.bf16.msra.mxu0 0
      %939 = vmatprep.subr.bf16.mxu0 0
      %940 = vmatpush1.bf16.msra.mxu0 0
      %941 = vmatprep.subr.bf16.mxu0 0
      %942 = vmatpush1.bf16.msra.mxu0 0
      %943 = vmatprep.subr.bf16.mxu0 0
      %944 = vmatpush1.bf16.msra.mxu0 0
      %945 = vmatprep.subr.bf16.mxu0 0
      %946 = vmatpush1.bf16.msra.mxu0 0
      %947 = vmatprep.subr.bf16.mxu0 0
      %948 = vmatpush1.bf16.msra.mxu0 0
      %949 = vmatprep.subr.bf16.mxu0 0
      %950 = vmatpush1.bf16.msra.mxu0 0
      %951 = vmatprep.mubr.bf16.mxu0 0
      %952 = vmatmul.mubr.bf16.gmra.mrb[0].mxu0 %v914
      %v953 = vpop.f32.mrb[0].mxu0
      %v954 = vadd.f32 %v907, %v953
      %v955 = vpop.f32.mrb[0].mxu0
      %v956 = vpop.f32.mrb[0].mxu0
      %v957 = vadd.f32 %v910, %v956
      %v958 = vpop.f32.mrb[0].mxu0
      %959 = vdwg.mxu0
      %960 = vrot.lane.b32.xlu0 %v612, 112
      %v961 = vpop.permute.xlu0 %960
      %962 = vrot.lane.b32.xlu0 %v613, 112
      %v963 = vpop.permute.xlu0 %962
      %v965 = vsel %vm615, %v961, 0
      %v968 = vsel %vm615, %v963, 0
      %970 = vmatprep.subr.bf16.mxu0 0
      %971 = vmatpush1.bf16.xpose.msra.mxu0 %v968
      %972 = vmatprep.subr.bf16.mxu0 0
      %973 = vmatpush1.bf16.xpose.msra.mxu0 0
      %974 = vmatprep.subr.bf16.mxu0 0
      %975 = vmatpush1.bf16.xpose.msra.mxu0 0
      %976 = vmatprep.subr.bf16.mxu0 0
      %977 = vmatpush1.bf16.xpose.msra.mxu0 0
      %978 = vmatprep.subr.bf16.mxu0 0
      %979 = vmatpush1.bf16.xpose.msra.mxu0 0
      %980 = vmatprep.subr.bf16.mxu0 0
      %981 = vmatpush1.bf16.xpose.msra.mxu0 0
      %982 = vmatprep.subr.bf16.mxu0 0
      %983 = vmatpush1.bf16.xpose.msra.mxu0 0
      %984 = vmatprep.subr.bf16.mxu0 0
      %985 = vmatpush1.bf16.xpose.msra.mxu0 0
      %986 = vmatprep.subr.bf16.mxu0 0
      %987 = vmatpush1.bf16.xpose.msra.mxu0 0
      %988 = vmatprep.subr.bf16.mxu0 0
      %989 = vmatpush1.bf16.xpose.msra.mxu0 0
      %990 = vmatprep.subr.bf16.mxu0 0
      %991 = vmatpush1.bf16.xpose.msra.mxu0 0
      %992 = vmatprep.subr.bf16.mxu0 0
      %993 = vmatpush1.bf16.xpose.msra.mxu0 0
      %994 = vmatprep.subr.bf16.mxu0 0
      %995 = vmatpush1.bf16.xpose.msra.mxu0 0
      %996 = vmatprep.subr.bf16.mxu0 0
      %997 = vmatpush1.bf16.xpose.msra.mxu0 0
      %998 = vmatprep.subr.bf16.mxu0 0
      %999 = vmatpush1.bf16.xpose.msra.mxu0 0
      %1000 = vmatprep.subr.bf16.mxu0 0
      %1001 = vmatpush1.bf16.xpose.msra.mxu0 0
      %1002 = vmatprep.mubr.bf16.mxu0 0
      %1003 = vmatmul.mubr.bf16.gmra.mrb[0].mxu0 %v965
      %v1004 = vpop.f32.mrb[0].mxu0
      %v1005 = vadd.f32 0.0, %v1004
      %v1006 = vpop.f32.mrb[0].mxu0
      %v1007 = vpop.f32.mrb[0].mxu0
      %v1008 = vadd.f32 0.0, %v1007
      %v1009 = vpop.f32.mrb[0].mxu0
      %1010 = vdwg.mxu0
      %v1011 = vmul.f32 %v1005, 0.35355338
      %v1012 = vmul.f32 %v1008, 0.35355338
      %v1013 = vsel %vm665, %v1011, -inf
      %1014 = vmax.xlane.f32.xlu0 %v1013
      %v1015 = vpop.xlane.xlu0 %1014
      %v1016 = vsel %vm665, %v1012, -inf
      %1017 = vmax.xlane.f32.xlu0 %v1016
      %v1018 = vpop.xlane.xlu0 %1017
      %v1019 = vsub.f32 %v1011, %v1015
      %v1020 = vsub.f32 %v1012, %v1018
      %v1021 = vmul.f32 %v1019, 1.442695
      %v1022 = vpow.pop %v1021
      %v1023 = vmul.f32 %v1020, 1.442695
      %v1024 = vpow.pop %v1023
      %v1025 = vsel %vm665, %v1022, 0.0
      %1026 = vadd.xlane.f32.xlu0 %v1025
      %v1027 = vpop.xlane.xlu0 %1026
      %v1028 = vsel %vm665, %v1024, 0.0
      %1029 = vadd.xlane.f32.xlu0 %v1028
      %v1030 = vpop.xlane.xlu0 %1029
      %v1031 = vrcp.pop %v1027
      %v1032 = vrcp.pop %v1030
      %v1033 = vmul.f32 %v1022, %v1031
      %v1034 = vmul.f32 %v1024, %v1032
      %v1035 = vpack.c.bf16 %v1034, %v1033
      %1036 = vrot.lane.b32.xlu0 %v614, 112
      %v1037 = vpop.permute.xlu0 %1036
      %v1040 = vsel %vm665, %v1035, 0
      %1042 = vmatprep.subr.bf16.mxu0 0
      %1043 = vmatpush1.bf16.msra.mxu0 %v1037
      %1044 = vmatprep.subr.bf16.mxu0 0
      %1045 = vmatpush1.bf16.msra.mxu0 0
      %1046 = vmatprep.subr.bf16.mxu0 0
      %1047 = vmatpush1.bf16.msra.mxu0 0
      %1048 = vmatprep.subr.bf16.mxu0 0
      %1049 = vmatpush1.bf16.msra.mxu0 0
      %1050 = vmatprep.subr.bf16.mxu0 0
      %1051 = vmatpush1.bf16.msra.mxu0 0
      %1052 = vmatprep.subr.bf16.mxu0 0
      %1053 = vmatpush1.bf16.msra.mxu0 0
      %1054 = vmatprep.subr.bf16.mxu0 0
      %1055 = vmatpush1.bf16.msra.mxu0 0
      %1056 = vmatprep.subr.bf16.mxu0 0
      %1057 = vmatpush1.bf16.msra.mxu0 0
      %1058 = vmatprep.subr.bf16.mxu0 0
      %1059 = vmatpush1.bf16.msra.mxu0 0
      %1060 = vmatprep.subr.bf16.mxu0 0
      %1061 = vmatpush1.bf16.msra.mxu0 0
      %1062 = vmatprep.subr.bf16.mxu0 0
      %1063 = vmatpush1.bf16.msra.mxu0 0
      %1064 = vmatprep.subr.bf16.mxu0 0
      %1065 = vmatpush1.bf16.msra.mxu0 0
      %1066 = vmatprep.subr.bf16.mxu0 0
      %1067 = vmatpush1.bf16.msra.mxu0 0
      %1068 = vmatprep.subr.bf16.mxu0 0
      %1069 = vmatpush1.bf16.msra.mxu0 0
      %1070 = vmatprep.subr.bf16.mxu0 0
      %1071 = vmatpush1.bf16.msra.mxu0 0
      %1072 = vmatprep.subr.bf16.mxu0 0
      %1073 = vmatpush1.bf16.msra.mxu0 0
      %1074 = vmatprep.mubr.bf16.mxu0 0
      %1075 = vmatmul.mubr.bf16.gmra.mrb[0].mxu0 %v1040
      %v1076 = vpop.f32.mrb[0].mxu0
      %v1077 = vadd.f32 0.0, %v1076
      %v1078 = vpop.f32.mrb[0].mxu0
      %v1079 = vpop.f32.mrb[0].mxu0
      %v1080 = vadd.f32 0.0, %v1079
      %v1081 = vpop.f32.mrb[0].mxu0
      %1082 = vdwg.mxu0
      %v1083 = vpack.c.bf16 %v1080, %v1077
      %v1084 = vld [vmem:[%s8 + $0x10] sm:$0xff]
      %v1085 = vpack.c.bf16 %v1084, %v1084
      %v1087 = vsel %vm615, %v1083, 0
      %v1090 = vsel %vm868, %v1085, 0
      %1092 = vmatprep.subr.bf16.mxu0 0
      %1093 = vmatpush1.bf16.msra.mxu0 %v1090
      %1094 = vmatprep.subr.bf16.mxu0 0
      %1095 = vmatpush1.bf16.msra.mxu0 0
      %1096 = vmatprep.subr.bf16.mxu0 0
      %1097 = vmatpush1.bf16.msra.mxu0 0
      %1098 = vmatprep.subr.bf16.mxu0 0
      %1099 = vmatpush1.bf16.msra.mxu0 0
      %1100 = vmatprep.subr.bf16.mxu0 0
      %1101 = vmatpush1.bf16.msra.mxu0 0
      %1102 = vmatprep.subr.bf16.mxu0 0
      %1103 = vmatpush1.bf16.msra.mxu0 0
      %1104 = vmatprep.subr.bf16.mxu0 0
      %1105 = vmatpush1.bf16.msra.mxu0 0
      %1106 = vmatprep.subr.bf16.mxu0 0
      %1107 = vmatpush1.bf16.msra.mxu0 0
      %1108 = vmatprep.subr.bf16.mxu0 0
      %1109 = vmatpush1.bf16.msra.mxu0 0
      %1110 = vmatprep.subr.bf16.mxu0 0
      %1111 = vmatpush1.bf16.msra.mxu0 0
      %1112 = vmatprep.subr.bf16.mxu0 0
      %1113 = vmatpush1.bf16.msra.mxu0 0
      %1114 = vmatprep.subr.bf16.mxu0 0
      %1115 = vmatpush1.bf16.msra.mxu0 0
      %1116 = vmatprep.subr.bf16.mxu0 0
      %1117 = vmatpush1.bf16.msra.mxu0 0
      %1118 = vmatprep.subr.bf16.mxu0 0
      %1119 = vmatpush1.bf16.msra.mxu0 0
      %1120 = vmatprep.subr.bf16.mxu0 0
      %1121 = vmatpush1.bf16.msra.mxu0 0
      %1122 = vmatprep.subr.bf16.mxu0 0
      %1123 = vmatpush1.bf16.msra.mxu0 0
      %1124 = vmatprep.mubr.bf16.mxu0 0
      %1125 = vmatmul.mubr.bf16.gmra.mrb[0].mxu0 %v1087
      %v1126 = vpop.f32.mrb[0].mxu0
      %v1127 = vadd.f32 0.0, %v1126
      %v1128 = vpop.f32.mrb[0].mxu0
      %v1129 = vpop.f32.mrb[0].mxu0
      %v1130 = vadd.f32 0.0, %v1129
      %v1131 = vpop.f32.mrb[0].mxu0
      %1132 = vdwg.mxu0
      %v1133 = vadd.f32 %v954, %v1127
      %v1134 = vadd.f32 %v957, %v1130
      %1135 = vrot.lane.b32.xlu0 %v612, 104
      %v1136 = vpop.permute.xlu0 %1135
      %1137 = vrot.lane.b32.xlu0 %v613, 104
      %v1138 = vpop.permute.xlu0 %1137
      %v1140 = vsel %vm615, %v1136, 0
      %v1143 = vsel %vm615, %v1138, 0
      %1145 = vmatprep.subr.bf16.mxu0 0
      %1146 = vmatpush1.bf16.xpose.msra.mxu0 %v1143
      %1147 = vmatprep.subr.bf16.mxu0 0
      %1148 = vmatpush1.bf16.xpose.msra.mxu0 0
      %1149 = vmatprep.subr.bf16.mxu0 0
      %1150 = vmatpush1.bf16.xpose.msra.mxu0 0
      %1151 = vmatprep.subr.bf16.mxu0 0
      %1152 = vmatpush1.bf16.xpose.msra.mxu0 0
      %1153 = vmatprep.subr.bf16.mxu0 0
      %1154 = vmatpush1.bf16.xpose.msra.mxu0 0
      %1155 = vmatprep.subr.bf16.mxu0 0
      %1156 = vmatpush1.bf16.xpose.msra.mxu0 0
      %1157 = vmatprep.subr.bf16.mxu0 0
      %1158 = vmatpush1.bf16.xpose.msra.mxu0 0
      %1159 = vmatprep.subr.bf16.mxu0 0
      %1160 = vmatpush1.bf16.xpose.msra.mxu0 0
      %1161 = vmatprep.subr.bf16.mxu0 0
      %1162 = vmatpush1.bf16.xpose.msra.mxu0 0
      %1163 = vmatprep.subr.bf16.mxu0 0
      %1164 = vmatpush1.bf16.xpose.msra.mxu0 0
      %1165 = vmatprep.subr.bf16.mxu0 0
      %1166 = vmatpush1.bf16.xpose.msra.mxu0 0
      %1167 = vmatprep.subr.bf16.mxu0 0
      %1168 = vmatpush1.bf16.xpose.msra.mxu0 0
      %1169 = vmatprep.subr.bf16.mxu0 0
      %1170 = vmatpush1.bf16.xpose.msra.mxu0 0
      %1171 = vmatprep.subr.bf16.mxu0 0
      %1172 = vmatpush1.bf16.xpose.msra.mxu0 0
      %1173 = vmatprep.subr.bf16.mxu0 0
      %1174 = vmatpush1.bf16.xpose.msra.mxu0 0
      %1175 = vmatprep.subr.bf16.mxu0 0
      %1176 = vmatpush1.bf16.xpose.msra.mxu0 0
      %1177 = vmatprep.mubr.bf16.mxu0 0
      %1178 = vmatmul.mubr.bf16.gmra.mrb[0].mxu0 %v1140
      %v1179 = vpop.f32.mrb[0].mxu0
      %v1180 = vadd.f32 0.0, %v1179
      %v1181 = vpop.f32.mrb[0].mxu0
      %v1182 = vpop.f32.mrb[0].mxu0
      %v1183 = vadd.f32 0.0, %v1182
      %v1184 = vpop.f32.mrb[0].mxu0
      %1185 = vdwg.mxu0
      %v1186 = vmul.f32 %v1180, 0.35355338
      %v1187 = vmul.f32 %v1183, 0.35355338
      %v1188 = vsel %vm665, %v1186, -inf
      %1189 = vmax.xlane.f32.xlu0 %v1188
      %v1190 = vpop.xlane.xlu0 %1189
      %v1191 = vsel %vm665, %v1187, -inf
      %1192 = vmax.xlane.f32.xlu0 %v1191
      %v1193 = vpop.xlane.xlu0 %1192
      %v1194 = vsub.f32 %v1186, %v1190
      %v1195 = vsub.f32 %v1187, %v1193
      %v1196 = vmul.f32 %v1194, 1.442695
      %v1197 = vpow.pop %v1196
      %v1198 = vmul.f32 %v1195, 1.442695
      %v1199 = vpow.pop %v1198
      %v1200 = vsel %vm665, %v1197, 0.0
      %1201 = vadd.xlane.f32.xlu0 %v1200
      %v1202 = vpop.xlane.xlu0 %1201
      %v1203 = vsel %vm665, %v1199, 0.0
      %1204 = vadd.xlane.f32.xlu0 %v1203
      %v1205 = vpop.xlane.xlu0 %1204
      %v1206 = vrcp.pop %v1202
      %v1207 = vrcp.pop %v1205
      %v1208 = vmul.f32 %v1197, %v1206
      %v1209 = vmul.f32 %v1199, %v1207
      %v1210 = vpack.c.bf16 %v1209, %v1208
      %1211 = vrot.lane.b32.xlu0 %v614, 104
      %v1212 = vpop.permute.xlu0 %1211
      %v1215 = vsel %vm665, %v1210, 0
      %1217 = vmatprep.subr.bf16.mxu0 0
      %1218 = vmatpush1.bf16.msra.mxu0 %v1212
      %1219 = vmatprep.subr.bf16.mxu0 0
      %1220 = vmatpush1.bf16.msra.mxu0 0
      %1221 = vmatprep.subr.bf16.mxu0 0
      %1222 = vmatpush1.bf16.msra.mxu0 0
      %1223 = vmatprep.subr.bf16.mxu0 0
      %1224 = vmatpush1.bf16.msra.mxu0 0
      %1225 = vmatprep.subr.bf16.mxu0 0
      %1226 = vmatpush1.bf16.msra.mxu0 0
      %1227 = vmatprep.subr.bf16.mxu0 0
      %1228 = vmatpush1.bf16.msra.mxu0 0
      %1229 = vmatprep.subr.bf16.mxu0 0
      %1230 = vmatpush1.bf16.msra.mxu0 0
      %1231 = vmatprep.subr.bf16.mxu0 0
      %1232 = vmatpush1.bf16.msra.mxu0 0
      %1233 = vmatprep.subr.bf16.mxu0 0
      %1234 = vmatpush1.bf16.msra.mxu0 0
      %1235 = vmatprep.subr.bf16.mxu0 0
      %1236 = vmatpush1.bf16.msra.mxu0 0
      %1237 = vmatprep.subr.bf16.mxu0 0
      %1238 = vmatpush1.bf16.msra.mxu0 0
      %1239 = vmatprep.subr.bf16.mxu0 0
      %1240 = vmatpush1.bf16.msra.mxu0 0
      %1241 = vmatprep.subr.bf16.mxu0 0
      %1242 = vmatpush1.bf16.msra.mxu0 0
      %1243 = vmatprep.subr.bf16.mxu0 0
      %1244 = vmatpush1.bf16.msra.mxu0 0
      %1245 = vmatprep.subr.bf16.mxu0 0
      %1246 = vmatpush1.bf16.msra.mxu0 0
      %1247 = vmatprep.subr.bf16.mxu0 0
      %1248 = vmatpush1.bf16.msra.mxu0 0
      %1249 = vmatprep.mubr.bf16.mxu0 0
      %1250 = vmatmul.mubr.bf16.gmra.mrb[0].mxu0 %v1215
      %v1251 = vpop.f32.mrb[0].mxu0
      %v1252 = vadd.f32 0.0, %v1251
      %v1253 = vpop.f32.mrb[0].mxu0
      %v1254 = vpop.f32.mrb[0].mxu0
      %v1255 = vadd.f32 0.0, %v1254
      %v1256 = vpop.f32.mrb[0].mxu0
      %1257 = vdwg.mxu0
      %v1258 = vpack.c.bf16 %v1255, %v1252
      %v1259 = vld [vmem:[%s8 + $0x18] sm:$0xff]
      %v1260 = vpack.c.bf16 %v1259, %v1259
      %v1262 = vsel %vm615, %v1258, 0
      %v1265 = vsel %vm868, %v1260, 0
      %1267 = vmatprep.subr.bf16.mxu0 0
      %1268 = vmatpush1.bf16.msra.mxu0 %v1265
      %1269 = vmatprep.subr.bf16.mxu0 0
      %1270 = vmatpush1.bf16.msra.mxu0 0
      %1271 = vmatprep.subr.bf16.mxu0 0
      %1272 = vmatpush1.bf16.msra.mxu0 0
      %1273 = vmatprep.subr.bf16.mxu0 0
      %1274 = vmatpush1.bf16.msra.mxu0 0
      %1275 = vmatprep.subr.bf16.mxu0 0
      %1276 = vmatpush1.bf16.msra.mxu0 0
      %1277 = vmatprep.subr.bf16.mxu0 0
      %1278 = vmatpush1.bf16.msra.mxu0 0
      %1279 = vmatprep.subr.bf16.mxu0 0
      %1280 = vmatpush1.bf16.msra.mxu0 0
      %1281 = vmatprep.subr.bf16.mxu0 0
      %1282 = vmatpush1.bf16.msra.mxu0 0
      %1283 = vmatprep.subr.bf16.mxu0 0
      %1284 = vmatpush1.bf16.msra.mxu0 0
      %1285 = vmatprep.subr.bf16.mxu0 0
      %1286 = vmatpush1.bf16.msra.mxu0 0
      %1287 = vmatprep.subr.bf16.mxu0 0
      %1288 = vmatpush1.bf16.msra.mxu0 0
      %1289 = vmatprep.subr.bf16.mxu0 0
      %1290 = vmatpush1.bf16.msra.mxu0 0
      %1291 = vmatprep.subr.bf16.mxu0 0
      %1292 = vmatpush1.bf16.msra.mxu0 0
      %1293 = vmatprep.subr.bf16.mxu0 0
      %1294 = vmatpush1.bf16.msra.mxu0 0
      %1295 = vmatprep.subr.bf16.mxu0 0
      %1296 = vmatpush1.bf16.msra.mxu0 0
      %1297 = vmatprep.subr.bf16.mxu0 0
      %1298 = vmatpush1.bf16.msra.mxu0 0
      %1299 = vmatprep.mubr.bf16.mxu0 0
      %1300 = vmatmul.mubr.bf16.gmra.mrb[0].mxu0 %v1262
      %v1301 = vpop.f32.mrb[0].mxu0
      %v1302 = vadd.f32 0.0, %v1301
      %v1303 = vpop.f32.mrb[0].mxu0
      %v1304 = vpop.f32.mrb[0].mxu0
      %v1305 = vadd.f32 0.0, %v1304
      %v1306 = vpop.f32.mrb[0].mxu0
      %1307 = vdwg.mxu0
      %v1308 = vadd.f32 %v1133, %v1302
      %v1309 = vadd.f32 %v1134, %v1305
      %v1310 = vld [vmem:[%s9] sm:$0x1]
      %v1312 = vlaneseq
      %v1313 = vshrl.u32 %v1312, 7
      %v1314 = vsub.s32 0, %v1313
      %v1315 = vrot.slane %v1310, %v1314
      %v1317 = vadd.f32 %v1308, %v1315
      %v1318 = vadd.f32 %v1309, %v1315
      %v1319 = vadd.f32 %v435, %v1317
      %v1320 = vadd.f32 %v436, %v1318
      %v1321 = vsel %vm455, %v1319, 0.0
      %1322 = vadd.xlane.f32.xlu0 %v1321
      %v1323 = vpop.xlane.xlu0 %1322
      %v1324 = vsel %vm455, %v1320, 0.0
      %1325 = vadd.xlane.f32.xlu0 %v1324
      %v1326 = vpop.xlane.xlu0 %1325
      %v1327 = vrcp.pop 32.0
      %v1328 = vmul.f32 %v1323, %v1327
      %v1329 = vmul.f32 %v1326, %v1327
      %v1330 = vsub.f32 %v1319, %v1328
      %v1331 = vsub.f32 %v1320, %v1329
      %v1332 = vmul.f32 %v1330, %v1330
      %v1333 = vmul.f32 %v1331, %v1331
      %v1334 = vsel %vm455, %v1332, 0.0
      %1335 = vadd.xlane.f32.xlu0 %v1334
      %v1336 = vpop.xlane.xlu0 %1335
      %v1337 = vsel %vm455, %v1333, 0.0
      %1338 = vadd.xlane.f32.xlu0 %v1337
      %v1339 = vpop.xlane.xlu0 %1338
      %v1340 = vmul.f32 %v1336, %v1327
      %v1341 = vmul.f32 %v1339, %v1327
      %v1342 = vadd.f32 %v1340, 1e-05
      %v1343 = vadd.f32 %v1341, 1e-05
      %v1344 = vrsqrt.pop %v1342
      %v1345 = vrsqrt.pop %v1343
      %v1346 = vmul.f32 %v1330, %v1344
      %v1347 = vmul.f32 %v1331, %v1345
      %v1348 = vld [vmem:[%s10] sm:$0x1]
      %v1350 = vlaneseq
      %v1351 = vshrl.u32 %v1350, 7
      %v1352 = vsub.s32 0, %v1351
      %v1353 = vrot.slane %v1348, %v1352
      %v1355 = vmul.f32 %v1346, %v1353
      %v1356 = vmul.f32 %v1347, %v1353
      %v1357 = vld [vmem:[%s11] sm:$0x1]
      %v1359 = vlaneseq
      %v1360 = vshrl.u32 %v1359, 7
      %v1361 = vsub.s32 0, %v1360
      %v1362 = vrot.slane %v1357, %v1361
      %v1364 = vadd.f32 %v1355, %v1362
      %v1365 = vadd.f32 %v1356, %v1362
      %1366 = vst.msk [vmem:[%s433] sm:$0xff] %vm455, %v1364
      %1367 = vst.msk [vmem:[%s433 + $0x8] sm:$0xff] %vm455, %v1365
      %p1368 = scmp.lt.s32.totalorder %s23, 1
      %s1369 = scalar_select %p1368, %s23, 1
      %s1370 = smul.addr %s1369, 2
      %s1371 = smul.addr %s1370, 8
      %s1372 = scalar_lea.vmem %s12, %s1371
      // Predicated region
      $region69: #{run.15} parent=67 // pred_check
        %p1373 = pneg %p303
      $region70: #{run.15} parent=67 // pred_check_branch
        %1375 = sbr.rel (%p1373) target = $region72
      $region71: #{run.15} parent=67 // pred_region
        _
      $region72: #{run.15} parent=67 // pred_fallthru
        _
    $region68: #{run.15} parent=5 // pred_fallthru
      _
    %p1376 = scmp.le.s32.totalorder 2, %s18
    // Predicated region
    $region73: #{run.15} parent=5 // pred_check
      %p1377 = pneg %p1376
    $region74: #{run.15} parent=5 // pred_check_branch
      %1379 = sbr.rel (%p1377) target = $region76
    $region75: #{run.15} parent=5 // pred_region
      %s1380 = ssub.s32 %s18, 2
      // Predicated region
      $region77: #{run.15} parent=75 // pred_check
        %p1381 = pneg %p309
      $region78: #{run.15} parent=75 // pred_check_branch
        %1383 = sbr.rel (%p1381) target = $region80
      $region79: #{run.15} parent=75 // pred_region
        %p1384 = scmp.lt.s32.totalorder %s24, 1
        %s1385 = scalar_select %p1384, %s24, 1
        %s1386 = smul.addr %s1385, 2
        %s1387 = smul.addr %s1386, 8
        %s1388 = scalar_lea.vmem %s12, %s1387
      $region80: #{run.15} parent=75 // pred_fallthru
        _
    $region76: #{run.15} parent=5 // pred_fallthru
      _
  $region6: #{run.15} parent=0 // loop_footer
    %s22 = sadd.s32 1, %s18
  $region7: #{run.15} parent=0 // loop_footer_branch
    %17 = sbr.rel target = $region3
  $region8: #{run.15} parent=0 // loop_exit
    _

// kernel: run.16
$region0: #{run.16}
  #allocation0 [shape = 'u32[]', space=smem, size = 0x4, offset = 0x4, fixed_abs, tag = 'smem constant byte address 0x4 - core index']
  #allocation1 [shape = 'u32[144,128]{1,0:T(1,128)}', space=vmem, size = 0x12000, scoped, tag = 'internal scratch']
  %s0 = inlined_call_operand.vmem [shape: f32[160,32], index: 0, kind: input, shape index: {}]
  %s1 = inlined_call_operand.vmem [shape: f32[32,32], index: 1, kind: input, shape index: {}]
  %s2 = inlined_call_operand.vmem [shape: f32[1,32], index: 2, kind: input, shape index: {}]
  %s3 = inlined_call_operand.vmem [shape: f32[160,32], index: 3, kind: output, shape index: {}]
  %s4 = sld [smem:[#allocation0]]
  $region22: #{run.16} parent=0
    _
  %s6 = ssub.s32 1, %s4
  %s7 = scalar_select 0, %s6, %s4
  // Predicated region
  $region2: #{run.16} parent=0 // pred_check
    _
  $region3: #{run.16} parent=0 // pred_check_branch
    %9 = sbr.rel (0) target = $region5
  $region4: #{run.16} parent=0 // pred_region
    _
  $region5: #{run.16} parent=0 // pred_fallthru
    _
  // Predicated region
  $region6: #{run.16} parent=0 // pred_check
    _
  $region7: #{run.16} parent=0 // pred_check_branch
    %11 = sbr.rel (0) target = $region9
  $region8: #{run.16} parent=0 // pred_region
    _
  $region9: #{run.16} parent=0 // pred_fallthru
    _
  // Predicated region
  $region10: #{run.16} parent=0 // pred_check
    _
  $region11: #{run.16} parent=0 // pred_check_branch
    %13 = sbr.rel (0) target = $region13
  $region12: #{run.16} parent=0 // pred_region
    _
  $region13: #{run.16} parent=0 // pred_fallthru
    _
  %v15 = vld [vmem:[%s0] sm:$0xff]
  %v16 = vld [vmem:[%s0 + $0x8] sm:$0xff]
  %v17 = vld [vmem:[%s0 + $0x10] sm:$0xff]
  %v18 = vld [vmem:[%s0 + $0x18] sm:$0xff]
  %v19 = vld [vmem:[%s0 + $0x20] sm:$0xff]
  %v20 = vld [vmem:[%s0 + $0x28] sm:$0xff]
  %v21 = vld [vmem:[%s0 + $0x30] sm:$0xff]
  %v22 = vld [vmem:[%s0 + $0x38] sm:$0xff]
  %v23 = vld [vmem:[%s0 + $0x40] sm:$0xff]
  %v24 = vld [vmem:[%s0 + $0x48] sm:$0xff]
  %v25 = vld [vmem:[%s0 + $0x50] sm:$0xff]
  %v26 = vld [vmem:[%s0 + $0x58] sm:$0xff]
  %v27 = vld [vmem:[%s0 + $0x60] sm:$0xff]
  %v28 = vld [vmem:[%s0 + $0x68] sm:$0xff]
  %v29 = vld [vmem:[%s0 + $0x70] sm:$0xff]
  %v30 = vld [vmem:[%s0 + $0x78] sm:$0xff]
  %v31 = vld [vmem:[%s0 + $0x80] sm:$0xff]
  %v32 = vld [vmem:[%s0 + $0x88] sm:$0xff]
  %v33 = vld [vmem:[%s0 + $0x90] sm:$0xff]
  %v34 = vld [vmem:[%s0 + $0x98] sm:$0xff]
  %v35 = vpack.c.bf16 %v16, %v15
  %v36 = vpack.c.bf16 %v18, %v17
  %v37 = vpack.c.bf16 %v20, %v19
  %v38 = vpack.c.bf16 %v22, %v21
  %v39 = vpack.c.bf16 %v24, %v23
  %v40 = vpack.c.bf16 %v26, %v25
  %v41 = vpack.c.bf16 %v28, %v27
  %v42 = vpack.c.bf16 %v30, %v29
  %v43 = vpack.c.bf16 %v32, %v31
  %v44 = vpack.c.bf16 %v34, %v33
  %v45 = vld [vmem:[%s1] sm:$0xff]
  %v46 = vld [vmem:[%s1 + $0x8] sm:$0xff]
  %v47 = vld [vmem:[%s1 + $0x10] sm:$0xff]
  %v48 = vld [vmem:[%s1 + $0x18] sm:$0xff]
  %v49 = vpack.c.bf16 %v46, %v45
  %v50 = vpack.c.bf16 %v48, %v47
  %v51 = vld [vmem:[%s2] sm:$0x1]
  %v53 = vlaneseq
  %v54 = vshrl.u32 %v53, 7
  %v55 = vsub.s32 0, %v54
  %v56 = vrot.slane %v51, %v55
  %vm58 = vcmask 261120
  %v60 = vsel %vm58, %v35, 0
  %v63 = vsel %vm58, %v36, 0
  %v66 = vsel %vm58, %v37, 0
  %v69 = vsel %vm58, %v38, 0
  %v72 = vsel %vm58, %v39, 0
  %v75 = vsel %vm58, %v40, 0
  %v78 = vsel %vm58, %v41, 0
  %v81 = vsel %vm58, %v42, 0
  %v84 = vsel %vm58, %v43, 0
  %v87 = vsel %vm58, %v44, 0
  %89 = vmatprep.subr.bf16.mxu0 0
  %90 = vmatpush1.bf16.msra.mxu0 %v49
  %91 = vmatprep.subr.bf16.mxu0 0
  %92 = vmatpush1.bf16.msra.mxu0 %v50
  %93 = vmatprep.subr.bf16.mxu0 0
  %94 = vmatpush1.bf16.msra.mxu0 0
  %95 = vmatprep.subr.bf16.mxu0 0
  %96 = vmatpush1.bf16.msra.mxu0 0
  %97 = vmatprep.subr.bf16.mxu0 0
  %98 = vmatpush1.bf16.msra.mxu0 0
  %99 = vmatprep.subr.bf16.mxu0 0
  %100 = vmatpush1.bf16.msra.mxu0 0
  %101 = vmatprep.subr.bf16.mxu0 0
  %102 = vmatpush1.bf16.msra.mxu0 0
  %103 = vmatprep.subr.bf16.mxu0 0
  %104 = vmatpush1.bf16.msra.mxu0 0
  %105 = vmatprep.subr.bf16.mxu0 0
  %106 = vmatpush1.bf16.msra.mxu0 0
  %107 = vmatprep.subr.bf16.mxu0 0
  %108 = vmatpush1.bf16.msra.mxu0 0
  %109 = vmatprep.subr.bf16.mxu0 0
  %110 = vmatpush1.bf16.msra.mxu0 0
  %111 = vmatprep.subr.bf16.mxu0 0
  %112 = vmatpush1.bf16.msra.mxu0 0
  %113 = vmatprep.subr.bf16.mxu0 0
  %114 = vmatpush1.bf16.msra.mxu0 0
  %115 = vmatprep.subr.bf16.mxu0 0
  %116 = vmatpush1.bf16.msra.mxu0 0
  %117 = vmatprep.subr.bf16.mxu0 0
  %118 = vmatpush1.bf16.msra.mxu0 0
  %119 = vmatprep.subr.bf16.mxu0 0
  %120 = vmatpush1.bf16.msra.mxu0 0
  %121 = vmatprep.mubr.bf16.mxu0 0
  %122 = vmatmul.mubr.bf16.gmra.mrb[0].mxu0 %v60
  %v123 = vpop.f32.mrb[0].mxu0
  %v124 = vadd.f32 %v56, %v123
  %v125 = vpop.f32.mrb[0].mxu0
  %v126 = vpop.f32.mrb[0].mxu0
  %v127 = vadd.f32 %v56, %v126
  %v128 = vpop.f32.mrb[0].mxu0
  %129 = vmatprep.mubr.bf16.mxu0 0
  %130 = vmatmul.mubr.bf16.gmra.mrb[0].mxu0 %v63
  %v131 = vpop.f32.mrb[0].mxu0
  %v132 = vadd.f32 %v56, %v131
  %v133 = vpop.f32.mrb[0].mxu0
  %v134 = vpop.f32.mrb[0].mxu0
  %v135 = vadd.f32 %v56, %v134
  %v136 = vpop.f32.mrb[0].mxu0
  %137 = vmatprep.mubr.bf16.mxu0 0
  %138 = vmatmul.mubr.bf16.gmra.mrb[0].mxu0 %v66
  %v139 = vpop.f32.mrb[0].mxu0
  %v140 = vadd.f32 %v56, %v139
  %v141 = vpop.f32.mrb[0].mxu0
  %v142 = vpop.f32.mrb[0].mxu0
  %v143 = vadd.f32 %v56, %v142
  %v144 = vpop.f32.mrb[0].mxu0
  %145 = vmatprep.mubr.bf16.mxu0 0
  %146 = vmatmul.mubr.bf16.gmra.mrb[0].mxu0 %v69
  %v147 = vpop.f32.mrb[0].mxu0
  %v148 = vadd.f32 %v56, %v147
  %v149 = vpop.f32.mrb[0].mxu0
  %v150 = vpop.f32.mrb[0].mxu0
  %v151 = vadd.f32 %v56, %v150
  %v152 = vpop.f32.mrb[0].mxu0
  %153 = vmatprep.mubr.bf16.mxu0 0
  %154 = vmatmul.mubr.bf16.gmra.mrb[0].mxu0 %v72
  %v155 = vpop.f32.mrb[0].mxu0
  %v156 = vadd.f32 %v56, %v155
  %v157 = vpop.f32.mrb[0].mxu0
  %v158 = vpop.f32.mrb[0].mxu0
  %v159 = vadd.f32 %v56, %v158
  %v160 = vpop.f32.mrb[0].mxu0
  %161 = vmatprep.mubr.bf16.mxu0 0
  %162 = vmatmul.mubr.bf16.gmra.mrb[0].mxu0 %v75
  %v163 = vpop.f32.mrb[0].mxu0
  %v164 = vadd.f32 %v56, %v163
  %v165 = vpop.f32.mrb[0].mxu0
  %v166 = vpop.f32.mrb[0].mxu0
  %v167 = vadd.f32 %v56, %v166
  %v168 = vpop.f32.mrb[0].mxu0
  %169 = vmatprep.mubr.bf16.mxu0 0
  %170 = vmatmul.mubr.bf16.gmra.mrb[0].mxu0 %v78
  %v171 = vpop.f32.mrb[0].mxu0
  %v172 = vadd.f32 %v56, %v171
  %v173 = vpop.f32.mrb[0].mxu0
  %v174 = vpop.f32.mrb[0].mxu0
  %v175 = vadd.f32 %v56, %v174
  %v176 = vpop.f32.mrb[0].mxu0
  %177 = vmatprep.mubr.bf16.mxu0 0
  %178 = vmatmul.mubr.bf16.gmra.mrb[0].mxu0 %v81
  %v179 = vpop.f32.mrb[0].mxu0
  %v180 = vadd.f32 %v56, %v179
  %v181 = vpop.f32.mrb[0].mxu0
  %v182 = vpop.f32.mrb[0].mxu0
  %v183 = vadd.f32 %v56, %v182
  %v184 = vpop.f32.mrb[0].mxu0
  %185 = vmatprep.mubr.bf16.mxu0 0
  %186 = vmatmul.mubr.bf16.gmra.mrb[0].mxu0 %v84
  %v187 = vpop.f32.mrb[0].mxu0
  %v188 = vadd.f32 %v56, %v187
  %v189 = vpop.f32.mrb[0].mxu0
  %v190 = vpop.f32.mrb[0].mxu0
  %v191 = vadd.f32 %v56, %v190
  %v192 = vpop.f32.mrb[0].mxu0
  %193 = vmatprep.mubr.bf16.mxu0 0
  %194 = vmatmul.mubr.bf16.gmra.mrb[0].mxu0 %v87
  %v195 = vpop.f32.mrb[0].mxu0
  %v196 = vadd.f32 %v56, %v195
  %v197 = vpop.f32.mrb[0].mxu0
  %v198 = vpop.f32.mrb[0].mxu0
  %v199 = vadd.f32 %v56, %v198
  %v200 = vpop.f32.mrb[0].mxu0
  %201 = vdwg.mxu0
  %202 = vst.msk [vmem:[%s3] sm:$0xff] %vm58, %v124
  %203 = vst.msk [vmem:[%s3 + $0x8] sm:$0xff] %vm58, %v127
  %204 = vst.msk [vmem:[%s3 + $0x10] sm:$0xff] %vm58, %v132
  %205 = vst.msk [vmem:[%s3 + $0x18] sm:$0xff] %vm58, %v135
  %206 = vst.msk [vmem:[%s3 + $0x20] sm:$0xff] %vm58, %v140
  %207 = vst.msk [vmem:[%s3 + $0x28] sm:$0xff] %vm58, %v143
  %208 = vst.msk [vmem:[%s3 + $0x30] sm:$0xff] %vm58, %v148
  %209 = vst.msk [vmem:[%s3 + $0x38] sm:$0xff] %vm58, %v151
  %210 = vst.msk [vmem:[%s3 + $0x40] sm:$0xff] %vm58, %v156
  %211 = vst.msk [vmem:[%s3 + $0x48] sm:$0xff] %vm58, %v159
  %212 = vst.msk [vmem:[%s3 + $0x50] sm:$0xff] %vm58, %v164
  %213 = vst.msk [vmem:[%s3 + $0x58] sm:$0xff] %vm58, %v167
  %214 = vst.msk [vmem:[%s3 + $0x60] sm:$0xff] %vm58, %v172
  %215 = vst.msk [vmem:[%s3 + $0x68] sm:$0xff] %vm58, %v175
  %216 = vst.msk [vmem:[%s3 + $0x70] sm:$0xff] %vm58, %v180
  %217 = vst.msk [vmem:[%s3 + $0x78] sm:$0xff] %vm58, %v183
  %218 = vst.msk [vmem:[%s3 + $0x80] sm:$0xff] %vm58, %v188
  %219 = vst.msk [vmem:[%s3 + $0x88] sm:$0xff] %vm58, %v191
  %220 = vst.msk [vmem:[%s3 + $0x90] sm:$0xff] %vm58, %v196
  %221 = vst.msk [vmem:[%s3 + $0x98] sm:$0xff] %vm58, %v199
  // Predicated region
  $region14: #{run.16} parent=0 // pred_check
    _
  $region15: #{run.16} parent=0 // pred_check_branch
    %223 = sbr.rel (0) target = $region17
  $region16: #{run.16} parent=0 // pred_region
    _
  $region17: #{run.16} parent=0 // pred_fallthru
    _
  // Predicated region
  $region18: #{run.16} parent=0 // pred_check
    _
  $region19: #{run.16} parent=0 // pred_check_branch
    %225 = sbr.rel (0) target = $region21
  $region20: #{run.16} parent=0 // pred_region
    _
  $region21: #{run.16} parent=0 // pred_fallthru
    _

// kernel: run.18
$region0: #{run.18}
  #allocation0 [shape = 'u32[]', space=smem, size = 0x4, offset = 0x4, fixed_abs, tag = 'smem constant byte address 0x4 - core index']
  #allocation1 [shape = 'u32[144,128]{1,0:T(1,128)}', space=vmem, size = 0x12000, scoped, tag = 'internal scratch']
  %s0 = inlined_call_operand.vmem [shape: f32[32,32], index: 0, kind: input, shape index: {}]
  %s1 = inlined_call_operand.vmem [shape: f32[32,32], index: 1, kind: input, shape index: {}]
  %s2 = inlined_call_operand.vmem [shape: f32[32,32], index: 2, kind: input, shape index: {}]
  %s3 = inlined_call_operand.vmem [shape: f32[1,32], index: 3, kind: input, shape index: {}]
  %s4 = inlined_call_operand.vmem [shape: f32[1,32], index: 4, kind: input, shape index: {}]
  %s5 = inlined_call_operand.vmem [shape: f32[1,32], index: 5, kind: input, shape index: {}]
  %s6 = inlined_call_operand.vmem [shape: f32[32,32], index: 6, kind: output, shape index: {}]
  %s7 = sld [smem:[#allocation0]]
  $region34: #{run.18} parent=0
    _
  %s9 = ssub.s32 1, %s7
  %s10 = scalar_select 0, %s9, %s7
  // Predicated region
  $region2: #{run.18} parent=0 // pred_check
    _
  $region3: #{run.18} parent=0 // pred_check_branch
    %12 = sbr.rel (0) target = $region5
  $region4: #{run.18} parent=0 // pred_region
    _
  $region5: #{run.18} parent=0 // pred_fallthru
    _
  // Predicated region
  $region6: #{run.18} parent=0 // pred_check
    _
  $region7: #{run.18} parent=0 // pred_check_branch
    %14 = sbr.rel (0) target = $region9
  $region8: #{run.18} parent=0 // pred_region
    _
  $region9: #{run.18} parent=0 // pred_fallthru
    _
  // Predicated region
  $region10: #{run.18} parent=0 // pred_check
    _
  $region11: #{run.18} parent=0 // pred_check_branch
    %16 = sbr.rel (0) target = $region13
  $region12: #{run.18} parent=0 // pred_region
    _
  $region13: #{run.18} parent=0 // pred_fallthru
    _
  // Predicated region
  $region14: #{run.18} parent=0 // pred_check
    _
  $region15: #{run.18} parent=0 // pred_check_branch
    %18 = sbr.rel (0) target = $region17
  $region16: #{run.18} parent=0 // pred_region
    _
  $region17: #{run.18} parent=0 // pred_fallthru
    _
  // Predicated region
  $region18: #{run.18} parent=0 // pred_check
    _
  $region19: #{run.18} parent=0 // pred_check_branch
    %20 = sbr.rel (0) target = $region21
  $region20: #{run.18} parent=0 // pred_region
    _
  $region21: #{run.18} parent=0 // pred_fallthru
    _
  // Predicated region
  $region22: #{run.18} parent=0 // pred_check
    _
  $region23: #{run.18} parent=0 // pred_check_branch
    %22 = sbr.rel (0) target = $region25
  $region24: #{run.18} parent=0 // pred_region
    _
  $region25: #{run.18} parent=0 // pred_fallthru
    _
  %v24 = vld [vmem:[%s0] sm:$0xff]
  %v25 = vld [vmem:[%s0 + $0x8] sm:$0xff]
  %v26 = vld [vmem:[%s0 + $0x10] sm:$0xff]
  %v27 = vld [vmem:[%s0 + $0x18] sm:$0xff]
  %v28 = vpack.c.bf16 %v25, %v24
  %v29 = vpack.c.bf16 %v27, %v26
  %v30 = vld [vmem:[%s2] sm:$0xff]
  %v31 = vld [vmem:[%s2 + $0x8] sm:$0xff]
  %v32 = vld [vmem:[%s2 + $0x10] sm:$0xff]
  %v33 = vld [vmem:[%s2 + $0x18] sm:$0xff]
  %v34 = vpack.c.bf16 %v31, %v30
  %v35 = vpack.c.bf16 %v33, %v32
  %v36 = vld [vmem:[%s3] sm:$0x1]
  %v38 = vlaneseq
  %v39 = vshrl.u32 %v38, 7
  %v40 = vsub.s32 0, %v39
  %v41 = vrot.slane %v36, %v40
  %vm43 = vcmask 261120
  %v45 = vsel %vm43, %v28, 0
  %v48 = vsel %vm43, %v29, 0
  %50 = vmatprep.subr.bf16.mxu0 0
  %51 = vmatpush1.bf16.msra.mxu0 %v34
  %52 = vmatprep.subr.bf16.mxu0 0
  %53 = vmatpush1.bf16.msra.mxu0 %v35
  %54 = vmatprep.subr.bf16.mxu0 0
  %55 = vmatpush1.bf16.msra.mxu0 0
  %56 = vmatprep.subr.bf16.mxu0 0
  %57 = vmatpush1.bf16.msra.mxu0 0
  %58 = vmatprep.subr.bf16.mxu0 0
  %59 = vmatpush1.bf16.msra.mxu0 0
  %60 = vmatprep.subr.bf16.mxu0 0
  %61 = vmatpush1.bf16.msra.mxu0 0
  %62 = vmatprep.subr.bf16.mxu0 0
  %63 = vmatpush1.bf16.msra.mxu0 0
  %64 = vmatprep.subr.bf16.mxu0 0
  %65 = vmatpush1.bf16.msra.mxu0 0
  %66 = vmatprep.subr.bf16.mxu0 0
  %67 = vmatpush1.bf16.msra.mxu0 0
  %68 = vmatprep.subr.bf16.mxu0 0
  %69 = vmatpush1.bf16.msra.mxu0 0
  %70 = vmatprep.subr.bf16.mxu0 0
  %71 = vmatpush1.bf16.msra.mxu0 0
  %72 = vmatprep.subr.bf16.mxu0 0
  %73 = vmatpush1.bf16.msra.mxu0 0
  %74 = vmatprep.subr.bf16.mxu0 0
  %75 = vmatpush1.bf16.msra.mxu0 0
  %76 = vmatprep.subr.bf16.mxu0 0
  %77 = vmatpush1.bf16.msra.mxu0 0
  %78 = vmatprep.subr.bf16.mxu0 0
  %79 = vmatpush1.bf16.msra.mxu0 0
  %80 = vmatprep.subr.bf16.mxu0 0
  %81 = vmatpush1.bf16.msra.mxu0 0
  %82 = vmatprep.mubr.bf16.mxu0 0
  %83 = vmatmul.mubr.bf16.gmra.mrb[0].mxu0 %v45
  %v84 = vpop.f32.mrb[0].mxu0
  %v85 = vadd.f32 %v41, %v84
  %v86 = vpop.f32.mrb[0].mxu0
  %v87 = vpop.f32.mrb[0].mxu0
  %v88 = vadd.f32 %v41, %v87
  %v89 = vpop.f32.mrb[0].mxu0
  %90 = vmatprep.mubr.bf16.mxu0 0
  %91 = vmatmul.mubr.bf16.gmra.mrb[0].mxu0 %v48
  %v92 = vpop.f32.mrb[0].mxu0
  %v93 = vadd.f32 %v41, %v92
  %v94 = vpop.f32.mrb[0].mxu0
  %v95 = vpop.f32.mrb[0].mxu0
  %v96 = vadd.f32 %v41, %v95
  %v97 = vpop.f32.mrb[0].mxu0
  %98 = vdwg.mxu0
  %v99 = vld [vmem:[%s1] sm:$0xff]
  %v100 = vld [vmem:[%s1 + $0x8] sm:$0xff]
  %v101 = vld [vmem:[%s1 + $0x10] sm:$0xff]
  %v102 = vld [vmem:[%s1 + $0x18] sm:$0xff]
  %v103 = vadd.f32 %v99, %v85
  %v104 = vadd.f32 %v100, %v88
  %v105 = vadd.f32 %v101, %v93
  %v106 = vadd.f32 %v102, %v96
  %v107 = vsel %vm43, %v103, 0.0
  %108 = vadd.xlane.f32.xlu0 %v107
  %v109 = vpop.xlane.xlu0 %108
  %v110 = vsel %vm43, %v104, 0.0
  %111 = vadd.xlane.f32.xlu0 %v110
  %v112 = vpop.xlane.xlu0 %111
  %v113 = vsel %vm43, %v105, 0.0
  %114 = vadd.xlane.f32.xlu0 %v113
  %v115 = vpop.xlane.xlu0 %114
  %v116 = vsel %vm43, %v106, 0.0
  %117 = vadd.xlane.f32.xlu0 %v116
  %v118 = vpop.xlane.xlu0 %117
  %v119 = vrcp.pop 32.0
  %v120 = vmul.f32 %v109, %v119
  %v121 = vmul.f32 %v112, %v119
  %v122 = vmul.f32 %v115, %v119
  %v123 = vmul.f32 %v118, %v119
  %v124 = vsub.f32 %v103, %v120
  %v125 = vsub.f32 %v104, %v121
  %v126 = vsub.f32 %v105, %v122
  %v127 = vsub.f32 %v106, %v123
  %v128 = vmul.f32 %v124, %v124
  %v129 = vmul.f32 %v125, %v125
  %v130 = vmul.f32 %v126, %v126
  %v131 = vmul.f32 %v127, %v127
  %v132 = vsel %vm43, %v128, 0.0
  %133 = vadd.xlane.f32.xlu0 %v132
  %v134 = vpop.xlane.xlu0 %133
  %v135 = vsel %vm43, %v129, 0.0
  %136 = vadd.xlane.f32.xlu0 %v135
  %v137 = vpop.xlane.xlu0 %136
  %v138 = vsel %vm43, %v130, 0.0
  %139 = vadd.xlane.f32.xlu0 %v138
  %v140 = vpop.xlane.xlu0 %139
  %v141 = vsel %vm43, %v131, 0.0
  %142 = vadd.xlane.f32.xlu0 %v141
  %v143 = vpop.xlane.xlu0 %142
  %v144 = vmul.f32 %v134, %v119
  %v145 = vmul.f32 %v137, %v119
  %v146 = vmul.f32 %v140, %v119
  %v147 = vmul.f32 %v143, %v119
  %v148 = vadd.f32 %v144, 1e-05
  %v149 = vadd.f32 %v145, 1e-05
  %v150 = vadd.f32 %v146, 1e-05
  %v151 = vadd.f32 %v147, 1e-05
  %v152 = vrsqrt.pop %v148
  %v153 = vrsqrt.pop %v149
  %v154 = vrsqrt.pop %v150
  %v155 = vrsqrt.pop %v151
  %v156 = vmul.f32 %v124, %v152
  %v157 = vmul.f32 %v125, %v153
  %v158 = vmul.f32 %v126, %v154
  %v159 = vmul.f32 %v127, %v155
  %v160 = vld [vmem:[%s4] sm:$0x1]
  %v162 = vlaneseq
  %v163 = vshrl.u32 %v162, 7
  %v164 = vsub.s32 0, %v163
  %v165 = vrot.slane %v160, %v164
  %v167 = vmul.f32 %v156, %v165
  %v168 = vmul.f32 %v157, %v165
  %v169 = vmul.f32 %v158, %v165
  %v170 = vmul.f32 %v159, %v165
  %v171 = vld [vmem:[%s5] sm:$0x1]
  %v173 = vlaneseq
  %v174 = vshrl.u32 %v173, 7
  %v175 = vsub.s32 0, %v174
  %v176 = vrot.slane %v171, %v175
  %v178 = vadd.f32 %v167, %v176
  %v179 = vadd.f32 %v168, %v176
  %v180 = vadd.f32 %v169, %v176
  %v181 = vadd.f32 %v170, %v176
  %182 = vst.msk [vmem:[%s6] sm:$0xff] %vm43, %v178
  %183 = vst.msk [vmem:[%s6 + $0x8] sm:$0xff] %vm43, %v179
  %184 = vst.msk [vmem:[%s6 + $0x10] sm:$0xff] %vm43, %v180
  %185 = vst.msk [vmem:[%s6 + $0x18] sm:$0xff] %vm43, %v181
  // Predicated region
  $region26: #{run.18} parent=0 // pred_check
    _
  $region27: #{run.18} parent=0 // pred_check_branch
    %187 = sbr.rel (0) target = $region29
  $region28: #{run.18} parent=0 // pred_region
    _
  $region29: #{run.18} parent=0 // pred_fallthru
    _
  // Predicated region
  $region30: #{run.18} parent=0 // pred_check
    _
  $region31: #{run.18} parent=0 // pred_check_branch
    %189 = sbr.rel (0) target = $region33
  $region32: #{run.18} parent=0 // pred_region
    _
  $region33: #{run.18} parent=0 // pred_fallthru
    _

// kernel: run.19
$region0: #{run.19}
  #allocation0 [shape = 'u32[]', space=smem, size = 0x4, offset = 0x4, fixed_abs, tag = 'smem constant byte address 0x4 - core index']
  #allocation1 [shape = 'u32[144,128]{1,0:T(1,128)}', space=vmem, size = 0x12000, scoped, tag = 'internal scratch']
  %s0 = inlined_call_operand.vmem [shape: f32[32,32], index: 0, kind: input, shape index: {}]
  %s1 = inlined_call_operand.vmem [shape: f32[32,64], index: 1, kind: input, shape index: {}]
  %s2 = inlined_call_operand.vmem [shape: f32[1,64], index: 2, kind: input, shape index: {}]
  %s3 = inlined_call_operand.vmem [shape: f32[64,32], index: 3, kind: input, shape index: {}]
  %s4 = inlined_call_operand.vmem [shape: f32[1,32], index: 4, kind: input, shape index: {}]
  %s5 = inlined_call_operand.vmem [shape: f32[1,32], index: 5, kind: input, shape index: {}]
  %s6 = inlined_call_operand.hbm [shape: f32[1,32], index: 6, kind: input, shape index: {}]
  %s7 = inlined_call_operand.vmem [shape: f32[32,32], index: 7, kind: output, shape index: {}]
  %s8 = sld [smem:[#allocation0]]
  $region42: #{run.19} parent=0
    _
  %s10 = ssub.s32 1, %s8
  %s11 = scalar_select 0, %s10, %s8
  $region1: #{run.19} parent=0
    #allocation2 [shape = 'u8[512]{0}', space=vmem, size = 0x400, scoped, tag = 'input window, operand 6, single buffered']
    #allocation3 [shape = 's32[1]{0}', space=sflag, size = 0x4, scoped, tag = 'scoped memory for run.19']
    %12 = vsyncpa [#allocation3], 0
    // Predicated region
    $region2: #{run.19} parent=1 // pred_check
      _
    $region3: #{run.19} parent=1 // pred_check_branch
      %14 = sbr.rel (0) target = $region5
    $region4: #{run.19} parent=1 // pred_region
      _
    $region5: #{run.19} parent=1 // pred_fallthru
      _
    // Predicated region
    $region6: #{run.19} parent=1 // pred_check
      _
    $region7: #{run.19} parent=1 // pred_check_branch
      %16 = sbr.rel (0) target = $region9
    $region8: #{run.19} parent=1 // pred_region
      _
    $region9: #{run.19} parent=1 // pred_fallthru
      _
    // Predicated region
    $region10: #{run.19} parent=1 // pred_check
      _
    $region11: #{run.19} parent=1 // pred_check_branch
      %18 = sbr.rel (0) target = $region13
    $region12: #{run.19} parent=1 // pred_region
      _
    $region13: #{run.19} parent=1 // pred_fallthru
      _
    // Predicated region
    $region14: #{run.19} parent=1 // pred_check
      _
    $region15: #{run.19} parent=1 // pred_check_branch
      %20 = sbr.rel (0) target = $region17
    $region16: #{run.19} parent=1 // pred_region
      _
    $region17: #{run.19} parent=1 // pred_fallthru
      _
    // Predicated region
    $region18: #{run.19} parent=1 // pred_check
      _
    $region19: #{run.19} parent=1 // pred_check_branch
      %22 = sbr.rel (0) target = $region21
    $region20: #{run.19} parent=1 // pred_region
      _
    $region21: #{run.19} parent=1 // pred_fallthru
      _
    // Predicated region
    $region22: #{run.19} parent=1 // pred_check
      _
    $region23: #{run.19} parent=1 // pred_check_branch
      %24 = sbr.rel (0) target = $region25
    $region24: #{run.19} parent=1 // pred_region
      _
    $region25: #{run.19} parent=1 // pred_fallthru
      _
    // Predicated region
    $region26: #{run.19} parent=1 // pred_check
      _
    $region27: #{run.19} parent=1 // pred_check_branch
      %26 = sbr.rel (0) target = $region29
    $region28: #{run.19} parent=1 // pred_region
      %s28 = ssub.s32 16, 16
      %29 = vsyncadd [#allocation3], %s28
      %s31 = sshll.u32 [#allocation2], 4
      %s32 = int_to_ptr.vmem [resolvable:$true] %s31
      %34 = dma.hbm_to_vmem [thread:$0]  %s6, 16, %s32, [#allocation3]
    $region29: #{run.19} parent=1 // pred_fallthru
      _
    // Predicated region
    $region30: #{run.19} parent=1 // pred_check
      _
    $region31: #{run.19} parent=1 // pred_check_branch
      %36 = sbr.rel (0) target = $region33
    $region32: #{run.19} parent=1 // pred_region
      %37 = dma.done [#allocation3], 16
    $region33: #{run.19} parent=1 // pred_fallthru
      _
    %v39 = vld [vmem:[%s0] sm:$0xff]
    %v40 = vld [vmem:[%s0 + $0x8] sm:$0xff]
    %v41 = vld [vmem:[%s0 + $0x10] sm:$0xff]
    %v42 = vld [vmem:[%s0 + $0x18] sm:$0xff]
    %v43 = vpack.c.bf16 %v40, %v39
    %v44 = vpack.c.bf16 %v42, %v41
    %v45 = vld [vmem:[%s1] sm:$0xff]
    %v46 = vld [vmem:[%s1 + $0x8] sm:$0xff]
    %v47 = vld [vmem:[%s1 + $0x10] sm:$0xff]
    %v48 = vld [vmem:[%s1 + $0x18] sm:$0xff]
    %v49 = vpack.c.bf16 %v46, %v45
    %v50 = vpack.c.bf16 %v48, %v47
    %v51 = vld [vmem:[%s2] sm:$0x1]
    %v53 = vlaneseq
    %v54 = vshrl.u32 %v53, 7
    %v55 = vsub.s32 0, %v54
    %v56 = vrot.slane %v51, %v55
    %vm58 = vcmask 261120
    %v60 = vsel %vm58, %v43, 0
    %v63 = vsel %vm58, %v44, 0
    %65 = vmatprep.subr.bf16.mxu0 0
    %66 = vmatpush1.bf16.msra.mxu0 %v49
    %67 = vmatprep.subr.bf16.mxu0 0
    %68 = vmatpush1.bf16.msra.mxu0 %v50
    %69 = vmatprep.subr.bf16.mxu0 0
    %70 = vmatpush1.bf16.msra.mxu0 0
    %71 = vmatprep.subr.bf16.mxu0 0
    %72 = vmatpush1.bf16.msra.mxu0 0
    %73 = vmatprep.subr.bf16.mxu0 0
    %74 = vmatpush1.bf16.msra.mxu0 0
    %75 = vmatprep.subr.bf16.mxu0 0
    %76 = vmatpush1.bf16.msra.mxu0 0
    %77 = vmatprep.subr.bf16.mxu0 0
    %78 = vmatpush1.bf16.msra.mxu0 0
    %79 = vmatprep.subr.bf16.mxu0 0
    %80 = vmatpush1.bf16.msra.mxu0 0
    %81 = vmatprep.subr.bf16.mxu0 0
    %82 = vmatpush1.bf16.msra.mxu0 0
    %83 = vmatprep.subr.bf16.mxu0 0
    %84 = vmatpush1.bf16.msra.mxu0 0
    %85 = vmatprep.subr.bf16.mxu0 0
    %86 = vmatpush1.bf16.msra.mxu0 0
    %87 = vmatprep.subr.bf16.mxu0 0
    %88 = vmatpush1.bf16.msra.mxu0 0
    %89 = vmatprep.subr.bf16.mxu0 0
    %90 = vmatpush1.bf16.msra.mxu0 0
    %91 = vmatprep.subr.bf16.mxu0 0
    %92 = vmatpush1.bf16.msra.mxu0 0
    %93 = vmatprep.subr.bf16.mxu0 0
    %94 = vmatpush1.bf16.msra.mxu0 0
    %95 = vmatprep.subr.bf16.mxu0 0
    %96 = vmatpush1.bf16.msra.mxu0 0
    %97 = vmatprep.mubr.bf16.mxu0 0
    %98 = vmatmul.mubr.bf16.gmra.mrb[0].mxu0 %v60
    %v99 = vpop.f32.mrb[0].mxu0
    %v100 = vadd.f32 %v56, %v99
    %v101 = vpop.f32.mrb[0].mxu0
    %v102 = vpop.f32.mrb[0].mxu0
    %v103 = vadd.f32 %v56, %v102
    %v104 = vpop.f32.mrb[0].mxu0
    %105 = vmatprep.mubr.bf16.mxu0 0
    %106 = vmatmul.mubr.bf16.gmra.mrb[0].mxu0 %v63
    %v107 = vpop.f32.mrb[0].mxu0
    %v108 = vadd.f32 %v56, %v107
    %v109 = vpop.f32.mrb[0].mxu0
    %v110 = vpop.f32.mrb[0].mxu0
    %v111 = vadd.f32 %v56, %v110
    %v112 = vpop.f32.mrb[0].mxu0
    %113 = vdwg.mxu0
    %v114 = vmax.f32 %v100, 0.0
    %v115 = vmax.f32 %v103, 0.0
    %v116 = vmax.f32 %v108, 0.0
    %v117 = vmax.f32 %v111, 0.0
    %v118 = vpack.c.bf16 %v115, %v114
    %v119 = vpack.c.bf16 %v117, %v116
    %v120 = vld [vmem:[%s3] sm:$0xff]
    %v121 = vld [vmem:[%s3 + $0x8] sm:$0xff]
    %v122 = vld [vmem:[%s3 + $0x10] sm:$0xff]
    %v123 = vld [vmem:[%s3 + $0x18] sm:$0xff]
    %v124 = vld [vmem:[%s3 + $0x20] sm:$0xff]
    %v125 = vld [vmem:[%s3 + $0x28] sm:$0xff]
    %v126 = vld [vmem:[%s3 + $0x30] sm:$0xff]
    %v127 = vld [vmem:[%s3 + $0x38] sm:$0xff]
    %v128 = vpack.c.bf16 %v121, %v120
    %v129 = vpack.c.bf16 %v123, %v122
    %v130 = vpack.c.bf16 %v125, %v124
    %v131 = vpack.c.bf16 %v127, %v126
    %v132 = vld [vmem:[%s4] sm:$0x1]
    %v134 = vlaneseq
    %v135 = vshrl.u32 %v134, 7
    %v136 = vsub.s32 0, %v135
    %v137 = vrot.slane %v132, %v136
    %vm139 = vcmask 523264
    %v141 = vsel %vm139, %v118, 0
    %v144 = vsel %vm139, %v119, 0
    %146 = vmatprep.subr.bf16.mxu0 0
    %147 = vmatpush1.bf16.msra.mxu0 %v128
    %148 = vmatprep.subr.bf16.mxu0 0
    %149 = vmatpush1.bf16.msra.mxu0 %v129
    %150 = vmatprep.subr.bf16.mxu0 0
    %151 = vmatpush1.bf16.msra.mxu0 %v130
    %152 = vmatprep.subr.bf16.mxu0 0
    %153 = vmatpush1.bf16.msra.mxu0 %v131
    %154 = vmatprep.subr.bf16.mxu0 0
    %155 = vmatpush1.bf16.msra.mxu0 0
    %156 = vmatprep.subr.bf16.mxu0 0
    %157 = vmatpush1.bf16.msra.mxu0 0
    %158 = vmatprep.subr.bf16.mxu0 0
    %159 = vmatpush1.bf16.msra.mxu0 0
    %160 = vmatprep.subr.bf16.mxu0 0
    %161 = vmatpush1.bf16.msra.mxu0 0
    %162 = vmatprep.subr.bf16.mxu0 0
    %163 = vmatpush1.bf16.msra.mxu0 0
    %164 = vmatprep.subr.bf16.mxu0 0
    %165 = vmatpush1.bf16.msra.mxu0 0
    %166 = vmatprep.subr.bf16.mxu0 0
    %167 = vmatpush1.bf16.msra.mxu0 0
    %168 = vmatprep.subr.bf16.mxu0 0
    %169 = vmatpush1.bf16.msra.mxu0 0
    %170 = vmatprep.subr.bf16.mxu0 0
    %171 = vmatpush1.bf16.msra.mxu0 0
    %172 = vmatprep.subr.bf16.mxu0 0
    %173 = vmatpush1.bf16.msra.mxu0 0
    %174 = vmatprep.subr.bf16.mxu0 0
    %175 = vmatpush1.bf16.msra.mxu0 0
    %176 = vmatprep.subr.bf16.mxu0 0
    %177 = vmatpush1.bf16.msra.mxu0 0
    %178 = vmatprep.mubr.bf16.mxu0 0
    %179 = vmatmul.mubr.bf16.gmra.mrb[0].mxu0 %v141
    %v180 = vpop.f32.mrb[0].mxu0
    %v181 = vadd.f32 %v137, %v180
    %v182 = vpop.f32.mrb[0].mxu0
    %v183 = vpop.f32.mrb[0].mxu0
    %v184 = vadd.f32 %v137, %v183
    %v185 = vpop.f32.mrb[0].mxu0
    %186 = vmatprep.mubr.bf16.mxu0 0
    %187 = vmatmul.mubr.bf16.gmra.mrb[0].mxu0 %v144
    %v188 = vpop.f32.mrb[0].mxu0
    %v189 = vadd.f32 %v137, %v188
    %v190 = vpop.f32.mrb[0].mxu0
    %v191 = vpop.f32.mrb[0].mxu0
    %v192 = vadd.f32 %v137, %v191
    %v193 = vpop.f32.mrb[0].mxu0
    %194 = vdwg.mxu0
    %v195 = vadd.f32 %v39, %v181
    %v196 = vadd.f32 %v40, %v184
    %v197 = vadd.f32 %v41, %v189
    %v198 = vadd.f32 %v42, %v192
    %v199 = vsel %vm58, %v195, 0.0
    %200 = vadd.xlane.f32.xlu0 %v199
    %v201 = vpop.xlane.xlu0 %200
    %v202 = vsel %vm58, %v196, 0.0
    %203 = vadd.xlane.f32.xlu0 %v202
    %v204 = vpop.xlane.xlu0 %203
    %v205 = vsel %vm58, %v197, 0.0
    %206 = vadd.xlane.f32.xlu0 %v205
    %v207 = vpop.xlane.xlu0 %206
    %v208 = vsel %vm58, %v198, 0.0
    %209 = vadd.xlane.f32.xlu0 %v208
    %v210 = vpop.xlane.xlu0 %209
    %v211 = vrcp.pop 32.0
    %v212 = vmul.f32 %v201, %v211
    %v213 = vmul.f32 %v204, %v211
    %v214 = vmul.f32 %v207, %v211
    %v215 = vmul.f32 %v210, %v211
    %v216 = vsub.f32 %v195, %v212
    %v217 = vsub.f32 %v196, %v213
    %v218 = vsub.f32 %v197, %v214
    %v219 = vsub.f32 %v198, %v215
    %v220 = vmul.f32 %v216, %v216
    %v221 = vmul.f32 %v217, %v217
    %v222 = vmul.f32 %v218, %v218
    %v223 = vmul.f32 %v219, %v219
    %v224 = vsel %vm58, %v220, 0.0
    %225 = vadd.xlane.f32.xlu0 %v224
    %v226 = vpop.xlane.xlu0 %225
    %v227 = vsel %vm58, %v221, 0.0
    %228 = vadd.xlane.f32.xlu0 %v227
    %v229 = vpop.xlane.xlu0 %228
    %v230 = vsel %vm58, %v222, 0.0
    %231 = vadd.xlane.f32.xlu0 %v230
    %v232 = vpop.xlane.xlu0 %231
    %v233 = vsel %vm58, %v223, 0.0
    %234 = vadd.xlane.f32.xlu0 %v233
    %v235 = vpop.xlane.xlu0 %234
    %v236 = vmul.f32 %v226, %v211
    %v237 = vmul.f32 %v229, %v211
    %v238 = vmul.f32 %v232, %v211
    %v239 = vmul.f32 %v235, %v211
    %v240 = vadd.f32 %v236, 1e-05
    %v241 = vadd.f32 %v237, 1e-05
    %v242 = vadd.f32 %v238, 1e-05
    %v243 = vadd.f32 %v239, 1e-05
    %v244 = vrsqrt.pop %v240
    %v245 = vrsqrt.pop %v241
    %v246 = vrsqrt.pop %v242
    %v247 = vrsqrt.pop %v243
    %v248 = vmul.f32 %v216, %v244
    %v249 = vmul.f32 %v217, %v245
    %v250 = vmul.f32 %v218, %v246
    %v251 = vmul.f32 %v219, %v247
    %v252 = vld [vmem:[%s5] sm:$0x1]
    %v254 = vlaneseq
    %v255 = vshrl.u32 %v254, 7
    %v256 = vsub.s32 0, %v255
    %v257 = vrot.slane %v252, %v256
    %v259 = vmul.f32 %v248, %v257
    %v260 = vmul.f32 %v249, %v257
    %v261 = vmul.f32 %v250, %v257
    %v262 = vmul.f32 %v251, %v257
    %v263 = vld [vmem:[#allocation2] sm:$0x1]
    %v265 = vlaneseq
    %v266 = vshrl.u32 %v265, 7
    %v267 = vsub.s32 0, %v266
    %v268 = vrot.slane %v263, %v267
    %v270 = vadd.f32 %v259, %v268
    %v271 = vadd.f32 %v260, %v268
    %v272 = vadd.f32 %v261, %v268
    %v273 = vadd.f32 %v262, %v268
    %274 = vst.msk [vmem:[%s7] sm:$0xff] %vm58, %v270
    %275 = vst.msk [vmem:[%s7 + $0x8] sm:$0xff] %vm58, %v271
    %276 = vst.msk [vmem:[%s7 + $0x10] sm:$0xff] %vm58, %v272
    %277 = vst.msk [vmem:[%s7 + $0x18] sm:$0xff] %vm58, %v273
    // Predicated region
    $region34: #{run.19} parent=1 // pred_check
      _
    $region35: #{run.19} parent=1 // pred_check_branch
      %279 = sbr.rel (0) target = $region37
    $region36: #{run.19} parent=1 // pred_region
      _
    $region37: #{run.19} parent=1 // pred_fallthru
      _
    // Predicated region
    $region38: #{run.19} parent=1 // pred_check
      _
    $region39: #{run.19} parent=1 // pred_check_branch
      %281 = sbr.rel (0) target = $region41
    $region40: #{run.19} parent=1 // pred_region
      _
    $region41: #{run.19} parent=1 // pred_fallthru
      _
    %282 = vsyncpa [#allocation3], 1

// kernel: run.22
$region0: #{run.22}
  #allocation0 [shape = 'u32[]', space=smem, size = 0x4, offset = 0x4, fixed_abs, tag = 'smem constant byte address 0x4 - core index']
  #allocation1 [shape = 'u32[144,128]{1,0:T(1,128)}', space=vmem, size = 0x12000, scoped, tag = 'internal scratch']
  %s0 = inlined_call_operand.vmem [shape: f32[32,32], index: 0, kind: input, shape index: {}]
  %s1 = inlined_call_operand.vmem [shape: f32[32,32], index: 1, kind: input, shape index: {}]
  %s2 = inlined_call_operand.hbm [shape: f32[32,32], index: 2, kind: input, shape index: {}]
  %s3 = inlined_call_operand.vmem [shape: f32[1,32], index: 3, kind: input, shape index: {}]
  %s4 = inlined_call_operand.vmem [shape: f32[32,16], index: 4, kind: input, shape index: {}]
  %s5 = inlined_call_operand.vmem [shape: f32[1,16], index: 5, kind: input, shape index: {}]
  %s6 = inlined_call_operand.vmem [shape: f32[32,32], index: 6, kind: output, shape index: {0}]
  %s7 = inlined_call_operand.vmem [shape: f32[32,16], index: 7, kind: output, shape index: {1}]
  %8 = xla_tuple %s6, %s7
  %s9 = sld [smem:[#allocation0]]
  $region46: #{run.22} parent=0
    _
  %s11 = ssub.s32 1, %s9
  %s12 = scalar_select 0, %s11, %s9
  $region1: #{run.22} parent=0
    #allocation2 [shape = 'u8[16384]{0}', space=vmem, size = 0x4000, scoped, tag = 'input window, operand 2, single buffered']
    #allocation3 [shape = 's32[1]{0}', space=sflag, size = 0x4, scoped, tag = 'scoped memory for run.22']
    %13 = vsyncpa [#allocation3], 0
    // Predicated region
    $region2: #{run.22} parent=1 // pred_check
      _
    $region3: #{run.22} parent=1 // pred_check_branch
      %15 = sbr.rel (0) target = $region5
    $region4: #{run.22} parent=1 // pred_region
      _
    $region5: #{run.22} parent=1 // pred_fallthru
      _
    // Predicated region
    $region6: #{run.22} parent=1 // pred_check
      _
    $region7: #{run.22} parent=1 // pred_check_branch
      %17 = sbr.rel (0) target = $region9
    $region8: #{run.22} parent=1 // pred_region
      _
    $region9: #{run.22} parent=1 // pred_fallthru
      _
    // Predicated region
    $region10: #{run.22} parent=1 // pred_check
      _
    $region11: #{run.22} parent=1 // pred_check_branch
      %19 = sbr.rel (0) target = $region13
    $region12: #{run.22} parent=1 // pred_region
      %s21 = ssub.s32 512, 512
      %22 = vsyncadd [#allocation3], %s21
      %s23 = sshll.u32 [#allocation2], 4
      %s24 = int_to_ptr.vmem [resolvable:$true] %s23
      %29 = dma.hbm_to_vmem [thread:$0]  %s2, 512, %s24, [#allocation3], 128, 128, 8
    $region13: #{run.22} parent=1 // pred_fallthru
      _
    // Predicated region
    $region14: #{run.22} parent=1 // pred_check
      _
    $region15: #{run.22} parent=1 // pred_check_branch
      %31 = sbr.rel (0) target = $region17
    $region16: #{run.22} parent=1 // pred_region
      _
    $region17: #{run.22} parent=1 // pred_fallthru
      _
    // Predicated region
    $region18: #{run.22} parent=1 // pred_check
      _
    $region19: #{run.22} parent=1 // pred_check_branch
      %33 = sbr.rel (0) target = $region21
    $region20: #{run.22} parent=1 // pred_region
      _
    $region21: #{run.22} parent=1 // pred_fallthru
      _
    // Predicated region
    $region22: #{run.22} parent=1 // pred_check
      _
    $region23: #{run.22} parent=1 // pred_check_branch
      %35 = sbr.rel (0) target = $region25
    $region24: #{run.22} parent=1 // pred_region
      _
    $region25: #{run.22} parent=1 // pred_fallthru
      _
    // Predicated region
    $region26: #{run.22} parent=1 // pred_check
      _
    $region27: #{run.22} parent=1 // pred_check_branch
      %37 = sbr.rel (0) target = $region29
    $region28: #{run.22} parent=1 // pred_region
      %38 = dma.done [#allocation3], 512
    $region29: #{run.22} parent=1 // pred_fallthru
      _
    %v40 = vld [vmem:[%s0] sm:$0xff]
    %v41 = vld [vmem:[%s0 + $0x8] sm:$0xff]
    %v42 = vld [vmem:[%s0 + $0x10] sm:$0xff]
    %v43 = vld [vmem:[%s0 + $0x18] sm:$0xff]
    %v44 = vld [vmem:[%s1] sm:$0xff]
    %v45 = vld [vmem:[%s1 + $0x8] sm:$0xff]
    %v46 = vld [vmem:[%s1 + $0x10] sm:$0xff]
    %v47 = vld [vmem:[%s1 + $0x18] sm:$0xff]
    %v48 = vadd.f32 %v40, %v44
    %v49 = vadd.f32 %v41, %v45
    %v50 = vadd.f32 %v42, %v46
    %v51 = vadd.f32 %v43, %v47
    %v52 = vpack.c.bf16 %v49, %v48
    %v53 = vpack.c.bf16 %v51, %v50
    %v54 = vld [vmem:[#allocation2] sm:$0xff]
    %v55 = vld [vmem:[#allocation2 + $0x8] sm:$0xff]
    %v56 = vld [vmem:[#allocation2 + $0x10] sm:$0xff]
    %v57 = vld [vmem:[#allocation2 + $0x18] sm:$0xff]
    %v58 = vpack.c.bf16 %v55, %v54
    %v59 = vpack.c.bf16 %v57, %v56
    %v60 = vld [vmem:[%s3] sm:$0x1]
    %v62 = vlaneseq
    %v63 = vshrl.u32 %v62, 7
    %v64 = vsub.s32 0, %v63
    %v65 = vrot.slane %v60, %v64
    %vm67 = vcmask 261120
    %v69 = vsel %vm67, %v52, 0
    %v72 = vsel %vm67, %v53, 0
    %74 = vmatprep.subr.bf16.mxu0 0
    %75 = vmatpush1.bf16.msra.mxu0 %v58
    %76 = vmatprep.subr.bf16.mxu0 0
    %77 = vmatpush1.bf16.msra.mxu0 %v59
    %78 = vmatprep.subr.bf16.mxu0 0
    %79 = vmatpush1.bf16.msra.mxu0 0
    %80 = vmatprep.subr.bf16.mxu0 0
    %81 = vmatpush1.bf16.msra.mxu0 0
    %82 = vmatprep.subr.bf16.mxu0 0
    %83 = vmatpush1.bf16.msra.mxu0 0
    %84 = vmatprep.subr.bf16.mxu0 0
    %85 = vmatpush1.bf16.msra.mxu0 0
    %86 = vmatprep.subr.bf16.mxu0 0
    %87 = vmatpush1.bf16.msra.mxu0 0
    %88 = vmatprep.subr.bf16.mxu0 0
    %89 = vmatpush1.bf16.msra.mxu0 0
    %90 = vmatprep.subr.bf16.mxu0 0
    %91 = vmatpush1.bf16.msra.mxu0 0
    %92 = vmatprep.subr.bf16.mxu0 0
    %93 = vmatpush1.bf16.msra.mxu0 0
    %94 = vmatprep.subr.bf16.mxu0 0
    %95 = vmatpush1.bf16.msra.mxu0 0
    %96 = vmatprep.subr.bf16.mxu0 0
    %97 = vmatpush1.bf16.msra.mxu0 0
    %98 = vmatprep.subr.bf16.mxu0 0
    %99 = vmatpush1.bf16.msra.mxu0 0
    %100 = vmatprep.subr.bf16.mxu0 0
    %101 = vmatpush1.bf16.msra.mxu0 0
    %102 = vmatprep.subr.bf16.mxu0 0
    %103 = vmatpush1.bf16.msra.mxu0 0
    %104 = vmatprep.subr.bf16.mxu0 0
    %105 = vmatpush1.bf16.msra.mxu0 0
    %106 = vmatprep.mubr.bf16.mxu0 0
    %107 = vmatmul.mubr.bf16.gmra.mrb[0].mxu0 %v69
    %v108 = vpop.f32.mrb[0].mxu0
    %v109 = vadd.f32 %v65, %v108
    %v110 = vpop.f32.mrb[0].mxu0
    %v111 = vpop.f32.mrb[0].mxu0
    %v112 = vadd.f32 %v65, %v111
    %v113 = vpop.f32.mrb[0].mxu0
    %114 = vmatprep.mubr.bf16.mxu0 0
    %115 = vmatmul.mubr.bf16.gmra.mrb[0].mxu0 %v72
    %v116 = vpop.f32.mrb[0].mxu0
    %v117 = vadd.f32 %v65, %v116
    %v118 = vpop.f32.mrb[0].mxu0
    %v119 = vpop.f32.mrb[0].mxu0
    %v120 = vadd.f32 %v65, %v119
    %v121 = vpop.f32.mrb[0].mxu0
    %122 = vdwg.mxu0
    %v123 = vld [vmem:[%s4] sm:$0xff]
    %v124 = vld [vmem:[%s4 + $0x8] sm:$0xff]
    %v125 = vld [vmem:[%s4 + $0x10] sm:$0xff]
    %v126 = vld [vmem:[%s4 + $0x18] sm:$0xff]
    %v127 = vpack.c.bf16 %v124, %v123
    %v128 = vpack.c.bf16 %v126, %v125
    %v129 = vld [vmem:[%s5] sm:$0x1]
    %v131 = vlaneseq
    %v132 = vshrl.u32 %v131, 7
    %v133 = vsub.s32 0, %v132
    %v134 = vrot.slane %v129, %v133
    %136 = vmatprep.subr.bf16.mxu0 0
    %137 = vmatpush1.bf16.msra.mxu0 %v127
    %138 = vmatprep.subr.bf16.mxu0 0
    %139 = vmatpush1.bf16.msra.mxu0 %v128
    %140 = vmatprep.subr.bf16.mxu0 0
    %141 = vmatpush1.bf16.msra.mxu0 0
    %142 = vmatprep.subr.bf16.mxu0 0
    %143 = vmatpush1.bf16.msra.mxu0 0
    %144 = vmatprep.subr.bf16.mxu0 0
    %145 = vmatpush1.bf16.msra.mxu0 0
    %146 = vmatprep.subr.bf16.mxu0 0
    %147 = vmatpush1.bf16.msra.mxu0 0
    %148 = vmatprep.subr.bf16.mxu0 0
    %149 = vmatpush1.bf16.msra.mxu0 0
    %150 = vmatprep.subr.bf16.mxu0 0
    %151 = vmatpush1.bf16.msra.mxu0 0
    %152 = vmatprep.subr.bf16.mxu0 0
    %153 = vmatpush1.bf16.msra.mxu0 0
    %154 = vmatprep.subr.bf16.mxu0 0
    %155 = vmatpush1.bf16.msra.mxu0 0
    %156 = vmatprep.subr.bf16.mxu0 0
    %157 = vmatpush1.bf16.msra.mxu0 0
    %158 = vmatprep.subr.bf16.mxu0 0
    %159 = vmatpush1.bf16.msra.mxu0 0
    %160 = vmatprep.subr.bf16.mxu0 0
    %161 = vmatpush1.bf16.msra.mxu0 0
    %162 = vmatprep.subr.bf16.mxu0 0
    %163 = vmatpush1.bf16.msra.mxu0 0
    %164 = vmatprep.subr.bf16.mxu0 0
    %165 = vmatpush1.bf16.msra.mxu0 0
    %166 = vmatprep.subr.bf16.mxu0 0
    %167 = vmatpush1.bf16.msra.mxu0 0
    %168 = vmatprep.mubr.bf16.mxu0 0
    %169 = vmatmul.mubr.bf16.gmra.mrb[0].mxu0 %v69
    %v170 = vpop.f32.mrb[0].mxu0
    %v171 = vadd.f32 %v134, %v170
    %v172 = vpop.f32.mrb[0].mxu0
    %v173 = vpop.f32.mrb[0].mxu0
    %v174 = vadd.f32 %v134, %v173
    %v175 = vpop.f32.mrb[0].mxu0
    %176 = vmatprep.mubr.bf16.mxu0 0
    %177 = vmatmul.mubr.bf16.gmra.mrb[0].mxu0 %v72
    %v178 = vpop.f32.mrb[0].mxu0
    %v179 = vadd.f32 %v134, %v178
    %v180 = vpop.f32.mrb[0].mxu0
    %v181 = vpop.f32.mrb[0].mxu0
    %v182 = vadd.f32 %v134, %v181
    %v183 = vpop.f32.mrb[0].mxu0
    %184 = vdwg.mxu0
    %185 = vst.msk [vmem:[%s6] sm:$0xff] %vm67, %v109
    %186 = vst.msk [vmem:[%s6 + $0x8] sm:$0xff] %vm67, %v112
    %187 = vst.msk [vmem:[%s6 + $0x10] sm:$0xff] %vm67, %v117
    %188 = vst.msk [vmem:[%s6 + $0x18] sm:$0xff] %vm67, %v120
    %vm189 = vcmask 130048
    %190 = vst.msk [vmem:[%s7] sm:$0xff] %vm189, %v171
    %191 = vst.msk [vmem:[%s7 + $0x8] sm:$0xff] %vm189, %v174
    %192 = vst.msk [vmem:[%s7 + $0x10] sm:$0xff] %vm189, %v179
    %193 = vst.msk [vmem:[%s7 + $0x18] sm:$0xff] %vm189, %v182
    // Predicated region
    $region30: #{run.22} parent=1 // pred_check
      _
    $region31: #{run.22} parent=1 // pred_check_branch
      %195 = sbr.rel (0) target = $region33
    $region32: #{run.22} parent=1 // pred_region
      _
    $region33: #{run.22} parent=1 // pred_fallthru
      _
    // Predicated region
    $region34: #{run.22} parent=1 // pred_check
      _
    $region35: #{run.22} parent=1 // pred_check_branch
      %197 = sbr.rel (0) target = $region37
    $region36: #{run.22} parent=1 // pred_region
      _
    $region37: #{run.22} parent=1 // pred_fallthru
      _
    // Predicated region
    $region38: #{run.22} parent=1 // pred_check
      _
    $region39: #{run.22} parent=1 // pred_check_branch
      %199 = sbr.rel (0) target = $region41
    $region40: #{run.22} parent=1 // pred_region
      _
    $region41: #{run.22} parent=1 // pred_fallthru
      _
    // Predicated region
    $region42: #{run.22} parent=1 // pred_check
      _
    $region43: #{run.22} parent=1 // pred_check_branch
      %201 = sbr.rel (0) target = $region45
    $region44: #{run.22} parent=1 // pred_region
      _
    $region45: #{run.22} parent=1 // pred_fallthru
      _
    %202 = vsyncpa [#allocation3], 1

// kernel: run.20
$region0: #{run.20}
  #allocation0 [shape = 'u32[]', space=smem, size = 0x4, offset = 0x4, fixed_abs, tag = 'smem constant byte address 0x4 - core index']
  #allocation1 [shape = 'u32[144,128]{1,0:T(1,128)}', space=vmem, size = 0x12000, scoped, tag = 'internal scratch']
  %s0 = inlined_call_operand.vmem [shape: f32[2,16,32], index: 0, kind: input, shape index: {}]
  %s1 = inlined_call_operand.vmem [shape: f32[2,16,32], index: 1, kind: input, shape index: {}]
  %s2 = inlined_call_operand.vmem [shape: f32[32,32], index: 2, kind: input, shape index: {}]
  %s3 = inlined_call_operand.vmem [shape: f32[32,32], index: 3, kind: input, shape index: {}]
  %s4 = inlined_call_operand.vmem [shape: f32[32,32], index: 4, kind: input, shape index: {}]
  %s5 = inlined_call_operand.vmem [shape: f32[1,32], index: 5, kind: input, shape index: {}]
  %s6 = inlined_call_operand.vmem [shape: f32[1,32], index: 6, kind: input, shape index: {}]
  %s7 = inlined_call_operand.vmem [shape: f32[1,32], index: 7, kind: input, shape index: {}]
  %s8 = inlined_call_operand.vmem [shape: f32[32,32], index: 8, kind: input, shape index: {}]
  %s9 = inlined_call_operand.hbm [shape: f32[1,32], index: 9, kind: input, shape index: {}]
  %s10 = inlined_call_operand.hbm [shape: f32[1,32], index: 10, kind: input, shape index: {}]
  %s11 = inlined_call_operand.hbm [shape: f32[1,32], index: 11, kind: input, shape index: {}]
  %s12 = inlined_call_operand.vmem [shape: f32[2,16,32], index: 12, kind: output, shape index: {}]
  %s13 = sld [smem:[#allocation0]]
  $region93: #{run.20} parent=0
    _
  %s15 = ssub.s32 1, %s13
  %s16 = scalar_select 0, %s15, %s13
  $region1: #{run.20} parent=0
    #allocation2 [shape = 'u8[512]{0}', space=vmem, size = 0x400, scoped, tag = 'input window, operand 9, single buffered']
    #allocation3 [shape = 's32[2]{0}', space=sflag, size = 0x8, scoped, tag = 'scoped memory for run.20']
    #allocation4 [shape = 'u8[512]{0}', space=vmem, size = 0x400, scoped, tag = 'input window, operand 10, single buffered']
    #allocation5 [shape = 's32[1]{0}', space=sflag, size = 0x4, scoped, tag = 'scoped memory for run.20']
    #allocation6 [shape = 'u8[512]{0}', space=vmem, size = 0x400, scoped, tag = 'input window, operand 11, single buffered']
    %17 = vsyncpa [#allocation3], 0
    %18 = vsyncpa [#allocation5], 0
    loop: start=0, step=1, limit=4
    $region2: #{run.20} parent=1 // loop_pre_header
      _
    $region3: #{run.20} parent=1 // loop_header
      %s20 = sphi 0, %s24
      %p21 = scmp.ge.s32.totalorder %s20, 4
      %s30 = sphi 0, %s32
      %s33 = sphi 0, %s30
      %s34 = sphi 0, %s33
      %s50 = sphi 0, %s34
      %s56 = sphi 0, %s58
      %s59 = sphi 0, %s56
      %s60 = sphi 0, %s59
      %s76 = sphi 0, %s60
      %s80 = sphi 0, %s80
      %s82 = sphi 0, %s80
      %s83 = sphi 0, %s82
      %s97 = sphi 0, %s83
      %s101 = sphi 0, %s101
      %s103 = sphi 0, %s101
      %s104 = sphi 0, %s103
      %s118 = sphi 0, %s104
      %s122 = sphi 0, %s122
      %s124 = sphi 0, %s122
      %s125 = sphi 0, %s124
      %s139 = sphi 0, %s125
      %s143 = sphi 0, %s143
      %s145 = sphi 0, %s143
      %s146 = sphi 0, %s145
      %s160 = sphi 0, %s146
      %s164 = sphi 0, %s164
      %s166 = sphi 0, %s164
      %s167 = sphi 0, %s166
      %s181 = sphi 0, %s167
      %s185 = sphi 0, %s185
      %s187 = sphi 0, %s185
      %s188 = sphi 0, %s187
      %s202 = sphi 0, %s188
      %s206 = sphi 0, %s206
      %s208 = sphi 0, %s206
      %s209 = sphi 0, %s208
      %s223 = sphi 0, %s209
      %s227 = sphi 0, %s227
      %s229 = sphi 0, %s227
      %s230 = sphi 0, %s229
      %s244 = sphi 0, %s230
      %s248 = sphi 0, %s248
      %s250 = sphi 0, %s248
      %s251 = sphi 0, %s250
      %s265 = sphi 0, %s251
      %s269 = sphi 0, %s269
      %s271 = sphi 0, %s269
      %s272 = sphi 0, %s271
      %s286 = sphi 0, %s272
      %s292 = sphi 0, %s294
      %s295 = sphi 0, %s292
      %s296 = sphi 0, %s295
      %s312 = sphi 0, %s296
    $region4: #{run.20} parent=1 // loop_header_branch
      %23 = sbr.rel (%p21) target = $region8
    $region5: #{run.20} parent=1 // loop_body
      %s25 = ssub.s32 %s20, 1
      %s26 = ssub.s32 %s20, 2
      %s27 = sadd.s32 %s20, 1
      %s28 = ssub.s32 %s20, %s27
      %p29 = scmp.eq.s32.totalorder %s28, 0
      %s31 = sadd.s32 %s30, 1
      %s32 = scalar_select %p29, %s30, %s31
      %p35 = pneg %p29
      %p36 = scmp.eq.s32.totalorder %s20, 1
      %p37 = por %p35, %p36
      %p38 = scmp.ne.s32.totalorder %s30, %s33
      %p39 = scmp.eq.s32.totalorder %s20, 0
      %p40 = por %p38, %p39
      %p41 = scmp.ne.s32.totalorder %s30, %s33
      %p42 = scmp.eq.s32.totalorder %s25, 1
      %p43 = por %p41, %p42
      %p44 = scmp.ne.s32.totalorder %s33, %s34
      %p45 = scmp.eq.s32.totalorder %s25, 0
      %p46 = por %p44, %p45
      %p47 = scmp.ne.s32.totalorder %s33, %s34
      %p48 = scmp.eq.s32.totalorder %s26, 1
      %p49 = por %p47, %p48
      %p51 = scmp.ne.s32.totalorder %s34, %s50
      %p52 = scmp.eq.s32.totalorder %s26, 0
      %p53 = por %p51, %p52
      %s54 = ssub.s32 %s20, %s27
      %p55 = scmp.eq.s32.totalorder %s54, 0
      %s57 = sadd.s32 %s56, 1
      %s58 = scalar_select %p55, %s56, %s57
      %p61 = pneg %p55
      %p62 = scmp.eq.s32.totalorder %s20, 1
      %p63 = por %p61, %p62
      %p64 = scmp.ne.s32.totalorder %s56, %s59
      %p65 = scmp.eq.s32.totalorder %s20, 0
      %p66 = por %p64, %p65
      %p67 = scmp.ne.s32.totalorder %s56, %s59
      %p68 = scmp.eq.s32.totalorder %s25, 1
      %p69 = por %p67, %p68
      %p70 = scmp.ne.s32.totalorder %s59, %s60
      %p71 = scmp.eq.s32.totalorder %s25, 0
      %p72 = por %p70, %p71
      %p73 = scmp.ne.s32.totalorder %s59, %s60
      %p74 = scmp.eq.s32.totalorder %s26, 1
      %p75 = por %p73, %p74
      %p77 = scmp.ne.s32.totalorder %s60, %s76
      %p78 = scmp.eq.s32.totalorder %s26, 0
      %p79 = por %p77, %p78
      %s81 = sadd.s32 %s80, 1
      %p84 = scmp.eq.s32.totalorder %s20, 1
      %p85 = scmp.ne.s32.totalorder %s80, %s82
      %p86 = scmp.eq.s32.totalorder %s20, 0
      %p87 = por %p85, %p86
      %p88 = scmp.ne.s32.totalorder %s80, %s82
      %p89 = scmp.eq.s32.totalorder %s25, 1
      %p90 = por %p88, %p89
      %p91 = scmp.ne.s32.totalorder %s82, %s83
      %p92 = scmp.eq.s32.totalorder %s25, 0
      %p93 = por %p91, %p92
      %p94 = scmp.ne.s32.totalorder %s82, %s83
      %p95 = scmp.eq.s32.totalorder %s26, 1
      %p96 = por %p94, %p95
      %p98 = scmp.ne.s32.totalorder %s83, %s97
      %p99 = scmp.eq.s32.totalorder %s26, 0
      %p100 = por %p98, %p99
      %s102 = sadd.s32 %s101, 1
      %p105 = scmp.eq.s32.totalorder %s20, 1
      %p106 = scmp.ne.s32.totalorder %s101, %s103
      %p107 = scmp.eq.s32.totalorder %s20, 0
      %p108 = por %p106, %p107
      %p109 = scmp.ne.s32.totalorder %s101, %s103
      %p110 = scmp.eq.s32.totalorder %s25, 1
      %p111 = por %p109, %p110
      %p112 = scmp.ne.s32.totalorder %s103, %s104
      %p113 = scmp.eq.s32.totalorder %s25, 0
      %p114 = por %p112, %p113
      %p115 = scmp.ne.s32.totalorder %s103, %s104
      %p116 = scmp.eq.s32.totalorder %s26, 1
      %p117 = por %p115, %p116
      %p119 = scmp.ne.s32.totalorder %s104, %s118
      %p120 = scmp.eq.s32.totalorder %s26, 0
      %p121 = por %p119, %p120
      %s123 = sadd.s32 %s122, 1
      %p126 = scmp.eq.s32.totalorder %s20, 1
      %p127 = scmp.ne.s32.totalorder %s122, %s124
      %p128 = scmp.eq.s32.totalorder %s20, 0
      %p129 = por %p127, %p128
      %p130 = scmp.ne.s32.totalorder %s122, %s124
      %p131 = scmp.eq.s32.totalorder %s25, 1
      %p132 = por %p130, %p131
      %p133 = scmp.ne.s32.totalorder %s124, %s125
      %p134 = scmp.eq.s32.totalorder %s25, 0
      %p135 = por %p133, %p134
      %p136 = scmp.ne.s32.totalorder %s124, %s125
      %p137 = scmp.eq.s32.totalorder %s26, 1
      %p138 = por %p136, %p137
      %p140 = scmp.ne.s32.totalorder %s125, %s139
      %p141 = scmp.eq.s32.totalorder %s26, 0
      %p142 = por %p140, %p141
      %s144 = sadd.s32 %s143, 1
      %p147 = scmp.eq.s32.totalorder %s20, 1
      %p148 = scmp.ne.s32.totalorder %s143, %s145
      %p149 = scmp.eq.s32.totalorder %s20, 0
      %p150 = por %p148, %p149
      %p151 = scmp.ne.s32.totalorder %s143, %s145
      %p152 = scmp.eq.s32.totalorder %s25, 1
      %p153 = por %p151, %p152
      %p154 = scmp.ne.s32.totalorder %s145, %s146
      %p155 = scmp.eq.s32.totalorder %s25, 0
      %p156 = por %p154, %p155
      %p157 = scmp.ne.s32.totalorder %s145, %s146
      %p158 = scmp.eq.s32.totalorder %s26, 1
      %p159 = por %p157, %p158
      %p161 = scmp.ne.s32.totalorder %s146, %s160
      %p162 = scmp.eq.s32.totalorder %s26, 0
      %p163 = por %p161, %p162
      %s165 = sadd.s32 %s164, 1
      %p168 = scmp.eq.s32.totalorder %s20, 1
      %p169 = scmp.ne.s32.totalorder %s164, %s166
      %p170 = scmp.eq.s32.totalorder %s20, 0
      %p171 = por %p169, %p170
      %p172 = scmp.ne.s32.totalorder %s164, %s166
      %p173 = scmp.eq.s32.totalorder %s25, 1
      %p174 = por %p172, %p173
      %p175 = scmp.ne.s32.totalorder %s166, %s167
      %p176 = scmp.eq.s32.totalorder %s25, 0
      %p177 = por %p175, %p176
      %p178 = scmp.ne.s32.totalorder %s166, %s167
      %p179 = scmp.eq.s32.totalorder %s26, 1
      %p180 = por %p178, %p179
      %p182 = scmp.ne.s32.totalorder %s167, %s181
      %p183 = scmp.eq.s32.totalorder %s26, 0
      %p184 = por %p182, %p183
      %s186 = sadd.s32 %s185, 1
      %p189 = scmp.eq.s32.totalorder %s20, 1
      %p190 = scmp.ne.s32.totalorder %s185, %s187
      %p191 = scmp.eq.s32.totalorder %s20, 0
      %p192 = por %p190, %p191
      %p193 = scmp.ne.s32.totalorder %s185, %s187
      %p194 = scmp.eq.s32.totalorder %s25, 1
      %p195 = por %p193, %p194
      %p196 = scmp.ne.s32.totalorder %s187, %s188
      %p197 = scmp.eq.s32.totalorder %s25, 0
      %p198 = por %p196, %p197
      %p199 = scmp.ne.s32.totalorder %s187, %s188
      %p200 = scmp.eq.s32.totalorder %s26, 1
      %p201 = por %p199, %p200
      %p203 = scmp.ne.s32.totalorder %s188, %s202
      %p204 = scmp.eq.s32.totalorder %s26, 0
      %p205 = por %p203, %p204
      %s207 = sadd.s32 %s206, 1
      %p210 = scmp.eq.s32.totalorder %s20, 1
      %p211 = scmp.ne.s32.totalorder %s206, %s208
      %p212 = scmp.eq.s32.totalorder %s20, 0
      %p213 = por %p211, %p212
      %p214 = scmp.ne.s32.totalorder %s206, %s208
      %p215 = scmp.eq.s32.totalorder %s25, 1
      %p216 = por %p214, %p215
      %p217 = scmp.ne.s32.totalorder %s208, %s209
      %p218 = scmp.eq.s32.totalorder %s25, 0
      %p219 = por %p217, %p218
      %p220 = scmp.ne.s32.totalorder %s208, %s209
      %p221 = scmp.eq.s32.totalorder %s26, 1
      %p222 = por %p220, %p221
      %p224 = scmp.ne.s32.totalorder %s209, %s223
      %p225 = scmp.eq.s32.totalorder %s26, 0
      %p226 = por %p224, %p225
      %s228 = sadd.s32 %s227, 1
      %p231 = scmp.eq.s32.totalorder %s20, 1
      %p232 = scmp.ne.s32.totalorder %s227, %s229
      %p233 = scmp.eq.s32.totalorder %s20, 0
      %p234 = por %p232, %p233
      %p235 = scmp.ne.s32.totalorder %s227, %s229
      %p236 = scmp.eq.s32.totalorder %s25, 1
      %p237 = por %p235, %p236
      %p238 = scmp.ne.s32.totalorder %s229, %s230
      %p239 = scmp.eq.s32.totalorder %s25, 0
      %p240 = por %p238, %p239
      %p241 = scmp.ne.s32.totalorder %s229, %s230
      %p242 = scmp.eq.s32.totalorder %s26, 1
      %p243 = por %p241, %p242
      %p245 = scmp.ne.s32.totalorder %s230, %s244
      %p246 = scmp.eq.s32.totalorder %s26, 0
      %p247 = por %p245, %p246
      %s249 = sadd.s32 %s248, 1
      %p252 = scmp.eq.s32.totalorder %s20, 1
      %p253 = scmp.ne.s32.totalorder %s248, %s250
      %p254 = scmp.eq.s32.totalorder %s20, 0
      %p255 = por %p253, %p254
      %p256 = scmp.ne.s32.totalorder %s248, %s250
      %p257 = scmp.eq.s32.totalorder %s25, 1
      %p258 = por %p256, %p257
      %p259 = scmp.ne.s32.totalorder %s250, %s251
      %p260 = scmp.eq.s32.totalorder %s25, 0
      %p261 = por %p259, %p260
      %p262 = scmp.ne.s32.totalorder %s250, %s251
      %p263 = scmp.eq.s32.totalorder %s26, 1
      %p264 = por %p262, %p263
      %p266 = scmp.ne.s32.totalorder %s251, %s265
      %p267 = scmp.eq.s32.totalorder %s26, 0
      %p268 = por %p266, %p267
      %s270 = sadd.s32 %s269, 1
      %p273 = scmp.eq.s32.totalorder %s20, 1
      %p274 = scmp.ne.s32.totalorder %s269, %s271
      %p275 = scmp.eq.s32.totalorder %s20, 0
      %p276 = por %p274, %p275
      %p277 = scmp.ne.s32.totalorder %s269, %s271
      %p278 = scmp.eq.s32.totalorder %s25, 1
      %p279 = por %p277, %p278
      %p280 = scmp.ne.s32.totalorder %s271, %s272
      %p281 = scmp.eq.s32.totalorder %s25, 0
      %p282 = por %p280, %p281
      %p283 = scmp.ne.s32.totalorder %s271, %s272
      %p284 = scmp.eq.s32.totalorder %s26, 1
      %p285 = por %p283, %p284
      %p287 = scmp.ne.s32.totalorder %s272, %s286
      %p288 = scmp.eq.s32.totalorder %s26, 0
      %p289 = por %p287, %p288
      %s290 = ssub.s32 %s20, %s27
      %p291 = scmp.eq.s32.totalorder %s290, 0
      %s293 = sadd.s32 %s292, 1
      %s294 = scalar_select %p291, %s292, %s293
      %p297 = pneg %p291
      %p298 = scmp.eq.s32.totalorder %s20, 1
      %p299 = por %p297, %p298
      %p300 = scmp.ne.s32.totalorder %s292, %s295
      %p301 = scmp.eq.s32.totalorder %s20, 0
      %p302 = por %p300, %p301
      %p303 = scmp.ne.s32.totalorder %s292, %s295
      %p304 = scmp.eq.s32.totalorder %s25, 1
      %p305 = por %p303, %p304
      %p306 = scmp.ne.s32.totalorder %s295, %s296
      %p307 = scmp.eq.s32.totalorder %s25, 0
      %p308 = por %p306, %p307
      %p309 = scmp.ne.s32.totalorder %s295, %s296
      %p310 = scmp.eq.s32.totalorder %s26, 1
      %p311 = por %p309, %p310
      %p313 = scmp.ne.s32.totalorder %s296, %s312
      %p314 = scmp.eq.s32.totalorder %s26, 0
      %p315 = por %p313, %p314
      %p316 = scmp.le.s32.totalorder 1, %s20
      %p317 = scmp.lt.s32.totalorder %s20, 3
      %p318 = pnand %p316, %p317
      %p319 = pneg %p318
      // Predicated region
      $region9: #{run.20} parent=5 // pred_check
        _
      $region10: #{run.20} parent=5 // pred_check_branch
        %321 = sbr.rel (%p318) target = $region12
      $region11: #{run.20} parent=5 // pred_region
        %s322 = ssub.s32 %s20, 1
        // Predicated region
        $region13: #{run.20} parent=11 // pred_check
          %p323 = pneg %p93
        $region14: #{run.20} parent=11 // pred_check_branch
          %325 = sbr.rel (%p323) target = $region16
        $region15: #{run.20} parent=11 // pred_region
          _
        $region16: #{run.20} parent=11 // pred_fallthru
          _
        // Predicated region
        $region17: #{run.20} parent=11 // pred_check
          %p326 = pneg %p114
        $region18: #{run.20} parent=11 // pred_check_branch
          %328 = sbr.rel (%p326) target = $region20
        $region19: #{run.20} parent=11 // pred_region
          _
        $region20: #{run.20} parent=11 // pred_fallthru
          _
        // Predicated region
        $region21: #{run.20} parent=11 // pred_check
          %p329 = pneg %p135
        $region22: #{run.20} parent=11 // pred_check_branch
          %331 = sbr.rel (%p329) target = $region24
        $region23: #{run.20} parent=11 // pred_region
          _
        $region24: #{run.20} parent=11 // pred_fallthru
          _
        // Predicated region
        $region25: #{run.20} parent=11 // pred_check
          %p332 = pneg %p156
        $region26: #{run.20} parent=11 // pred_check_branch
          %334 = sbr.rel (%p332) target = $region28
        $region27: #{run.20} parent=11 // pred_region
          _
        $region28: #{run.20} parent=11 // pred_fallthru
          _
        // Predicated region
        $region29: #{run.20} parent=11 // pred_check
          %p335 = pneg %p177
        $region30: #{run.20} parent=11 // pred_check_branch
          %337 = sbr.rel (%p335) target = $region32
        $region31: #{run.20} parent=11 // pred_region
          _
        $region32: #{run.20} parent=11 // pred_fallthru
          _
        // Predicated region
        $region33: #{run.20} parent=11 // pred_check
          %p338 = pneg %p198
        $region34: #{run.20} parent=11 // pred_check_branch
          %340 = sbr.rel (%p338) target = $region36
        $region35: #{run.20} parent=11 // pred_region
          _
        $region36: #{run.20} parent=11 // pred_fallthru
          _
        // Predicated region
        $region37: #{run.20} parent=11 // pred_check
          %p341 = pneg %p219
        $region38: #{run.20} parent=11 // pred_check_branch
          %343 = sbr.rel (%p341) target = $region40
        $region39: #{run.20} parent=11 // pred_region
          _
        $region40: #{run.20} parent=11 // pred_fallthru
          _
        // Predicated region
        $region41: #{run.20} parent=11 // pred_check
          %p344 = pneg %p240
        $region42: #{run.20} parent=11 // pred_check_branch
          %346 = sbr.rel (%p344) target = $region44
        $region43: #{run.20} parent=11 // pred_region
          %s348 = ssub.s32 16, 16
          %349 = vsyncadd [#allocation3], %s348
          %s351 = sshll.u32 [#allocation2], 4
          %s352 = int_to_ptr.vmem [resolvable:$true] %s351
          %354 = dma.hbm_to_vmem [thread:$0]  %s9, 16, %s352, [#allocation3]
        $region44: #{run.20} parent=11 // pred_fallthru
          _
        // Predicated region
        $region45: #{run.20} parent=11 // pred_check
          %p355 = pneg %p261
        $region46: #{run.20} parent=11 // pred_check_branch
          %357 = sbr.rel (%p355) target = $region48
        $region47: #{run.20} parent=11 // pred_region
          %s359 = ssub.s32 16, 16
          %360 = vsyncadd [#allocation5], %s359
          %s362 = sshll.u32 [#allocation4], 4
          %s363 = int_to_ptr.vmem [resolvable:$true] %s362
          %365 = dma.hbm_to_vmem [thread:$0]  %s10, 16, %s363, [#allocation5]
        $region48: #{run.20} parent=11 // pred_fallthru
          _
        // Predicated region
        $region49: #{run.20} parent=11 // pred_check
          %p366 = pneg %p282
        $region50: #{run.20} parent=11 // pred_check_branch
          %368 = sbr.rel (%p366) target = $region52
        $region51: #{run.20} parent=11 // pred_region
          %s370 = ssub.s32 16, 16
          %371 = vsyncadd [#allocation5], %s370
          %s373 = sshll.u32 [#allocation6], 4
          %s374 = int_to_ptr.vmem [resolvable:$true] %s373
          %376 = dma.hbm_to_vmem [thread:$0]  %s11, 16, %s374, [#allocation5]
        $region52: #{run.20} parent=11 // pred_fallthru
          _
      $region12: #{run.20} parent=5 // pred_fallthru
        _
      %p377 = scmp.lt.s32.totalorder %s20, 2
      // Predicated region
      $region53: #{run.20} parent=5 // pred_check
        %p378 = pneg %p377
      $region54: #{run.20} parent=5 // pred_check_branch
        %380 = sbr.rel (%p378) target = $region56
      $region55: #{run.20} parent=5 // pred_region
        // Predicated region
        $region57: #{run.20} parent=55 // pred_check
          %p381 = pneg %p40
        $region58: #{run.20} parent=55 // pred_check_branch
          %383 = sbr.rel (%p381) target = $region60
        $region59: #{run.20} parent=55 // pred_region
          %p384 = scmp.lt.s32.totalorder %s20, 1
          %s385 = scalar_select %p384, %s20, 1
          %s386 = smul.addr %s385, 2
          %s387 = smul.addr %s386, 8
          %s388 = scalar_lea.vmem %s0, %s387
        $region60: #{run.20} parent=55 // pred_fallthru
          _
        // Predicated region
        $region61: #{run.20} parent=55 // pred_check
          %p389 = pneg %p66
        $region62: #{run.20} parent=55 // pred_check_branch
          %391 = sbr.rel (%p389) target = $region64
        $region63: #{run.20} parent=55 // pred_region
          %p392 = scmp.lt.s32.totalorder %s20, 1
          %s393 = scalar_select %p392, %s20, 1
          %s394 = smul.addr %s393, 2
          %s395 = smul.addr %s394, 8
          %s396 = scalar_lea.vmem %s1, %s395
        $region64: #{run.20} parent=55 // pred_fallthru
          _
      $region56: #{run.20} parent=5 // pred_fallthru
        _
      %p397 = scmp.le.s32.totalorder 1, %s20
      %p398 = scmp.lt.s32.totalorder %s20, 3
      %p399 = pnand %p397, %p398
      %p400 = pneg %p399
      // Predicated region
      $region65: #{run.20} parent=5 // pred_check
        _
      $region66: #{run.20} parent=5 // pred_check_branch
        %402 = sbr.rel (%p399) target = $region68
      $region67: #{run.20} parent=5 // pred_region
        %s403 = ssub.s32 %s20, 1
        // Predicated region
        $region69: #{run.20} parent=67 // pred_check
          %p404 = pneg %p240
        $region70: #{run.20} parent=67 // pred_check_branch
          %406 = sbr.rel (%p404) target = $region72
        $region71: #{run.20} parent=67 // pred_region
          %407 = dma.done [#allocation3], 16
        $region72: #{run.20} parent=67 // pred_fallthru
          _
        // Predicated region
        $region73: #{run.20} parent=67 // pred_check
          %p408 = pneg %p261
        $region74: #{run.20} parent=67 // pred_check_branch
          %410 = sbr.rel (%p408) target = $region76
        $region75: #{run.20} parent=67 // pred_region
          %411 = dma.done [#allocation5], 16
        $region76: #{run.20} parent=67 // pred_fallthru
          _
        // Predicated region
        $region77: #{run.20} parent=67 // pred_check
          %p412 = pneg %p282
        $region78: #{run.20} parent=67 // pred_check_branch
          %414 = sbr.rel (%p412) target = $region80
        $region79: #{run.20} parent=67 // pred_region
          %415 = dma.done [#allocation5], 16
        $region80: #{run.20} parent=67 // pred_fallthru
          _
        %p416 = scmp.lt.s32.totalorder %s25, 1
        %s417 = scalar_select %p416, %s25, 1
        %s418 = smul.addr %s417, 2
        %s419 = smul.addr %s418, 8
        %s420 = scalar_lea.vmem %s0, %s419
        %p421 = pneg %p46
        %p422 = pneg %p43
        %p423 = scmp.lt.s32.totalorder %s25, 1
        %s424 = scalar_select %p423, %s25, 1
        %s425 = smul.addr %s424, 2
        %s426 = smul.addr %s425, 8
        %s427 = scalar_lea.vmem %s1, %s426
        %p428 = pneg %p72
        %p429 = pneg %p69
        %p430 = pneg %p93
        %p431 = pneg %p90
        %p432 = pneg %p114
        %p433 = pneg %p111
        %p434 = pneg %p135
        %p435 = pneg %p132
        %p436 = pneg %p156
        %p437 = pneg %p153
        %p438 = pneg %p177
        %p439 = pneg %p174
        %p440 = pneg %p198
        %p441 = pneg %p195
        %p442 = pneg %p219
        %p443 = pneg %p216
        %p444 = pneg %p240
        %p445 = pneg %p237
        %p446 = pneg %p261
        %p447 = pneg %p258
        %p448 = pneg %p282
        %p449 = pneg %p279
        %p450 = pneg %p308
        %p451 = pneg %p305
        %p452 = scmp.lt.s32.totalorder %s25, 1
        %s453 = scalar_select %p452, %s25, 1
        %s454 = smul.addr %s453, 2
        %s455 = smul.addr %s454, 8
        %s456 = scalar_lea.vmem %s12, %s455
        %p457 = scmp.lt.s32.totalorder %s25, 1
        %s458 = scalar_select %p457, %s25, 1
        %s459 = smul.addr %s458, 2
        %s460 = smul.addr %s459, 8
        %s461 = scalar_lea.vmem %s0, %s460
        %p462 = scmp.lt.s32.totalorder %s25, 1
        %s463 = scalar_select %p462, %s25, 1
        %s464 = smul.addr %s463, 2
        %s465 = smul.addr %s464, 8
        %s466 = scalar_lea.vmem %s1, %s465
        %p467 = scmp.lt.s32.totalorder %s25, 1
        %s468 = scalar_select %p467, %s25, 1
        %s469 = smul.addr %s468, 2
        %s470 = smul.addr %s469, 8
        %s471 = scalar_lea.vmem %s12, %s470
        %v473 = vld [vmem:[%s461] sm:$0xff]
        %v474 = vld [vmem:[%s461 + $0x8] sm:$0xff]
        %v475 = vld [vmem:[%s466] sm:$0xff]
        %v476 = vld [vmem:[%s466 + $0x8] sm:$0xff]
        %v477 = vadd.f32 %v473, %v475
        %v478 = vadd.f32 %v474, %v476
        %v479 = vpack.c.bf16 %v478, %v477
        %v480 = vld [vmem:[%s2] sm:$0xff]
        %v481 = vld [vmem:[%s2 + $0x8] sm:$0xff]
        %v482 = vld [vmem:[%s2 + $0x10] sm:$0xff]
        %v483 = vld [vmem:[%s2 + $0x18] sm:$0xff]
        %v484 = vpack.c.bf16 %v481, %v480
        %v485 = vpack.c.bf16 %v483, %v482
        %v486 = vld [vmem:[%s5] sm:$0x1]
        %v488 = vlaneseq
        %v489 = vshrl.u32 %v488, 7
        %v490 = vsub.s32 0, %v489
        %v491 = vrot.slane %v486, %v490
        %vm493 = vcmask 261120
        %v495 = vsel %vm493, %v479, 0
        %497 = vmatprep.subr.bf16.mxu0 0
        %498 = vmatpush1.bf16.msra.mxu0 %v484
        %499 = vmatprep.subr.bf16.mxu0 0
        %500 = vmatpush1.bf16.msra.mxu0 %v485
        %501 = vmatprep.subr.bf16.mxu0 0
        %502 = vmatpush1.bf16.msra.mxu0 0
        %503 = vmatprep.subr.bf16.mxu0 0
        %504 = vmatpush1.bf16.msra.mxu0 0
        %505 = vmatprep.subr.bf16.mxu0 0
        %506 = vmatpush1.bf16.msra.mxu0 0
        %507 = vmatprep.subr.bf16.mxu0 0
        %508 = vmatpush1.bf16.msra.mxu0 0
        %509 = vmatprep.subr.bf16.mxu0 0
        %510 = vmatpush1.bf16.msra.mxu0 0
        %511 = vmatprep.subr.bf16.mxu0 0
        %512 = vmatpush1.bf16.msra.mxu0 0
        %513 = vmatprep.subr.bf16.mxu0 0
        %514 = vmatpush1.bf16.msra.mxu0 0
        %515 = vmatprep.subr.bf16.mxu0 0
        %516 = vmatpush1.bf16.msra.mxu0 0
        %517 = vmatprep.subr.bf16.mxu0 0
        %518 = vmatpush1.bf16.msra.mxu0 0
        %519 = vmatprep.subr.bf16.mxu0 0
        %520 = vmatpush1.bf16.msra.mxu0 0
        %521 = vmatprep.subr.bf16.mxu0 0
        %522 = vmatpush1.bf16.msra.mxu0 0
        %523 = vmatprep.subr.bf16.mxu0 0
        %524 = vmatpush1.bf16.msra.mxu0 0
        %525 = vmatprep.subr.bf16.mxu0 0
        %526 = vmatpush1.bf16.msra.mxu0 0
        %527 = vmatprep.subr.bf16.mxu0 0
        %528 = vmatpush1.bf16.msra.mxu0 0
        %529 = vmatprep.mubr.bf16.mxu0 0
        %530 = vmatmul.mubr.bf16.gmra.mrb[0].mxu0 %v495
        %v531 = vpop.f32.mrb[0].mxu0
        %v532 = vadd.f32 %v491, %v531
        %v533 = vpop.f32.mrb[0].mxu0
        %v534 = vpop.f32.mrb[0].mxu0
        %v535 = vadd.f32 %v491, %v534
        %v536 = vpop.f32.mrb[0].mxu0
        %537 = vdwg.mxu0
        %v538 = vld [vmem:[%s3] sm:$0xff]
        %v539 = vld [vmem:[%s3 + $0x8] sm:$0xff]
        %v540 = vld [vmem:[%s3 + $0x10] sm:$0xff]
        %v541 = vld [vmem:[%s3 + $0x18] sm:$0xff]
        %v542 = vpack.c.bf16 %v539, %v538
        %v543 = vpack.c.bf16 %v541, %v540
        %v544 = vld [vmem:[%s6] sm:$0x1]
        %v546 = vlaneseq
        %v547 = vshrl.u32 %v546, 7
        %v548 = vsub.s32 0, %v547
        %v549 = vrot.slane %v544, %v548
        %551 = vmatprep.subr.bf16.mxu0 0
        %552 = vmatpush1.bf16.msra.mxu0 %v542
        %553 = vmatprep.subr.bf16.mxu0 0
        %554 = vmatpush1.bf16.msra.mxu0 %v543
        %555 = vmatprep.subr.bf16.mxu0 0
        %556 = vmatpush1.bf16.msra.mxu0 0
        %557 = vmatprep.subr.bf16.mxu0 0
        %558 = vmatpush1.bf16.msra.mxu0 0
        %559 = vmatprep.subr.bf16.mxu0 0
        %560 = vmatpush1.bf16.msra.mxu0 0
        %561 = vmatprep.subr.bf16.mxu0 0
        %562 = vmatpush1.bf16.msra.mxu0 0
        %563 = vmatprep.subr.bf16.mxu0 0
        %564 = vmatpush1.bf16.msra.mxu0 0
        %565 = vmatprep.subr.bf16.mxu0 0
        %566 = vmatpush1.bf16.msra.mxu0 0
        %567 = vmatprep.subr.bf16.mxu0 0
        %568 = vmatpush1.bf16.msra.mxu0 0
        %569 = vmatprep.subr.bf16.mxu0 0
        %570 = vmatpush1.bf16.msra.mxu0 0
        %571 = vmatprep.subr.bf16.mxu0 0
        %572 = vmatpush1.bf16.msra.mxu0 0
        %573 = vmatprep.subr.bf16.mxu0 0
        %574 = vmatpush1.bf16.msra.mxu0 0
        %575 = vmatprep.subr.bf16.mxu0 0
        %576 = vmatpush1.bf16.msra.mxu0 0
        %577 = vmatprep.subr.bf16.mxu0 0
        %578 = vmatpush1.bf16.msra.mxu0 0
        %579 = vmatprep.subr.bf16.mxu0 0
        %580 = vmatpush1.bf16.msra.mxu0 0
        %581 = vmatprep.subr.bf16.mxu0 0
        %582 = vmatpush1.bf16.msra.mxu0 0
        %583 = vmatprep.mubr.bf16.mxu0 0
        %584 = vmatmul.mubr.bf16.gmra.mrb[0].mxu0 %v495
        %v585 = vpop.f32.mrb[0].mxu0
        %v586 = vadd.f32 %v549, %v585
        %v587 = vpop.f32.mrb[0].mxu0
        %v588 = vpop.f32.mrb[0].mxu0
        %v589 = vadd.f32 %v549, %v588
        %v590 = vpop.f32.mrb[0].mxu0
        %591 = vdwg.mxu0
        %v592 = vpack.c.bf16 %v474, %v473
        %v593 = vld [vmem:[%s4] sm:$0xff]
        %v594 = vld [vmem:[%s4 + $0x8] sm:$0xff]
        %v595 = vld [vmem:[%s4 + $0x10] sm:$0xff]
        %v596 = vld [vmem:[%s4 + $0x18] sm:$0xff]
        %v597 = vpack.c.bf16 %v594, %v593
        %v598 = vpack.c.bf16 %v596, %v595
        %v599 = vld [vmem:[%s7] sm:$0x1]
        %v601 = vlaneseq
        %v602 = vshrl.u32 %v601, 7
        %v603 = vsub.s32 0, %v602
        %v604 = vrot.slane %v599, %v603
        %v607 = vsel %vm493, %v592, 0
        %609 = vmatprep.subr.bf16.mxu0 0
        %610 = vmatpush1.bf16.msra.mxu0 %v597
        %611 = vmatprep.subr.bf16.mxu0 0
        %612 = vmatpush1.bf16.msra.mxu0 %v598
        %613 = vmatprep.subr.bf16.mxu0 0
        %614 = vmatpush1.bf16.msra.mxu0 0
        %615 = vmatprep.subr.bf16.mxu0 0
        %616 = vmatpush1.bf16.msra.mxu0 0
        %617 = vmatprep.subr.bf16.mxu0 0
        %618 = vmatpush1.bf16.msra.mxu0 0
        %619 = vmatprep.subr.bf16.mxu0 0
        %620 = vmatpush1.bf16.msra.mxu0 0
        %621 = vmatprep.subr.bf16.mxu0 0
        %622 = vmatpush1.bf16.msra.mxu0 0
        %623 = vmatprep.subr.bf16.mxu0 0
        %624 = vmatpush1.bf16.msra.mxu0 0
        %625 = vmatprep.subr.bf16.mxu0 0
        %626 = vmatpush1.bf16.msra.mxu0 0
        %627 = vmatprep.subr.bf16.mxu0 0
        %628 = vmatpush1.bf16.msra.mxu0 0
        %629 = vmatprep.subr.bf16.mxu0 0
        %630 = vmatpush1.bf16.msra.mxu0 0
        %631 = vmatprep.subr.bf16.mxu0 0
        %632 = vmatpush1.bf16.msra.mxu0 0
        %633 = vmatprep.subr.bf16.mxu0 0
        %634 = vmatpush1.bf16.msra.mxu0 0
        %635 = vmatprep.subr.bf16.mxu0 0
        %636 = vmatpush1.bf16.msra.mxu0 0
        %637 = vmatprep.subr.bf16.mxu0 0
        %638 = vmatpush1.bf16.msra.mxu0 0
        %639 = vmatprep.subr.bf16.mxu0 0
        %640 = vmatpush1.bf16.msra.mxu0 0
        %641 = vmatprep.mubr.bf16.mxu0 0
        %642 = vmatmul.mubr.bf16.gmra.mrb[0].mxu0 %v607
        %v643 = vpop.f32.mrb[0].mxu0
        %v644 = vadd.f32 %v604, %v643
        %v645 = vpop.f32.mrb[0].mxu0
        %v646 = vpop.f32.mrb[0].mxu0
        %v647 = vadd.f32 %v604, %v646
        %v648 = vpop.f32.mrb[0].mxu0
        %649 = vdwg.mxu0
        %v650 = vpack.c.bf16 %v535, %v532
        %v651 = vpack.c.bf16 %v589, %v586
        %v652 = vpack.c.bf16 %v647, %v644
        %vm653 = vcmask 64512
        %v655 = vsel %vm653, %v650, 0
        %v658 = vsel %vm653, %v651, 0
        %660 = vmatprep.subr.bf16.mxu0 0
        %661 = vmatpush1.bf16.xpose.msra.mxu0 %v658
        %662 = vmatprep.subr.bf16.mxu0 0
        %663 = vmatpush1.bf16.xpose.msra.mxu0 0
        %664 = vmatprep.subr.bf16.mxu0 0
        %665 = vmatpush1.bf16.xpose.msra.mxu0 0
        %666 = vmatprep.subr.bf16.mxu0 0
        %667 = vmatpush1.bf16.xpose.msra.mxu0 0
        %668 = vmatprep.subr.bf16.mxu0 0
        %669 = vmatpush1.bf16.xpose.msra.mxu0 0
        %670 = vmatprep.subr.bf16.mxu0 0
        %671 = vmatpush1.bf16.xpose.msra.mxu0 0
        %672 = vmatprep.subr.bf16.mxu0 0
        %673 = vmatpush1.bf16.xpose.msra.mxu0 0
        %674 = vmatprep.subr.bf16.mxu0 0
        %675 = vmatpush1.bf16.xpose.msra.mxu0 0
        %676 = vmatprep.subr.bf16.mxu0 0
        %677 = vmatpush1.bf16.xpose.msra.mxu0 0
        %678 = vmatprep.subr.bf16.mxu0 0
        %679 = vmatpush1.bf16.xpose.msra.mxu0 0
        %680 = vmatprep.subr.bf16.mxu0 0
        %681 = vmatpush1.bf16.xpose.msra.mxu0 0
        %682 = vmatprep.subr.bf16.mxu0 0
        %683 = vmatpush1.bf16.xpose.msra.mxu0 0
        %684 = vmatprep.subr.bf16.mxu0 0
        %685 = vmatpush1.bf16.xpose.msra.mxu0 0
        %686 = vmatprep.subr.bf16.mxu0 0
        %687 = vmatpush1.bf16.xpose.msra.mxu0 0
        %688 = vmatprep.subr.bf16.mxu0 0
        %689 = vmatpush1.bf16.xpose.msra.mxu0 0
        %690 = vmatprep.subr.bf16.mxu0 0
        %691 = vmatpush1.bf16.xpose.msra.mxu0 0
        %692 = vmatprep.mubr.bf16.mxu0 0
        %693 = vmatmul.mubr.bf16.gmra.mrb[0].mxu0 %v655
        %v694 = vpop.f32.mrb[0].mxu0
        %v695 = vadd.f32 0.0, %v694
        %v696 = vpop.f32.mrb[0].mxu0
        %v697 = vpop.f32.mrb[0].mxu0
        %v698 = vadd.f32 0.0, %v697
        %v699 = vpop.f32.mrb[0].mxu0
        %700 = vdwg.mxu0
        %v701 = vmul.f32 %v695, 0.35355338
        %v702 = vmul.f32 %v698, 0.35355338
        %vm703 = vcmask 130048
        %v704 = vsel %vm703, %v701, -inf
        %705 = vmax.xlane.f32.xlu0 %v704
        %v706 = vpop.xlane.xlu0 %705
        %v707 = vsel %vm703, %v702, -inf
        %708 = vmax.xlane.f32.xlu0 %v707
        %v709 = vpop.xlane.xlu0 %708
        %v710 = vsub.f32 %v701, %v706
        %v711 = vsub.f32 %v702, %v709
        %v712 = vmul.f32 %v710, 1.442695
        %v713 = vpow.pop %v712
        %v714 = vmul.f32 %v711, 1.442695
        %v715 = vpow.pop %v714
        %v716 = vsel %vm703, %v713, 0.0
        %717 = vadd.xlane.f32.xlu0 %v716
        %v718 = vpop.xlane.xlu0 %717
        %v719 = vsel %vm703, %v715, 0.0
        %720 = vadd.xlane.f32.xlu0 %v719
        %v721 = vpop.xlane.xlu0 %720
        %v722 = vrcp.pop %v718
        %v723 = vrcp.pop %v721
        %v724 = vmul.f32 %v713, %v722
        %v725 = vmul.f32 %v715, %v723
        %v726 = vpack.c.bf16 %v725, %v724
        %v728 = vsel %vm703, %v726, 0
        %730 = vmatprep.subr.bf16.mxu0 0
        %731 = vmatpush1.bf16.msra.mxu0 %v652
        %732 = vmatprep.subr.bf16.mxu0 0
        %733 = vmatpush1.bf16.msra.mxu0 0
        %734 = vmatprep.subr.bf16.mxu0 0
        %735 = vmatpush1.bf16.msra.mxu0 0
        %736 = vmatprep.subr.bf16.mxu0 0
        %737 = vmatpush1.bf16.msra.mxu0 0
        %738 = vmatprep.subr.bf16.mxu0 0
        %739 = vmatpush1.bf16.msra.mxu0 0
        %740 = vmatprep.subr.bf16.mxu0 0
        %741 = vmatpush1.bf16.msra.mxu0 0
        %742 = vmatprep.subr.bf16.mxu0 0
        %743 = vmatpush1.bf16.msra.mxu0 0
        %744 = vmatprep.subr.bf16.mxu0 0
        %745 = vmatpush1.bf16.msra.mxu0 0
        %746 = vmatprep.subr.bf16.mxu0 0
        %747 = vmatpush1.bf16.msra.mxu0 0
        %748 = vmatprep.subr.bf16.mxu0 0
        %749 = vmatpush1.bf16.msra.mxu0 0
        %750 = vmatprep.subr.bf16.mxu0 0
        %751 = vmatpush1.bf16.msra.mxu0 0
        %752 = vmatprep.subr.bf16.mxu0 0
        %753 = vmatpush1.bf16.msra.mxu0 0
        %754 = vmatprep.subr.bf16.mxu0 0
        %755 = vmatpush1.bf16.msra.mxu0 0
        %756 = vmatprep.subr.bf16.mxu0 0
        %757 = vmatpush1.bf16.msra.mxu0 0
        %758 = vmatprep.subr.bf16.mxu0 0
        %759 = vmatpush1.bf16.msra.mxu0 0
        %760 = vmatprep.subr.bf16.mxu0 0
        %761 = vmatpush1.bf16.msra.mxu0 0
        %762 = vmatprep.mubr.bf16.mxu0 0
        %763 = vmatmul.mubr.bf16.gmra.mrb[0].mxu0 %v728
        %v764 = vpop.f32.mrb[0].mxu0
        %v765 = vadd.f32 0.0, %v764
        %v766 = vpop.f32.mrb[0].mxu0
        %v767 = vpop.f32.mrb[0].mxu0
        %v768 = vadd.f32 0.0, %v767
        %v769 = vpop.f32.mrb[0].mxu0
        %770 = vdwg.mxu0
        %v771 = vpack.c.bf16 %v768, %v765
        %v772 = vld [vmem:[%s8] sm:$0xff]
        %v773 = vpack.c.bf16 %v772, %v772
        %775 = vrot.lane.b32.xlu0 %v650, 120
        %v776 = vpop.permute.xlu0 %775
        %778 = vrot.lane.b32.xlu0 %v651, 120
        %v779 = vpop.permute.xlu0 %778
        %v781 = vsel %vm653, %v776, 0
        %v784 = vsel %vm653, %v779, 0
        %786 = vmatprep.subr.bf16.mxu0 0
        %787 = vmatpush1.bf16.xpose.msra.mxu0 %v784
        %788 = vmatprep.subr.bf16.mxu0 0
        %789 = vmatpush1.bf16.xpose.msra.mxu0 0
        %790 = vmatprep.subr.bf16.mxu0 0
        %791 = vmatpush1.bf16.xpose.msra.mxu0 0
        %792 = vmatprep.subr.bf16.mxu0 0
        %793 = vmatpush1.bf16.xpose.msra.mxu0 0
        %794 = vmatprep.subr.bf16.mxu0 0
        %795 = vmatpush1.bf16.xpose.msra.mxu0 0
        %796 = vmatprep.subr.bf16.mxu0 0
        %797 = vmatpush1.bf16.xpose.msra.mxu0 0
        %798 = vmatprep.subr.bf16.mxu0 0
        %799 = vmatpush1.bf16.xpose.msra.mxu0 0
        %800 = vmatprep.subr.bf16.mxu0 0
        %801 = vmatpush1.bf16.xpose.msra.mxu0 0
        %802 = vmatprep.subr.bf16.mxu0 0
        %803 = vmatpush1.bf16.xpose.msra.mxu0 0
        %804 = vmatprep.subr.bf16.mxu0 0
        %805 = vmatpush1.bf16.xpose.msra.mxu0 0
        %806 = vmatprep.subr.bf16.mxu0 0
        %807 = vmatpush1.bf16.xpose.msra.mxu0 0
        %808 = vmatprep.subr.bf16.mxu0 0
        %809 = vmatpush1.bf16.xpose.msra.mxu0 0
        %810 = vmatprep.subr.bf16.mxu0 0
        %811 = vmatpush1.bf16.xpose.msra.mxu0 0
        %812 = vmatprep.subr.bf16.mxu0 0
        %813 = vmatpush1.bf16.xpose.msra.mxu0 0
        %814 = vmatprep.subr.bf16.mxu0 0
        %815 = vmatpush1.bf16.xpose.msra.mxu0 0
        %816 = vmatprep.subr.bf16.mxu0 0
        %817 = vmatpush1.bf16.xpose.msra.mxu0 0
        %818 = vmatprep.mubr.bf16.mxu0 0
        %819 = vmatmul.mubr.bf16.gmra.mrb[0].mxu0 %v781
        %v820 = vpop.f32.mrb[0].mxu0
        %v821 = vadd.f32 0.0, %v820
        %v822 = vpop.f32.mrb[0].mxu0
        %v823 = vpop.f32.mrb[0].mxu0
        %v824 = vadd.f32 0.0, %v823
        %v825 = vpop.f32.mrb[0].mxu0
        %826 = vdwg.mxu0
        %v827 = vmul.f32 %v821, 0.35355338
        %v828 = vmul.f32 %v824, 0.35355338
        %v829 = vsel %vm703, %v827, -inf
        %830 = vmax.xlane.f32.xlu0 %v829
        %v831 = vpop.xlane.xlu0 %830
        %v832 = vsel %vm703, %v828, -inf
        %833 = vmax.xlane.f32.xlu0 %v832
        %v834 = vpop.xlane.xlu0 %833
        %v835 = vsub.f32 %v827, %v831
        %v836 = vsub.f32 %v828, %v834
        %v837 = vmul.f32 %v835, 1.442695
        %v838 = vpow.pop %v837
        %v839 = vmul.f32 %v836, 1.442695
        %v840 = vpow.pop %v839
        %v841 = vsel %vm703, %v838, 0.0
        %842 = vadd.xlane.f32.xlu0 %v841
        %v843 = vpop.xlane.xlu0 %842
        %v844 = vsel %vm703, %v840, 0.0
        %845 = vadd.xlane.f32.xlu0 %v844
        %v846 = vpop.xlane.xlu0 %845
        %v847 = vrcp.pop %v843
        %v848 = vrcp.pop %v846
        %v849 = vmul.f32 %v838, %v847
        %v850 = vmul.f32 %v840, %v848
        %v851 = vpack.c.bf16 %v850, %v849
        %853 = vrot.lane.b32.xlu0 %v652, 120
        %v854 = vpop.permute.xlu0 %853
        %v857 = vsel %vm703, %v851, 0
        %859 = vmatprep.subr.bf16.mxu0 0
        %860 = vmatpush1.bf16.msra.mxu0 %v854
        %861 = vmatprep.subr.bf16.mxu0 0
        %862 = vmatpush1.bf16.msra.mxu0 0
        %863 = vmatprep.subr.bf16.mxu0 0
        %864 = vmatpush1.bf16.msra.mxu0 0
        %865 = vmatprep.subr.bf16.mxu0 0
        %866 = vmatpush1.bf16.msra.mxu0 0
        %867 = vmatprep.subr.bf16.mxu0 0
        %868 = vmatpush1.bf16.msra.mxu0 0
        %869 = vmatprep.subr.bf16.mxu0 0
        %870 = vmatpush1.bf16.msra.mxu0 0
        %871 = vmatprep.subr.bf16.mxu0 0
        %872 = vmatpush1.bf16.msra.mxu0 0
        %873 = vmatprep.subr.bf16.mxu0 0
        %874 = vmatpush1.bf16.msra.mxu0 0
        %875 = vmatprep.subr.bf16.mxu0 0
        %876 = vmatpush1.bf16.msra.mxu0 0
        %877 = vmatprep.subr.bf16.mxu0 0
        %878 = vmatpush1.bf16.msra.mxu0 0
        %879 = vmatprep.subr.bf16.mxu0 0
        %880 = vmatpush1.bf16.msra.mxu0 0
        %881 = vmatprep.subr.bf16.mxu0 0
        %882 = vmatpush1.bf16.msra.mxu0 0
        %883 = vmatprep.subr.bf16.mxu0 0
        %884 = vmatpush1.bf16.msra.mxu0 0
        %885 = vmatprep.subr.bf16.mxu0 0
        %886 = vmatpush1.bf16.msra.mxu0 0
        %887 = vmatprep.subr.bf16.mxu0 0
        %888 = vmatpush1.bf16.msra.mxu0 0
        %889 = vmatprep.subr.bf16.mxu0 0
        %890 = vmatpush1.bf16.msra.mxu0 0
        %891 = vmatprep.mubr.bf16.mxu0 0
        %892 = vmatmul.mubr.bf16.gmra.mrb[0].mxu0 %v857
        %v893 = vpop.f32.mrb[0].mxu0
        %v894 = vadd.f32 0.0, %v893
        %v895 = vpop.f32.mrb[0].mxu0
        %v896 = vpop.f32.mrb[0].mxu0
        %v897 = vadd.f32 0.0, %v896
        %v898 = vpop.f32.mrb[0].mxu0
        %899 = vdwg.mxu0
        %v900 = vpack.c.bf16 %v897, %v894
        %v901 = vld [vmem:[%s8 + $0x8] sm:$0xff]
        %v902 = vpack.c.bf16 %v901, %v901
        %v904 = vsel %vm653, %v900, 0
        %vm906 = vcmask 1043456
        %v908 = vsel %vm906, %v902, 0
        %910 = vmatprep.subr.bf16.mxu0 0
        %911 = vmatpush1.bf16.msra.mxu0 %v908
        %912 = vmatprep.subr.bf16.mxu0 0
        %913 = vmatpush1.bf16.msra.mxu0 0
        %914 = vmatprep.subr.bf16.mxu0 0
        %915 = vmatpush1.bf16.msra.mxu0 0
        %916 = vmatprep.subr.bf16.mxu0 0
        %917 = vmatpush1.bf16.msra.mxu0 0
        %918 = vmatprep.subr.bf16.mxu0 0
        %919 = vmatpush1.bf16.msra.mxu0 0
        %920 = vmatprep.subr.bf16.mxu0 0
        %921 = vmatpush1.bf16.msra.mxu0 0
        %922 = vmatprep.subr.bf16.mxu0 0
        %923 = vmatpush1.bf16.msra.mxu0 0
        %924 = vmatprep.subr.bf16.mxu0 0
        %925 = vmatpush1.bf16.msra.mxu0 0
        %926 = vmatprep.subr.bf16.mxu0 0
        %927 = vmatpush1.bf16.msra.mxu0 0
        %928 = vmatprep.subr.bf16.mxu0 0
        %929 = vmatpush1.bf16.msra.mxu0 0
        %930 = vmatprep.subr.bf16.mxu0 0
        %931 = vmatpush1.bf16.msra.mxu0 0
        %932 = vmatprep.subr.bf16.mxu0 0
        %933 = vmatpush1.bf16.msra.mxu0 0
        %934 = vmatprep.subr.bf16.mxu0 0
        %935 = vmatpush1.bf16.msra.mxu0 0
        %936 = vmatprep.subr.bf16.mxu0 0
        %937 = vmatpush1.bf16.msra.mxu0 0
        %938 = vmatprep.subr.bf16.mxu0 0
        %939 = vmatpush1.bf16.msra.mxu0 0
        %940 = vmatprep.subr.bf16.mxu0 0
        %941 = vmatpush1.bf16.msra.mxu0 0
        %942 = vmatprep.mubr.bf16.mxu0 0
        %943 = vmatmul.mubr.bf16.gmra.mrb[0].mxu0 %v904
        %v944 = vpop.f32.mrb[0].mxu0
        %v945 = vadd.f32 0.0, %v944
        %v946 = vpop.f32.mrb[0].mxu0
        %v947 = vpop.f32.mrb[0].mxu0
        %v948 = vadd.f32 0.0, %v947
        %v949 = vpop.f32.mrb[0].mxu0
        %950 = vdwg.mxu0
        %v952 = vsel %vm653, %v771, 0
        %v955 = vsel %vm906, %v773, 0
        %957 = vmatprep.subr.bf16.mxu0 0
        %958 = vmatpush1.bf16.msra.mxu0 %v955
        %959 = vmatprep.subr.bf16.mxu0 0
        %960 = vmatpush1.bf16.msra.mxu0 0
        %961 = vmatprep.subr.bf16.mxu0 0
        %962 = vmatpush1.bf16.msra.mxu0 0
        %963 = vmatprep.subr.bf16.mxu0 0
        %964 = vmatpush1.bf16.msra.mxu0 0
        %965 = vmatprep.subr.bf16.mxu0 0
        %966 = vmatpush1.bf16.msra.mxu0 0
        %967 = vmatprep.subr.bf16.mxu0 0
        %968 = vmatpush1.bf16.msra.mxu0 0
        %969 = vmatprep.subr.bf16.mxu0 0
        %970 = vmatpush1.bf16.msra.mxu0 0
        %971 = vmatprep.subr.bf16.mxu0 0
        %972 = vmatpush1.bf16.msra.mxu0 0
        %973 = vmatprep.subr.bf16.mxu0 0
        %974 = vmatpush1.bf16.msra.mxu0 0
        %975 = vmatprep.subr.bf16.mxu0 0
        %976 = vmatpush1.bf16.msra.mxu0 0
        %977 = vmatprep.subr.bf16.mxu0 0
        %978 = vmatpush1.bf16.msra.mxu0 0
        %979 = vmatprep.subr.bf16.mxu0 0
        %980 = vmatpush1.bf16.msra.mxu0 0
        %981 = vmatprep.subr.bf16.mxu0 0
        %982 = vmatpush1.bf16.msra.mxu0 0
        %983 = vmatprep.subr.bf16.mxu0 0
        %984 = vmatpush1.bf16.msra.mxu0 0
        %985 = vmatprep.subr.bf16.mxu0 0
        %986 = vmatpush1.bf16.msra.mxu0 0
        %987 = vmatprep.subr.bf16.mxu0 0
        %988 = vmatpush1.bf16.msra.mxu0 0
        %989 = vmatprep.mubr.bf16.mxu0 0
        %990 = vmatmul.mubr.bf16.gmra.mrb[0].mxu0 %v952
        %v991 = vpop.f32.mrb[0].mxu0
        %v992 = vadd.f32 %v945, %v991
        %v993 = vpop.f32.mrb[0].mxu0
        %v994 = vpop.f32.mrb[0].mxu0
        %v995 = vadd.f32 %v948, %v994
        %v996 = vpop.f32.mrb[0].mxu0
        %997 = vdwg.mxu0
        %998 = vrot.lane.b32.xlu0 %v650, 112
        %v999 = vpop.permute.xlu0 %998
        %1000 = vrot.lane.b32.xlu0 %v651, 112
        %v1001 = vpop.permute.xlu0 %1000
        %v1003 = vsel %vm653, %v999, 0
        %v1006 = vsel %vm653, %v1001, 0
        %1008 = vmatprep.subr.bf16.mxu0 0
        %1009 = vmatpush1.bf16.xpose.msra.mxu0 %v1006
        %1010 = vmatprep.subr.bf16.mxu0 0
        %1011 = vmatpush1.bf16.xpose.msra.mxu0 0
        %1012 = vmatprep.subr.bf16.mxu0 0
        %1013 = vmatpush1.bf16.xpose.msra.mxu0 0
        %1014 = vmatprep.subr.bf16.mxu0 0
        %1015 = vmatpush1.bf16.xpose.msra.mxu0 0
        %1016 = vmatprep.subr.bf16.mxu0 0
        %1017 = vmatpush1.bf16.xpose.msra.mxu0 0
        %1018 = vmatprep.subr.bf16.mxu0 0
        %1019 = vmatpush1.bf16.xpose.msra.mxu0 0
        %1020 = vmatprep.subr.bf16.mxu0 0
        %1021 = vmatpush1.bf16.xpose.msra.mxu0 0
        %1022 = vmatprep.subr.bf16.mxu0 0
        %1023 = vmatpush1.bf16.xpose.msra.mxu0 0
        %1024 = vmatprep.subr.bf16.mxu0 0
        %1025 = vmatpush1.bf16.xpose.msra.mxu0 0
        %1026 = vmatprep.subr.bf16.mxu0 0
        %1027 = vmatpush1.bf16.xpose.msra.mxu0 0
        %1028 = vmatprep.subr.bf16.mxu0 0
        %1029 = vmatpush1.bf16.xpose.msra.mxu0 0
        %1030 = vmatprep.subr.bf16.mxu0 0
        %1031 = vmatpush1.bf16.xpose.msra.mxu0 0
        %1032 = vmatprep.subr.bf16.mxu0 0
        %1033 = vmatpush1.bf16.xpose.msra.mxu0 0
        %1034 = vmatprep.subr.bf16.mxu0 0
        %1035 = vmatpush1.bf16.xpose.msra.mxu0 0
        %1036 = vmatprep.subr.bf16.mxu0 0
        %1037 = vmatpush1.bf16.xpose.msra.mxu0 0
        %1038 = vmatprep.subr.bf16.mxu0 0
        %1039 = vmatpush1.bf16.xpose.msra.mxu0 0
        %1040 = vmatprep.mubr.bf16.mxu0 0
        %1041 = vmatmul.mubr.bf16.gmra.mrb[0].mxu0 %v1003
        %v1042 = vpop.f32.mrb[0].mxu0
        %v1043 = vadd.f32 0.0, %v1042
        %v1044 = vpop.f32.mrb[0].mxu0
        %v1045 = vpop.f32.mrb[0].mxu0
        %v1046 = vadd.f32 0.0, %v1045
        %v1047 = vpop.f32.mrb[0].mxu0
        %1048 = vdwg.mxu0
        %v1049 = vmul.f32 %v1043, 0.35355338
        %v1050 = vmul.f32 %v1046, 0.35355338
        %v1051 = vsel %vm703, %v1049, -inf
        %1052 = vmax.xlane.f32.xlu0 %v1051
        %v1053 = vpop.xlane.xlu0 %1052
        %v1054 = vsel %vm703, %v1050, -inf
        %1055 = vmax.xlane.f32.xlu0 %v1054
        %v1056 = vpop.xlane.xlu0 %1055
        %v1057 = vsub.f32 %v1049, %v1053
        %v1058 = vsub.f32 %v1050, %v1056
        %v1059 = vmul.f32 %v1057, 1.442695
        %v1060 = vpow.pop %v1059
        %v1061 = vmul.f32 %v1058, 1.442695
        %v1062 = vpow.pop %v1061
        %v1063 = vsel %vm703, %v1060, 0.0
        %1064 = vadd.xlane.f32.xlu0 %v1063
        %v1065 = vpop.xlane.xlu0 %1064
        %v1066 = vsel %vm703, %v1062, 0.0
        %1067 = vadd.xlane.f32.xlu0 %v1066
        %v1068 = vpop.xlane.xlu0 %1067
        %v1069 = vrcp.pop %v1065
        %v1070 = vrcp.pop %v1068
        %v1071 = vmul.f32 %v1060, %v1069
        %v1072 = vmul.f32 %v1062, %v1070
        %v1073 = vpack.c.bf16 %v1072, %v1071
        %1074 = vrot.lane.b32.xlu0 %v652, 112
        %v1075 = vpop.permute.xlu0 %1074
        %v1078 = vsel %vm703, %v1073, 0
        %1080 = vmatprep.subr.bf16.mxu0 0
        %1081 = vmatpush1.bf16.msra.mxu0 %v1075
        %1082 = vmatprep.subr.bf16.mxu0 0
        %1083 = vmatpush1.bf16.msra.mxu0 0
        %1084 = vmatprep.subr.bf16.mxu0 0
        %1085 = vmatpush1.bf16.msra.mxu0 0
        %1086 = vmatprep.subr.bf16.mxu0 0
        %1087 = vmatpush1.bf16.msra.mxu0 0
        %1088 = vmatprep.subr.bf16.mxu0 0
        %1089 = vmatpush1.bf16.msra.mxu0 0
        %1090 = vmatprep.subr.bf16.mxu0 0
        %1091 = vmatpush1.bf16.msra.mxu0 0
        %1092 = vmatprep.subr.bf16.mxu0 0
        %1093 = vmatpush1.bf16.msra.mxu0 0
        %1094 = vmatprep.subr.bf16.mxu0 0
        %1095 = vmatpush1.bf16.msra.mxu0 0
        %1096 = vmatprep.subr.bf16.mxu0 0
        %1097 = vmatpush1.bf16.msra.mxu0 0
        %1098 = vmatprep.subr.bf16.mxu0 0
        %1099 = vmatpush1.bf16.msra.mxu0 0
        %1100 = vmatprep.subr.bf16.mxu0 0
        %1101 = vmatpush1.bf16.msra.mxu0 0
        %1102 = vmatprep.subr.bf16.mxu0 0
        %1103 = vmatpush1.bf16.msra.mxu0 0
        %1104 = vmatprep.subr.bf16.mxu0 0
        %1105 = vmatpush1.bf16.msra.mxu0 0
        %1106 = vmatprep.subr.bf16.mxu0 0
        %1107 = vmatpush1.bf16.msra.mxu0 0
        %1108 = vmatprep.subr.bf16.mxu0 0
        %1109 = vmatpush1.bf16.msra.mxu0 0
        %1110 = vmatprep.subr.bf16.mxu0 0
        %1111 = vmatpush1.bf16.msra.mxu0 0
        %1112 = vmatprep.mubr.bf16.mxu0 0
        %1113 = vmatmul.mubr.bf16.gmra.mrb[0].mxu0 %v1078
        %v1114 = vpop.f32.mrb[0].mxu0
        %v1115 = vadd.f32 0.0, %v1114
        %v1116 = vpop.f32.mrb[0].mxu0
        %v1117 = vpop.f32.mrb[0].mxu0
        %v1118 = vadd.f32 0.0, %v1117
        %v1119 = vpop.f32.mrb[0].mxu0
        %1120 = vdwg.mxu0
        %v1121 = vpack.c.bf16 %v1118, %v1115
        %v1122 = vld [vmem:[%s8 + $0x10] sm:$0xff]
        %v1123 = vpack.c.bf16 %v1122, %v1122
        %v1125 = vsel %vm653, %v1121, 0
        %v1128 = vsel %vm906, %v1123, 0
        %1130 = vmatprep.subr.bf16.mxu0 0
        %1131 = vmatpush1.bf16.msra.mxu0 %v1128
        %1132 = vmatprep.subr.bf16.mxu0 0
        %1133 = vmatpush1.bf16.msra.mxu0 0
        %1134 = vmatprep.subr.bf16.mxu0 0
        %1135 = vmatpush1.bf16.msra.mxu0 0
        %1136 = vmatprep.subr.bf16.mxu0 0
        %1137 = vmatpush1.bf16.msra.mxu0 0
        %1138 = vmatprep.subr.bf16.mxu0 0
        %1139 = vmatpush1.bf16.msra.mxu0 0
        %1140 = vmatprep.subr.bf16.mxu0 0
        %1141 = vmatpush1.bf16.msra.mxu0 0
        %1142 = vmatprep.subr.bf16.mxu0 0
        %1143 = vmatpush1.bf16.msra.mxu0 0
        %1144 = vmatprep.subr.bf16.mxu0 0
        %1145 = vmatpush1.bf16.msra.mxu0 0
        %1146 = vmatprep.subr.bf16.mxu0 0
        %1147 = vmatpush1.bf16.msra.mxu0 0
        %1148 = vmatprep.subr.bf16.mxu0 0
        %1149 = vmatpush1.bf16.msra.mxu0 0
        %1150 = vmatprep.subr.bf16.mxu0 0
        %1151 = vmatpush1.bf16.msra.mxu0 0
        %1152 = vmatprep.subr.bf16.mxu0 0
        %1153 = vmatpush1.bf16.msra.mxu0 0
        %1154 = vmatprep.subr.bf16.mxu0 0
        %1155 = vmatpush1.bf16.msra.mxu0 0
        %1156 = vmatprep.subr.bf16.mxu0 0
        %1157 = vmatpush1.bf16.msra.mxu0 0
        %1158 = vmatprep.subr.bf16.mxu0 0
        %1159 = vmatpush1.bf16.msra.mxu0 0
        %1160 = vmatprep.subr.bf16.mxu0 0
        %1161 = vmatpush1.bf16.msra.mxu0 0
        %1162 = vmatprep.mubr.bf16.mxu0 0
        %1163 = vmatmul.mubr.bf16.gmra.mrb[0].mxu0 %v1125
        %v1164 = vpop.f32.mrb[0].mxu0
        %v1165 = vadd.f32 0.0, %v1164
        %v1166 = vpop.f32.mrb[0].mxu0
        %v1167 = vpop.f32.mrb[0].mxu0
        %v1168 = vadd.f32 0.0, %v1167
        %v1169 = vpop.f32.mrb[0].mxu0
        %1170 = vdwg.mxu0
        %v1171 = vadd.f32 %v992, %v1165
        %v1172 = vadd.f32 %v995, %v1168
        %1173 = vrot.lane.b32.xlu0 %v650, 104
        %v1174 = vpop.permute.xlu0 %1173
        %1175 = vrot.lane.b32.xlu0 %v651, 104
        %v1176 = vpop.permute.xlu0 %1175
        %v1178 = vsel %vm653, %v1174, 0
        %v1181 = vsel %vm653, %v1176, 0
        %1183 = vmatprep.subr.bf16.mxu0 0
        %1184 = vmatpush1.bf16.xpose.msra.mxu0 %v1181
        %1185 = vmatprep.subr.bf16.mxu0 0
        %1186 = vmatpush1.bf16.xpose.msra.mxu0 0
        %1187 = vmatprep.subr.bf16.mxu0 0
        %1188 = vmatpush1.bf16.xpose.msra.mxu0 0
        %1189 = vmatprep.subr.bf16.mxu0 0
        %1190 = vmatpush1.bf16.xpose.msra.mxu0 0
        %1191 = vmatprep.subr.bf16.mxu0 0
        %1192 = vmatpush1.bf16.xpose.msra.mxu0 0
        %1193 = vmatprep.subr.bf16.mxu0 0
        %1194 = vmatpush1.bf16.xpose.msra.mxu0 0
        %1195 = vmatprep.subr.bf16.mxu0 0
        %1196 = vmatpush1.bf16.xpose.msra.mxu0 0
        %1197 = vmatprep.subr.bf16.mxu0 0
        %1198 = vmatpush1.bf16.xpose.msra.mxu0 0
        %1199 = vmatprep.subr.bf16.mxu0 0
        %1200 = vmatpush1.bf16.xpose.msra.mxu0 0
        %1201 = vmatprep.subr.bf16.mxu0 0
        %1202 = vmatpush1.bf16.xpose.msra.mxu0 0
        %1203 = vmatprep.subr.bf16.mxu0 0
        %1204 = vmatpush1.bf16.xpose.msra.mxu0 0
        %1205 = vmatprep.subr.bf16.mxu0 0
        %1206 = vmatpush1.bf16.xpose.msra.mxu0 0
        %1207 = vmatprep.subr.bf16.mxu0 0
        %1208 = vmatpush1.bf16.xpose.msra.mxu0 0
        %1209 = vmatprep.subr.bf16.mxu0 0
        %1210 = vmatpush1.bf16.xpose.msra.mxu0 0
        %1211 = vmatprep.subr.bf16.mxu0 0
        %1212 = vmatpush1.bf16.xpose.msra.mxu0 0
        %1213 = vmatprep.subr.bf16.mxu0 0
        %1214 = vmatpush1.bf16.xpose.msra.mxu0 0
        %1215 = vmatprep.mubr.bf16.mxu0 0
        %1216 = vmatmul.mubr.bf16.gmra.mrb[0].mxu0 %v1178
        %v1217 = vpop.f32.mrb[0].mxu0
        %v1218 = vadd.f32 0.0, %v1217
        %v1219 = vpop.f32.mrb[0].mxu0
        %v1220 = vpop.f32.mrb[0].mxu0
        %v1221 = vadd.f32 0.0, %v1220
        %v1222 = vpop.f32.mrb[0].mxu0
        %1223 = vdwg.mxu0
        %v1224 = vmul.f32 %v1218, 0.35355338
        %v1225 = vmul.f32 %v1221, 0.35355338
        %v1226 = vsel %vm703, %v1224, -inf
        %1227 = vmax.xlane.f32.xlu0 %v1226
        %v1228 = vpop.xlane.xlu0 %1227
        %v1229 = vsel %vm703, %v1225, -inf
        %1230 = vmax.xlane.f32.xlu0 %v1229
        %v1231 = vpop.xlane.xlu0 %1230
        %v1232 = vsub.f32 %v1224, %v1228
        %v1233 = vsub.f32 %v1225, %v1231
        %v1234 = vmul.f32 %v1232, 1.442695
        %v1235 = vpow.pop %v1234
        %v1236 = vmul.f32 %v1233, 1.442695
        %v1237 = vpow.pop %v1236
        %v1238 = vsel %vm703, %v1235, 0.0
        %1239 = vadd.xlane.f32.xlu0 %v1238
        %v1240 = vpop.xlane.xlu0 %1239
        %v1241 = vsel %vm703, %v1237, 0.0
        %1242 = vadd.xlane.f32.xlu0 %v1241
        %v1243 = vpop.xlane.xlu0 %1242
        %v1244 = vrcp.pop %v1240
        %v1245 = vrcp.pop %v1243
        %v1246 = vmul.f32 %v1235, %v1244
        %v1247 = vmul.f32 %v1237, %v1245
        %v1248 = vpack.c.bf16 %v1247, %v1246
        %1249 = vrot.lane.b32.xlu0 %v652, 104
        %v1250 = vpop.permute.xlu0 %1249
        %v1253 = vsel %vm703, %v1248, 0
        %1255 = vmatprep.subr.bf16.mxu0 0
        %1256 = vmatpush1.bf16.msra.mxu0 %v1250
        %1257 = vmatprep.subr.bf16.mxu0 0
        %1258 = vmatpush1.bf16.msra.mxu0 0
        %1259 = vmatprep.subr.bf16.mxu0 0
        %1260 = vmatpush1.bf16.msra.mxu0 0
        %1261 = vmatprep.subr.bf16.mxu0 0
        %1262 = vmatpush1.bf16.msra.mxu0 0
        %1263 = vmatprep.subr.bf16.mxu0 0
        %1264 = vmatpush1.bf16.msra.mxu0 0
        %1265 = vmatprep.subr.bf16.mxu0 0
        %1266 = vmatpush1.bf16.msra.mxu0 0
        %1267 = vmatprep.subr.bf16.mxu0 0
        %1268 = vmatpush1.bf16.msra.mxu0 0
        %1269 = vmatprep.subr.bf16.mxu0 0
        %1270 = vmatpush1.bf16.msra.mxu0 0
        %1271 = vmatprep.subr.bf16.mxu0 0
        %1272 = vmatpush1.bf16.msra.mxu0 0
        %1273 = vmatprep.subr.bf16.mxu0 0
        %1274 = vmatpush1.bf16.msra.mxu0 0
        %1275 = vmatprep.subr.bf16.mxu0 0
        %1276 = vmatpush1.bf16.msra.mxu0 0
        %1277 = vmatprep.subr.bf16.mxu0 0
        %1278 = vmatpush1.bf16.msra.mxu0 0
        %1279 = vmatprep.subr.bf16.mxu0 0
        %1280 = vmatpush1.bf16.msra.mxu0 0
        %1281 = vmatprep.subr.bf16.mxu0 0
        %1282 = vmatpush1.bf16.msra.mxu0 0
        %1283 = vmatprep.subr.bf16.mxu0 0
        %1284 = vmatpush1.bf16.msra.mxu0 0
        %1285 = vmatprep.subr.bf16.mxu0 0
        %1286 = vmatpush1.bf16.msra.mxu0 0
        %1287 = vmatprep.mubr.bf16.mxu0 0
        %1288 = vmatmul.mubr.bf16.gmra.mrb[0].mxu0 %v1253
        %v1289 = vpop.f32.mrb[0].mxu0
        %v1290 = vadd.f32 0.0, %v1289
        %v1291 = vpop.f32.mrb[0].mxu0
        %v1292 = vpop.f32.mrb[0].mxu0
        %v1293 = vadd.f32 0.0, %v1292
        %v1294 = vpop.f32.mrb[0].mxu0
        %1295 = vdwg.mxu0
        %v1296 = vpack.c.bf16 %v1293, %v1290
        %v1297 = vld [vmem:[%s8 + $0x18] sm:$0xff]
        %v1298 = vpack.c.bf16 %v1297, %v1297
        %v1300 = vsel %vm653, %v1296, 0
        %v1303 = vsel %vm906, %v1298, 0
        %1305 = vmatprep.subr.bf16.mxu0 0
        %1306 = vmatpush1.bf16.msra.mxu0 %v1303
        %1307 = vmatprep.subr.bf16.mxu0 0
        %1308 = vmatpush1.bf16.msra.mxu0 0
        %1309 = vmatprep.subr.bf16.mxu0 0
        %1310 = vmatpush1.bf16.msra.mxu0 0
        %1311 = vmatprep.subr.bf16.mxu0 0
        %1312 = vmatpush1.bf16.msra.mxu0 0
        %1313 = vmatprep.subr.bf16.mxu0 0
        %1314 = vmatpush1.bf16.msra.mxu0 0
        %1315 = vmatprep.subr.bf16.mxu0 0
        %1316 = vmatpush1.bf16.msra.mxu0 0
        %1317 = vmatprep.subr.bf16.mxu0 0
        %1318 = vmatpush1.bf16.msra.mxu0 0
        %1319 = vmatprep.subr.bf16.mxu0 0
        %1320 = vmatpush1.bf16.msra.mxu0 0
        %1321 = vmatprep.subr.bf16.mxu0 0
        %1322 = vmatpush1.bf16.msra.mxu0 0
        %1323 = vmatprep.subr.bf16.mxu0 0
        %1324 = vmatpush1.bf16.msra.mxu0 0
        %1325 = vmatprep.subr.bf16.mxu0 0
        %1326 = vmatpush1.bf16.msra.mxu0 0
        %1327 = vmatprep.subr.bf16.mxu0 0
        %1328 = vmatpush1.bf16.msra.mxu0 0
        %1329 = vmatprep.subr.bf16.mxu0 0
        %1330 = vmatpush1.bf16.msra.mxu0 0
        %1331 = vmatprep.subr.bf16.mxu0 0
        %1332 = vmatpush1.bf16.msra.mxu0 0
        %1333 = vmatprep.subr.bf16.mxu0 0
        %1334 = vmatpush1.bf16.msra.mxu0 0
        %1335 = vmatprep.subr.bf16.mxu0 0
        %1336 = vmatpush1.bf16.msra.mxu0 0
        %1337 = vmatprep.mubr.bf16.mxu0 0
        %1338 = vmatmul.mubr.bf16.gmra.mrb[0].mxu0 %v1300
        %v1339 = vpop.f32.mrb[0].mxu0
        %v1340 = vadd.f32 0.0, %v1339
        %v1341 = vpop.f32.mrb[0].mxu0
        %v1342 = vpop.f32.mrb[0].mxu0
        %v1343 = vadd.f32 0.0, %v1342
        %v1344 = vpop.f32.mrb[0].mxu0
        %1345 = vdwg.mxu0
        %v1346 = vadd.f32 %v1171, %v1340
        %v1347 = vadd.f32 %v1172, %v1343
        %v1348 = vld [vmem:[#allocation2] sm:$0x1]
        %v1350 = vlaneseq
        %v1351 = vshrl.u32 %v1350, 7
        %v1352 = vsub.s32 0, %v1351
        %v1353 = vrot.slane %v1348, %v1352
        %v1355 = vadd.f32 %v1346, %v1353
        %v1356 = vadd.f32 %v1347, %v1353
        %v1357 = vadd.f32 %v473, %v1355
        %v1358 = vadd.f32 %v474, %v1356
        %v1359 = vsel %vm493, %v1357, 0.0
        %1360 = vadd.xlane.f32.xlu0 %v1359
        %v1361 = vpop.xlane.xlu0 %1360
        %v1362 = vsel %vm493, %v1358, 0.0
        %1363 = vadd.xlane.f32.xlu0 %v1362
        %v1364 = vpop.xlane.xlu0 %1363
        %v1365 = vrcp.pop 32.0
        %v1366 = vmul.f32 %v1361, %v1365
        %v1367 = vmul.f32 %v1364, %v1365
        %v1368 = vsub.f32 %v1357, %v1366
        %v1369 = vsub.f32 %v1358, %v1367
        %v1370 = vmul.f32 %v1368, %v1368
        %v1371 = vmul.f32 %v1369, %v1369
        %v1372 = vsel %vm493, %v1370, 0.0
        %1373 = vadd.xlane.f32.xlu0 %v1372
        %v1374 = vpop.xlane.xlu0 %1373
        %v1375 = vsel %vm493, %v1371, 0.0
        %1376 = vadd.xlane.f32.xlu0 %v1375
        %v1377 = vpop.xlane.xlu0 %1376
        %v1378 = vmul.f32 %v1374, %v1365
        %v1379 = vmul.f32 %v1377, %v1365
        %v1380 = vadd.f32 %v1378, 1e-05
        %v1381 = vadd.f32 %v1379, 1e-05
        %v1382 = vrsqrt.pop %v1380
        %v1383 = vrsqrt.pop %v1381
        %v1384 = vmul.f32 %v1368, %v1382
        %v1385 = vmul.f32 %v1369, %v1383
        %v1386 = vld [vmem:[#allocation4] sm:$0x1]
        %v1388 = vlaneseq
        %v1389 = vshrl.u32 %v1388, 7
        %v1390 = vsub.s32 0, %v1389
        %v1391 = vrot.slane %v1386, %v1390
        %v1393 = vmul.f32 %v1384, %v1391
        %v1394 = vmul.f32 %v1385, %v1391
        %v1395 = vld [vmem:[#allocation6] sm:$0x1]
        %v1397 = vlaneseq
        %v1398 = vshrl.u32 %v1397, 7
        %v1399 = vsub.s32 0, %v1398
        %v1400 = vrot.slane %v1395, %v1399
        %v1402 = vadd.f32 %v1393, %v1400
        %v1403 = vadd.f32 %v1394, %v1400
        %1404 = vst.msk [vmem:[%s471] sm:$0xff] %vm493, %v1402
        %1405 = vst.msk [vmem:[%s471 + $0x8] sm:$0xff] %vm493, %v1403
        %p1406 = scmp.lt.s32.totalorder %s25, 1
        %s1407 = scalar_select %p1406, %s25, 1
        %s1408 = smul.addr %s1407, 2
        %s1409 = smul.addr %s1408, 8
        %s1410 = scalar_lea.vmem %s12, %s1409
        // Predicated region
        $region81: #{run.20} parent=67 // pred_check
          %p1411 = pneg %p305
        $region82: #{run.20} parent=67 // pred_check_branch
          %1413 = sbr.rel (%p1411) target = $region84
        $region83: #{run.20} parent=67 // pred_region
          _
        $region84: #{run.20} parent=67 // pred_fallthru
          _
      $region68: #{run.20} parent=5 // pred_fallthru
        _
      %p1414 = scmp.le.s32.totalorder 2, %s20
      // Predicated region
      $region85: #{run.20} parent=5 // pred_check
        %p1415 = pneg %p1414
      $region86: #{run.20} parent=5 // pred_check_branch
        %1417 = sbr.rel (%p1415) target = $region88
      $region87: #{run.20} parent=5 // pred_region
        %s1418 = ssub.s32 %s20, 2
        // Predicated region
        $region89: #{run.20} parent=87 // pred_check
          %p1419 = pneg %p311
        $region90: #{run.20} parent=87 // pred_check_branch
          %1421 = sbr.rel (%p1419) target = $region92
        $region91: #{run.20} parent=87 // pred_region
          %p1422 = scmp.lt.s32.totalorder %s26, 1
          %s1423 = scalar_select %p1422, %s26, 1
          %s1424 = smul.addr %s1423, 2
          %s1425 = smul.addr %s1424, 8
          %s1426 = scalar_lea.vmem %s12, %s1425
        $region92: #{run.20} parent=87 // pred_fallthru
          _
      $region88: #{run.20} parent=5 // pred_fallthru
        _
    $region6: #{run.20} parent=1 // loop_footer
      %s24 = sadd.s32 1, %s20
    $region7: #{run.20} parent=1 // loop_footer_branch
      %19 = sbr.rel target = $region3
    $region8: #{run.20} parent=1 // loop_exit
      _
    %1427 = vsyncpa [#allocation3], 1
    %s1428 = scalar_lea.sflag [#allocation3], 1
    %1429 = vsyncpa %s1428, 1
    %1430 = vsyncpa [#allocation5], 1

</llo_original>
